<compile_context>
chip_gen: v7x
topology: tpu7x:2x2x1
jax: 0.10.0
libtpu: 0.0.40
codegen_flags: <defaults>
</compile_context>

<pallas_src>
from functools import lru_cache

import jax
import jax.numpy as jnp
import numpy as np
from jax.experimental import pallas as pl
from jax.experimental.pallas import tpu as pltpu


# ----------------------------- fused Pallas kernel ---------------------------

def _fpn_fused_kernel(r5_ref, r4_ref, r3_ref, r2_ref,
                      cw1_ref, cb1_ref, cw2_ref, cb2_ref,
                      cw3_ref, cb3_ref, cw4_ref, cb4_ref,
                      wpT_ref, bp_ref,
                      uh54_ref, uw54_ref, uh43_ref, uw43_ref,
                      uh32_ref, uw32_ref,
                      *out_refs):
    """One batch element per grid step; all intermediates stay on-chip."""
    f32 = jnp.float32
    bf16 = jnp.bfloat16

    def conv1x1(x_ref, w_ref, b_ref):
        # (P, Cin)bf16 @ (Cin, D)bf16 -> f32 accumulate, + f32 bias.
        # Stays in the canonical (P, C) layout (spatial flat, channels in lanes).
        return jnp.dot(x_ref[...], w_ref[...],
                       preferred_element_type=f32) + b_ref[...]

    def upsample(x_pc, uh_ref, uw_ref):
        # Separable bilinear resize in (P, C) layout.  Widths are padded to a
        # multiple of 8 by the wrapper so (P, C) <-> (H, Wp, C) reshapes are
        # layout no-ops; only the two small bf16 reshapes around the H-pass
        # (on the pre-upsample tensor) relayout.
        hout, hin = uh_ref.shape
        wout, win = uw_ref.shape
        c = x_pc.shape[-1]
        x2 = x_pc.astype(bf16).reshape(hin, win * c)
        # H pass: lane-dense 2-D bf16 MXU matmul, f32 accumulation.
        yh = jnp.dot(uh_ref[...], x2, preferred_element_type=f32)
        yh3 = yh.astype(bf16).reshape(hout, win, c)
        # W pass: batched bf16 matmul over rows (uw broadcast is bf16 -> half
        # the previous VMEM temp).
        uw_b = jnp.broadcast_to(uw_ref[...], (hout, wout, win))
        yw = jax.lax.dot_general(
            uw_b, yh3, dimension_numbers=(((2,), (1,)), ((0,), (0,))),
            preferred_element_type=f32)            # (hout, wout, c) f32
        return yw.reshape(hout * wout, c)          # layout no-op (wout % 8 == 0)

    o1 = conv1x1(r5_ref, cw1_ref, cb1_ref)
    o2 = upsample(o1, uh54_ref, uw54_ref) + conv1x1(r4_ref, cw2_ref, cb2_ref)
    o3 = upsample(o2, uh43_ref, uw43_ref) + conv1x1(r3_ref, cw3_ref, cb3_ref)
    o4 = upsample(o3, uh32_ref, uw32_ref) + conv1x1(r2_ref, cw4_ref, cb4_ref)

    o4b = o4.astype(bf16)
    if len(out_refs) == 2:            # get_features path: bf16 feature store
        out_refs[0][...] = o4b
    pred_ref = out_refs[-1]
    # pred conv, computed transposed: (n_cls, D)bf16 x (P2, D)bf16 -> (n_cls, P2).
    # Writes only n_cls rows (lane-dense along P2) instead of a 128-lane padded
    # (P2, 128) block, and already matches the NCHW output layout.
    pred_ref[...] = (jax.lax.dot_general(
        wpT_ref[...], o4b, dimension_numbers=(((1,), (1,)), ((), ())),
        preferred_element_type=f32) + bp_ref[...])


def fpn_fused(r5, r4, r3, r2,
              cw1, cb1, cw2, cb2, cw3, cb3, cw4, cb4, wpT, bp,
              uh54, uw54, uh43, uw43, uh32, uw32, *, want_features):
    B = r5.shape[0]
    D = cw1.shape[1]
    n_cls = wpT.shape[0]
    p5p, p4p, p3p, p2p = r5.shape[1], r4.shape[1], r3.shape[1], r2.shape[1]

    feats = (r5, r4, r3, r2)
    consts = (cw1, cb1, cw2, cb2, cw3, cb3, cw4, cb4, wpT, bp,
              uh54, uw54, uh43, uw43, uh32, uw32)

    def feat_spec(x):
        return pl.BlockSpec((None,) + x.shape[1:], lambda b: (b, 0, 0))

    def const_spec(x):
        # NOTE: constant blocks (index never changes); small enough that the
        # extra pipeline buffer is negligible, so no pl.Buffered(1) tweak here.
        return pl.BlockSpec(x.shape, lambda b: (0, 0))

    in_specs = [feat_spec(x) for x in feats] + [const_spec(x) for x in consts]

    pred_sds = jax.ShapeDtypeStruct((B, n_cls, p2p), jnp.float32)
    pred_spec = pl.BlockSpec((None, n_cls, p2p), lambda b: (b, 0, 0))
    if want_features:
        out_shape = (jax.ShapeDtypeStruct((B, p2p, D), jnp.bfloat16), pred_sds)
        out_specs = (pl.BlockSpec((None, p2p, D), lambda b: (b, 0, 0)), pred_spec)
    else:
        out_shape = pred_sds
        out_specs = pred_spec

    # ----- advisory cost estimate for the XLA scheduler -----
    def mm(m, k, n):
        return 2 * m * k * n

    cins = (r5.shape[2], r4.shape[2], r3.shape[2], r2.shape[2])
    flops = sum(mm(p, cin, D) for p, cin in zip((p5p, p4p, p3p, p2p), cins))
    for uh, uw in ((uh54, uw54), (uh43, uw43), (uh32, uw32)):
        ho, hi = uh.shape
        wo, wi = uw.shape
        flops += mm(ho, hi, wi * D) + mm(ho * wo, wi, D)
    flops += mm(n_cls, D, p2p)
    flops *= B
    bytes_accessed = sum(int(np.prod(a.shape)) * a.dtype.itemsize
                         for a in feats + consts)
    bytes_accessed += B * p2p * (n_cls * 4 + (D * 2 if want_features else 0))

    # ----- VMEM budget per grid step (double-buffered I/O + live values) -----
    per_step = 2 * sum(int(np.prod(a.shape[1:])) * a.dtype.itemsize for a in feats)
    per_step += 2 * sum(int(np.prod(a.shape)) * a.dtype.itemsize for a in consts)
    per_step += 2 * (p2p * n_cls * 4 + (p2p * D * 2 if want_features else 0))
    per_step += 6 * p2p * D * 4 + 4 * (p5p + p4p + p3p) * D * 4
    vmem_limit = int(min(max(2 * per_step, 32 * 2**20), 100 * 2**20))

    return pl.pallas_call(
        _fpn_fused_kernel,
        out_shape=out_shape,
        grid=(B,),
        in_specs=in_specs,
        out_specs=out_specs,
        compiler_params=pltpu.CompilerParams(
            dimension_semantics=("parallel",),
            vmem_limit_bytes=vmem_limit),
        cost_estimate=pl.CostEstimate(
            flops=int(flops), transcendentals=0,
            bytes_accessed=int(bytes_accessed)),
    )(*feats, *consts)


# ------------------------------ host-side glue --------------------------------

def _pad8(n):
    return -(-n // 8) * 8


def _to_bpc_padded(x, w_pad):
    """NCHW -> (B, H*Wpad, C) with zero padding along W."""
    B, C, H, W = x.shape
    x = jnp.transpose(x, (0, 2, 3, 1))                    # (B, H, W, C)
    if w_pad != W:
        x = jnp.pad(x, ((0, 0), (0, 0), (0, w_pad - W), (0, 0)))
    return x.reshape(B, H * w_pad, C)


@lru_cache(maxsize=None)
def _interp_matrix_np(out_size, in_size):
    # 1-D bilinear matrix matching torch F.interpolate(mode='bilinear',
    # align_corners=False).  Built once per (out, in) pair on host.
    dst = np.arange(out_size, dtype=np.float64)
    src = np.maximum((dst + 0.5) * (in_size / out_size) - 0.5, 0.0)
    i0 = np.clip(np.floor(src).astype(np.int64), 0, in_size - 1)
    i1 = np.minimum(i0 + 1, in_size - 1)
    w1 = (src - i0).astype(np.float32)
    w0 = (1.0 - w1).astype(np.float32)
    m = np.zeros((out_size, in_size), np.float32)
    rows = np.arange(out_size)
    m[rows, i0] += w0
    m[rows, i1] += w1
    return m


@lru_cache(maxsize=None)
def _w_interp_matrix_np(out_size, in_size, out_pad, in_pad):
    # Width interp matrix embedded in padded (multiple-of-8) sizes; the pad
    # rows/cols are zero so padded columns never leak into real outputs.
    m = np.zeros((out_pad, in_pad), np.float32)
    m[:out_size, :in_size] = _interp_matrix_np(out_size, in_size)
    return m


# ------------------------------ parameters ------------------------------------

def init_params(key, arch="resnet18", n_cls=8):
    mfactor = 1 if arch == "resnet18" else 4
    out_dim = 128 if arch == "resnet18" else 256
    cins = {
        "layer4": 512 * mfactor // 8,
        "layer3": 512 * mfactor // 4,
        "layer2": 512 * mfactor // 2,
        "layer1": 512 * mfactor,
    }
    keys = jax.random.split(key, 2 * len(cins) + 2)
    params = {}
    for i, (name, cin) in enumerate(cins.items()):
        # weights stored (Cin, Cout) == PyTorch (Cout, Cin, 1, 1) transposed
        params[f"{name}_w"] = (
            jax.random.normal(keys[2 * i], (cin, out_dim), jnp.float32)
            * (1.0 / cin) ** 0.5)
        params[f"{name}_b"] = (
            jax.random.normal(keys[2 * i + 1], (1, out_dim), jnp.float32) * 0.01)
    params["pred_w"] = (
        jax.random.normal(keys[-2], (out_dim, n_cls), jnp.float32)
        * (1.0 / out_dim) ** 0.5)
    params["pred_b"] = jax.random.normal(keys[-1], (1, n_cls), jnp.float32) * 0.01
    return params


# ------------------------------ forward pass ----------------------------------

def fpn_decoder_forward(params, feats, get_features=False):
    res2, res3, res4, res5 = feats["res2"], feats["res3"], feats["res4"], feats["res5"]
    h2, w2 = res2.shape[2:]
    h3, w3 = res3.shape[2:]
    h4, w4 = res4.shape[2:]
    h5, w5 = res5.shape[2:]
    w2p, w3p, w4p, w5p = _pad8(w2), _pad8(w3), _pad8(w4), _pad8(w5)

    bf16 = jnp.bfloat16
    # TODO(synk): in a full pipeline keep backbone outputs in NHWC/(B,P,C) and
    # bf16 end-to-end to avoid these per-call layout conversions.
    r5 = _to_bpc_padded(res5, w5p).astype(bf16)
    r4 = _to_bpc_padded(res4, w4p).astype(bf16)
    r3 = _to_bpc_padded(res3, w3p).astype(bf16)
    r2 = _to_bpc_padded(res2, w2p).astype(bf16)

    lw1, lb1 = params["layer1_w"].astype(bf16), params["layer1_b"]
    lw2, lb2 = params["layer2_w"].astype(bf16), params["layer2_b"]
    lw3, lb3 = params["layer3_w"].astype(bf16), params["layer3_b"]
    lw4, lb4 = params["layer4_w"].astype(bf16), params["layer4_b"]

    D = lw1.shape[1]
    n_cls = params["pred_w"].shape[1]
    wpT = params["pred_w"].T.astype(bf16)                 # (n_cls, D)
    bp = params["pred_b"].reshape(n_cls, 1)               # f32 (n_cls, 1)

    uh54 = jnp.asarray(_interp_matrix_np(h4, h5), dtype=bf16)
    uw54 = jnp.asarray(_w_interp_matrix_np(w4, w5, w4p, w5p), dtype=bf16)
    uh43 = jnp.asarray(_interp_matrix_np(h3, h4), dtype=bf16)
    uw43 = jnp.asarray(_w_interp_matrix_np(w3, w4, w3p, w4p), dtype=bf16)
    uh32 = jnp.asarray(_interp_matrix_np(h2, h3), dtype=bf16)
    uw32 = jnp.asarray(_w_interp_matrix_np(w2, w3, w2p, w3p), dtype=bf16)

    outs = fpn_fused(r5, r4, r3, r2,
                     lw1, lb1, lw2, lb2, lw3, lb3, lw4, lb4, wpT, bp,
                     uh54, uw54, uh43, uw43, uh32, uw32,
                     want_features=get_features)

    B = res2.shape[0]
    if get_features:
        o4_flat, pred_t = outs
    else:
        pred_t = outs

    # pred arrives transposed (B, n_cls, H2*W2p): reshape + slice pad -> NCHW.
    pred = pred_t.reshape(B, n_cls, h2, w2p)[..., :w2]
    if get_features:
        o4 = (o4_flat.reshape(B, h2, w2p, D)[:, :, :w2, :]
              .astype(jnp.float32)            # kernel stores bf16; upcast here
              .transpose(0, 3, 1, 2))
        return o4, pred
    return pred


# -------------------------- pure-JAX reference --------------------------------

def ref_forward(params, feats):
    hp = jax.lax.Precision.HIGHEST

    def conv(x, w, b):
        return jnp.einsum("bchw,cd->bdhw", x, w, precision=hp) + b.reshape(1, -1, 1, 1)

    def up_add(x, y):
        uh = jnp.asarray(_interp_matrix_np(y.shape[2], x.shape[2]))
        uw = jnp.asarray(_interp_matrix_np(y.shape[3], x.shape[3]))
        up = jnp.einsum("Hh,bchw,Ww->bcHW", uh, x, uw, precision=hp)
        return up + y

    o1 = conv(feats["res5"], params["layer1_w"], params["layer1_b"])
    o2 = up_add(o1, conv(feats["res4"], params["layer2_w"], params["layer2_b"]))
    o3 = up_add(o2, conv(feats["res3"], params["layer3_w"], params["layer3_b"]))
    o4 = up_add(o3, conv(feats["res2"], params["layer4_w"], params["layer4_b"]))
    pred = conv(o4, params["pred_w"], params["pred_b"])
    return o4, pred


if __name__ == "__main__":
    key = jax.random.PRNGKey(0)
    kp, k2, k3, k4, k5 = jax.random.split(key, 5)
    arch, n_cls, B = "resnet18", 8, 2

    feats = {
        "res2": jax.random.normal(k2, (B, 64, 16, 16), jnp.float32),
        "res3": jax.random.normal(k3, (B, 128, 8, 8), jnp.float32),
        "res4": jax.random.normal(k4, (B, 256, 4, 4), jnp.float32),
        "res5": jax.random.normal(k5, (B, 512, 2, 2), jnp.float32),
    }
    params = init_params(kp, arch, n_cls)

    o4, pred = fpn_decoder_forward(params, feats, get_features=True)
    pred_only = fpn_decoder_forward(params, feats, get_features=False)
    jax.block_until_ready((o4, pred, pred_only))

    o4_exp, pred_exp = ref_forward(params, feats)
    # Fully bf16-operand pipeline (convs, upsample, pred) with f32 accumulation
    # and a bf16 feature store -> slightly looser tolerance than before.
    np.testing.assert_allclose(np.asarray(o4), np.asarray(o4_exp),
                               rtol=4e-2, atol=4e-2)
    np.testing.assert_allclose(np.asarray(pred), np.asarray(pred_exp),
                               rtol=4e-2, atol=4e-2)
    np.testing.assert_allclose(np.asarray(pred_only), np.asarray(pred_exp),
                               rtol=4e-2, atol=4e-2)
    assert pred.shape == (B, n_cls, 16, 16)
    assert pred_only.shape == (B, n_cls, 16, 16)
    assert o4.shape == (B, 128, 16, 16)

    print("KERNEL_OK")
</pallas_src>

<mosaic_0001>
module attributes {stable_mosaic.version = 11 : i64} {
  func.func @_fpn_fused_kernel(%arg0: i32, %arg1: memref<1x16x512xbf16, #tpu.memory_space<vmem>>, %arg2: memref<1x32x256xbf16, #tpu.memory_space<vmem>>, %arg3: memref<1x64x128xbf16, #tpu.memory_space<vmem>>, %arg4: memref<1x256x64xbf16, #tpu.memory_space<vmem>>, %arg5: memref<512x128xbf16, #tpu.memory_space<vmem>>, %arg6: memref<1x128xf32, #tpu.memory_space<vmem>>, %arg7: memref<256x128xbf16, #tpu.memory_space<vmem>>, %arg8: memref<1x128xf32, #tpu.memory_space<vmem>>, %arg9: memref<128x128xbf16, #tpu.memory_space<vmem>>, %arg10: memref<1x128xf32, #tpu.memory_space<vmem>>, %arg11: memref<64x128xbf16, #tpu.memory_space<vmem>>, %arg12: memref<1x128xf32, #tpu.memory_space<vmem>>, %arg13: memref<8x128xbf16, #tpu.memory_space<vmem>>, %arg14: memref<8x1xf32, #tpu.memory_space<vmem>>, %arg15: memref<4x2xbf16, #tpu.memory_space<vmem>>, %arg16: memref<8x8xbf16, #tpu.memory_space<vmem>>, %arg17: memref<8x4xbf16, #tpu.memory_space<vmem>>, %arg18: memref<8x8xbf16, #tpu.memory_space<vmem>>, %arg19: memref<16x8xbf16, #tpu.memory_space<vmem>>, %arg20: memref<16x8xbf16, #tpu.memory_space<vmem>>, %arg21: memref<1x256x128xbf16, #tpu.memory_space<vmem>>, %arg22: memref<1x8x256xf32, #tpu.memory_space<vmem>>) attributes {dimension_semantics = [#tpu.dimension_semantics<parallel>], iteration_bounds = array<i64: 2>, scalar_prefetch = 0 : i64, scratch_operands = 0 : i64, tpu.core_type = #tpu.core_type<tc>, window_params = [{transform_indices = @transform_0, window_bounds = array<i64: 1, 16, 512>}, {transform_indices = @transform_1, window_bounds = array<i64: 1, 32, 256>}, {transform_indices = @transform_2, window_bounds = array<i64: 1, 64, 128>}, {transform_indices = @transform_3, window_bounds = array<i64: 1, 256, 64>}, {pipeline_mode = #tpu.pipeline_mode<synchronous>, transform_indices = @transform_4, window_bounds = array<i64: 512, 128>}, {pipeline_mode = #tpu.pipeline_mode<synchronous>, transform_indices = @transform_5, window_bounds = array<i64: 1, 128>}, {pipeline_mode = #tpu.pipeline_mode<synchronous>, transform_indices = @transform_6, window_bounds = array<i64: 256, 128>}, {pipeline_mode = #tpu.pipeline_mode<synchronous>, transform_indices = @transform_7, window_bounds = array<i64: 1, 128>}, {pipeline_mode = #tpu.pipeline_mode<synchronous>, transform_indices = @transform_8, window_bounds = array<i64: 128, 128>}, {pipeline_mode = #tpu.pipeline_mode<synchronous>, transform_indices = @transform_9, window_bounds = array<i64: 1, 128>}, {pipeline_mode = #tpu.pipeline_mode<synchronous>, transform_indices = @transform_10, window_bounds = array<i64: 64, 128>}, {pipeline_mode = #tpu.pipeline_mode<synchronous>, transform_indices = @transform_11, window_bounds = array<i64: 1, 128>}, {pipeline_mode = #tpu.pipeline_mode<synchronous>, transform_indices = @transform_12, window_bounds = array<i64: 8, 128>}, {pipeline_mode = #tpu.pipeline_mode<synchronous>, transform_indices = @transform_13, window_bounds = array<i64: 8, 1>}, {pipeline_mode = #tpu.pipeline_mode<synchronous>, transform_indices = @transform_14, window_bounds = array<i64: 4, 2>}, {pipeline_mode = #tpu.pipeline_mode<synchronous>, transform_indices = @transform_15, window_bounds = array<i64: 8, 8>}, {pipeline_mode = #tpu.pipeline_mode<synchronous>, transform_indices = @transform_16, window_bounds = array<i64: 8, 4>}, {pipeline_mode = #tpu.pipeline_mode<synchronous>, transform_indices = @transform_17, window_bounds = array<i64: 8, 8>}, {pipeline_mode = #tpu.pipeline_mode<synchronous>, transform_indices = @transform_18, window_bounds = array<i64: 16, 8>}, {pipeline_mode = #tpu.pipeline_mode<synchronous>, transform_indices = @transform_19, window_bounds = array<i64: 16, 8>}, {transform_indices = @transform_20, window_bounds = array<i64: 1, 256, 128>}, {transform_indices = @transform_21, window_bounds = array<i64: 1, 8, 256>}]} {
    %c0 = arith.constant 0 : index
    %c0_0 = arith.constant 0 : index
    %c0_1 = arith.constant 0 : index
    %0 = vector.load %arg1[%c0, %c0_0, %c0_1] : memref<1x16x512xbf16, #tpu.memory_space<vmem>>, vector<1x16x512xbf16>
    %1 = vector.shape_cast %0 : vector<1x16x512xbf16> to vector<16x512xbf16>
    %c0_2 = arith.constant 0 : index
    %c0_3 = arith.constant 0 : index
    %2 = vector.load %arg5[%c0_2, %c0_3] : memref<512x128xbf16, #tpu.memory_space<vmem>>, vector<512x128xbf16>
    %cst = arith.constant dense<0.000000e+00> : vector<16x128xf32>
    %3 = tpu.matmul %1, %2, %cst {dimension_numbers = #tpu.dot_dimension_numbers<[1], [0], [0], [1], [0, 0, 1, 1], [], []>} : vector<16x512xbf16>, vector<512x128xbf16>, vector<16x128xf32> -> vector<16x128xf32>
    %c0_4 = arith.constant 0 : index
    %c0_5 = arith.constant 0 : index
    %4 = vector.load %arg6[%c0_4, %c0_5] : memref<1x128xf32, #tpu.memory_space<vmem>>, vector<1x128xf32>
    %5 = vector.broadcast %4 : vector<1x128xf32> to vector<16x128xf32>
    %6 = arith.addf %3, %5 : vector<16x128xf32>
    %7 = arith.truncf %6 : vector<16x128xf32> to vector<16x128xbf16>
    %8 = vector.shape_cast %7 : vector<16x128xbf16> to vector<2x1024xbf16>
    %c0_6 = arith.constant 0 : index
    %c0_7 = arith.constant 0 : index
    %9 = vector.load %arg15[%c0_6, %c0_7] : memref<4x2xbf16, #tpu.memory_space<vmem>>, vector<4x2xbf16>
    %cst_8 = arith.constant dense<0.000000e+00> : vector<4x1024xf32>
    %10 = tpu.matmul %9, %8, %cst_8 {dimension_numbers = #tpu.dot_dimension_numbers<[1], [0], [0], [1], [0, 0, 1, 1], [], []>} : vector<4x2xbf16>, vector<2x1024xbf16>, vector<4x1024xf32> -> vector<4x1024xf32>
    %11 = arith.truncf %10 : vector<4x1024xf32> to vector<4x1024xbf16>
    %12 = vector.shape_cast %11 : vector<4x1024xbf16> to vector<4x8x128xbf16>
    %c0_9 = arith.constant 0 : index
    %c0_10 = arith.constant 0 : index
    %13 = vector.load %arg16[%c0_9, %c0_10] : memref<8x8xbf16, #tpu.memory_space<vmem>>, vector<8x8xbf16>
    %14 = vector.shape_cast %13 : vector<8x8xbf16> to vector<1x8x8xbf16>
    %15 = vector.broadcast %14 : vector<1x8x8xbf16> to vector<4x8x8xbf16>
    %cst_11 = arith.constant dense<0.000000e+00> : vector<4x8x128xf32>
    %16 = tpu.matmul %15, %12, %cst_11 {dimension_numbers = #tpu.dot_dimension_numbers<[2], [1], [1], [2], [0, 0, 0, 1, 1, 2], [0], [0]>} : vector<4x8x8xbf16>, vector<4x8x128xbf16>, vector<4x8x128xf32> -> vector<4x8x128xf32>
    %17 = vector.shape_cast %16 : vector<4x8x128xf32> to vector<32x128xf32>
    %c0_12 = arith.constant 0 : index
    %c0_13 = arith.constant 0 : index
    %c0_14 = arith.constant 0 : index
    %18 = vector.load %arg2[%c0_12, %c0_13, %c0_14] : memref<1x32x256xbf16, #tpu.memory_space<vmem>>, vector<1x32x256xbf16>
    %19 = vector.shape_cast %18 : vector<1x32x256xbf16> to vector<32x256xbf16>
    %c0_15 = arith.constant 0 : index
    %c0_16 = arith.constant 0 : index
    %20 = vector.load %arg7[%c0_15, %c0_16] : memref<256x128xbf16, #tpu.memory_space<vmem>>, vector<256x128xbf16>
    %cst_17 = arith.constant dense<0.000000e+00> : vector<32x128xf32>
    %21 = tpu.matmul %19, %20, %cst_17 {dimension_numbers = #tpu.dot_dimension_numbers<[1], [0], [0], [1], [0, 0, 1, 1], [], []>} : vector<32x256xbf16>, vector<256x128xbf16>, vector<32x128xf32> -> vector<32x128xf32>
    %c0_18 = arith.constant 0 : index
    %c0_19 = arith.constant 0 : index
    %22 = vector.load %arg8[%c0_18, %c0_19] : memref<1x128xf32, #tpu.memory_space<vmem>>, vector<1x128xf32>
    %23 = vector.broadcast %22 : vector<1x128xf32> to vector<32x128xf32>
    %24 = arith.addf %21, %23 : vector<32x128xf32>
    %25 = arith.addf %17, %24 : vector<32x128xf32>
    %26 = arith.truncf %25 : vector<32x128xf32> to vector<32x128xbf16>
    %27 = vector.shape_cast %26 : vector<32x128xbf16> to vector<4x1024xbf16>
    %c0_20 = arith.constant 0 : index
    %c0_21 = arith.constant 0 : index
    %28 = vector.load %arg17[%c0_20, %c0_21] : memref<8x4xbf16, #tpu.memory_space<vmem>>, vector<8x4xbf16>
    %cst_22 = arith.constant dense<0.000000e+00> : vector<8x1024xf32>
    %29 = tpu.matmul %28, %27, %cst_22 {dimension_numbers = #tpu.dot_dimension_numbers<[1], [0], [0], [1], [0, 0, 1, 1], [], []>} : vector<8x4xbf16>, vector<4x1024xbf16>, vector<8x1024xf32> -> vector<8x1024xf32>
    %30 = arith.truncf %29 : vector<8x1024xf32> to vector<8x1024xbf16>
    %31 = vector.shape_cast %30 : vector<8x1024xbf16> to vector<8x8x128xbf16>
    %c0_23 = arith.constant 0 : index
    %c0_24 = arith.constant 0 : index
    %32 = vector.load %arg18[%c0_23, %c0_24] : memref<8x8xbf16, #tpu.memory_space<vmem>>, vector<8x8xbf16>
    %33 = vector.shape_cast %32 : vector<8x8xbf16> to vector<1x8x8xbf16>
    %34 = vector.broadcast %33 : vector<1x8x8xbf16> to vector<8x8x8xbf16>
    %cst_25 = arith.constant dense<0.000000e+00> : vector<8x8x128xf32>
    %35 = tpu.matmul %34, %31, %cst_25 {dimension_numbers = #tpu.dot_dimension_numbers<[2], [1], [1], [2], [0, 0, 0, 1, 1, 2], [0], [0]>} : vector<8x8x8xbf16>, vector<8x8x128xbf16>, vector<8x8x128xf32> -> vector<8x8x128xf32>
    %36 = vector.shape_cast %35 : vector<8x8x128xf32> to vector<64x128xf32>
    %c0_26 = arith.constant 0 : index
    %c0_27 = arith.constant 0 : index
    %c0_28 = arith.constant 0 : index
    %37 = vector.load %arg3[%c0_26, %c0_27, %c0_28] : memref<1x64x128xbf16, #tpu.memory_space<vmem>>, vector<1x64x128xbf16>
    %38 = vector.shape_cast %37 : vector<1x64x128xbf16> to vector<64x128xbf16>
    %c0_29 = arith.constant 0 : index
    %c0_30 = arith.constant 0 : index
    %39 = vector.load %arg9[%c0_29, %c0_30] : memref<128x128xbf16, #tpu.memory_space<vmem>>, vector<128x128xbf16>
    %cst_31 = arith.constant dense<0.000000e+00> : vector<64x128xf32>
    %40 = tpu.matmul %38, %39, %cst_31 {dimension_numbers = #tpu.dot_dimension_numbers<[1], [0], [0], [1], [0, 0, 1, 1], [], []>} : vector<64x128xbf16>, vector<128x128xbf16>, vector<64x128xf32> -> vector<64x128xf32>
    %c0_32 = arith.constant 0 : index
    %c0_33 = arith.constant 0 : index
    %41 = vector.load %arg10[%c0_32, %c0_33] : memref<1x128xf32, #tpu.memory_space<vmem>>, vector<1x128xf32>
    %42 = vector.broadcast %41 : vector<1x128xf32> to vector<64x128xf32>
    %43 = arith.addf %40, %42 : vector<64x128xf32>
    %44 = arith.addf %36, %43 : vector<64x128xf32>
    %45 = arith.truncf %44 : vector<64x128xf32> to vector<64x128xbf16>
    %46 = vector.shape_cast %45 : vector<64x128xbf16> to vector<8x1024xbf16>
    %c0_34 = arith.constant 0 : index
    %c0_35 = arith.constant 0 : index
    %47 = vector.load %arg19[%c0_34, %c0_35] : memref<16x8xbf16, #tpu.memory_space<vmem>>, vector<16x8xbf16>
    %cst_36 = arith.constant dense<0.000000e+00> : vector<16x1024xf32>
    %48 = tpu.matmul %47, %46, %cst_36 {dimension_numbers = #tpu.dot_dimension_numbers<[1], [0], [0], [1], [0, 0, 1, 1], [], []>} : vector<16x8xbf16>, vector<8x1024xbf16>, vector<16x1024xf32> -> vector<16x1024xf32>
    %49 = arith.truncf %48 : vector<16x1024xf32> to vector<16x1024xbf16>
    %50 = vector.shape_cast %49 : vector<16x1024xbf16> to vector<16x8x128xbf16>
    %c0_37 = arith.constant 0 : index
    %c0_38 = arith.constant 0 : index
    %51 = vector.load %arg20[%c0_37, %c0_38] : memref<16x8xbf16, #tpu.memory_space<vmem>>, vector<16x8xbf16>
    %52 = vector.shape_cast %51 : vector<16x8xbf16> to vector<1x16x8xbf16>
    %53 = vector.broadcast %52 : vector<1x16x8xbf16> to vector<16x16x8xbf16>
    %cst_39 = arith.constant dense<0.000000e+00> : vector<16x16x128xf32>
    %54 = tpu.matmul %53, %50, %cst_39 {dimension_numbers = #tpu.dot_dimension_numbers<[2], [1], [1], [2], [0, 0, 0, 1, 1, 2], [0], [0]>} : vector<16x16x8xbf16>, vector<16x8x128xbf16>, vector<16x16x128xf32> -> vector<16x16x128xf32>
    %55 = vector.shape_cast %54 : vector<16x16x128xf32> to vector<256x128xf32>
    %c0_40 = arith.constant 0 : index
    %c0_41 = arith.constant 0 : index
    %c0_42 = arith.constant 0 : index
    %56 = vector.load %arg4[%c0_40, %c0_41, %c0_42] : memref<1x256x64xbf16, #tpu.memory_space<vmem>>, vector<1x256x64xbf16>
    %57 = vector.shape_cast %56 : vector<1x256x64xbf16> to vector<256x64xbf16>
    %c0_43 = arith.constant 0 : index
    %c0_44 = arith.constant 0 : index
    %58 = vector.load %arg11[%c0_43, %c0_44] : memref<64x128xbf16, #tpu.memory_space<vmem>>, vector<64x128xbf16>
    %cst_45 = arith.constant dense<0.000000e+00> : vector<256x128xf32>
    %59 = tpu.matmul %57, %58, %cst_45 {dimension_numbers = #tpu.dot_dimension_numbers<[1], [0], [0], [1], [0, 0, 1, 1], [], []>} : vector<256x64xbf16>, vector<64x128xbf16>, vector<256x128xf32> -> vector<256x128xf32>
    %c0_46 = arith.constant 0 : index
    %c0_47 = arith.constant 0 : index
    %60 = vector.load %arg12[%c0_46, %c0_47] : memref<1x128xf32, #tpu.memory_space<vmem>>, vector<1x128xf32>
    %61 = vector.broadcast %60 : vector<1x128xf32> to vector<256x128xf32>
    %62 = arith.addf %59, %61 : vector<256x128xf32>
    %63 = arith.addf %55, %62 : vector<256x128xf32>
    %64 = arith.truncf %63 : vector<256x128xf32> to vector<256x128xbf16>
    %c0_48 = arith.constant 0 : index
    %c0_49 = arith.constant 0 : index
    %c0_50 = arith.constant 0 : index
    %65 = vector.load %arg21[%c0_48, %c0_49, %c0_50] : memref<1x256x128xbf16, #tpu.memory_space<vmem>>, vector<1x256x128xbf16>
    %66 = vector.shape_cast %65 : vector<1x256x128xbf16> to vector<256x128xbf16>
    %67 = vector.shape_cast %64 : vector<256x128xbf16> to vector<1x256x128xbf16>
    tpu.vector_store %arg21[%c0_48, %c0_49, %c0_50], %67 {strides = array<i32>} : memref<1x256x128xbf16, #tpu.memory_space<vmem>>, vector<1x256x128xbf16>,
    %c0_51 = arith.constant 0 : index
    %c0_52 = arith.constant 0 : index
    %68 = vector.load %arg13[%c0_51, %c0_52] : memref<8x128xbf16, #tpu.memory_space<vmem>>, vector<8x128xbf16>
    %cst_53 = arith.constant dense<0.000000e+00> : vector<8x256xf32>
    %69 = tpu.matmul %68, %64, %cst_53 {dimension_numbers = #tpu.dot_dimension_numbers<[1], [1], [0], [0], [0, 0, 1, 0], [], []>} : vector<8x128xbf16>, vector<256x128xbf16>, vector<8x256xf32> -> vector<8x256xf32>
    %c0_54 = arith.constant 0 : index
    %c0_55 = arith.constant 0 : index
    %70 = vector.load %arg14[%c0_54, %c0_55] : memref<8x1xf32, #tpu.memory_space<vmem>>, vector<8x1xf32>
    %71 = vector.broadcast %70 : vector<8x1xf32> to vector<8x256xf32>
    %72 = arith.addf %69, %71 : vector<8x256xf32>
    %c0_56 = arith.constant 0 : index
    %c0_57 = arith.constant 0 : index
    %c0_58 = arith.constant 0 : index
    %73 = vector.load %arg22[%c0_56, %c0_57, %c0_58] : memref<1x8x256xf32, #tpu.memory_space<vmem>>, vector<1x8x256xf32>
    %74 = vector.shape_cast %73 : vector<1x8x256xf32> to vector<8x256xf32>
    %75 = vector.shape_cast %72 : vector<8x256xf32> to vector<1x8x256xf32>
    tpu.vector_store %arg22[%c0_56, %c0_57, %c0_58], %75 {strides = array<i32>} : memref<1x8x256xf32, #tpu.memory_space<vmem>>, vector<1x8x256xf32>,
    return
  }
  func.func @transform_0(%arg0: i32) -> (i32, i32, i32) {
    %c0_i32 = arith.constant 0 : i32
    %c0_i32_0 = arith.constant 0 : i32
    %c0_i32_1 = arith.constant 0 : i32
    return %arg0, %c0_i32, %c0_i32_0 : i32, i32, i32
  }
  func.func @transform_1(%arg0: i32) -> (i32, i32, i32) {
    %c0_i32 = arith.constant 0 : i32
    %c0_i32_0 = arith.constant 0 : i32
    %c0_i32_1 = arith.constant 0 : i32
    return %arg0, %c0_i32, %c0_i32_0 : i32, i32, i32
  }
  func.func @transform_2(%arg0: i32) -> (i32, i32, i32) {
    %c0_i32 = arith.constant 0 : i32
    %c0_i32_0 = arith.constant 0 : i32
    %c0_i32_1 = arith.constant 0 : i32
    return %arg0, %c0_i32, %c0_i32_0 : i32, i32, i32
  }
  func.func @transform_3(%arg0: i32) -> (i32, i32, i32) {
    %c0_i32 = arith.constant 0 : i32
    %c0_i32_0 = arith.constant 0 : i32
    %c0_i32_1 = arith.constant 0 : i32
    return %arg0, %c0_i32, %c0_i32_0 : i32, i32, i32
  }
  func.func @transform_4(%arg0: i32) -> (i32, i32) {
    %c0_i32 = arith.constant 0 : i32
    %c0_i32_0 = arith.constant 0 : i32
    %c0_i32_1 = arith.constant 0 : i32
    return %c0_i32, %c0_i32_0 : i32, i32
  }
  func.func @transform_5(%arg0: i32) -> (i32, i32) {
    %c0_i32 = arith.constant 0 : i32
    %c0_i32_0 = arith.constant 0 : i32
    %c0_i32_1 = arith.constant 0 : i32
    return %c0_i32, %c0_i32_0 : i32, i32
  }
  func.func @transform_6(%arg0: i32) -> (i32, i32) {
    %c0_i32 = arith.constant 0 : i32
    %c0_i32_0 = arith.constant 0 : i32
    %c0_i32_1 = arith.constant 0 : i32
    return %c0_i32, %c0_i32_0 : i32, i32
  }
  func.func @transform_7(%arg0: i32) -> (i32, i32) {
    %c0_i32 = arith.constant 0 : i32
    %c0_i32_0 = arith.constant 0 : i32
    %c0_i32_1 = arith.constant 0 : i32
    return %c0_i32, %c0_i32_0 : i32, i32
  }
  func.func @transform_8(%arg0: i32) -> (i32, i32) {
    %c0_i32 = arith.constant 0 : i32
    %c0_i32_0 = arith.constant 0 : i32
    %c0_i32_1 = arith.constant 0 : i32
    return %c0_i32, %c0_i32_0 : i32, i32
  }
  func.func @transform_9(%arg0: i32) -> (i32, i32) {
    %c0_i32 = arith.constant 0 : i32
    %c0_i32_0 = arith.constant 0 : i32
    %c0_i32_1 = arith.constant 0 : i32
    return %c0_i32, %c0_i32_0 : i32, i32
  }
  func.func @transform_10(%arg0: i32) -> (i32, i32) {
    %c0_i32 = arith.constant 0 : i32
    %c0_i32_0 = arith.constant 0 : i32
    %c0_i32_1 = arith.constant 0 : i32
    return %c0_i32, %c0_i32_0 : i32, i32
  }
  func.func @transform_11(%arg0: i32) -> (i32, i32) {
    %c0_i32 = arith.constant 0 : i32
    %c0_i32_0 = arith.constant 0 : i32
    %c0_i32_1 = arith.constant 0 : i32
    return %c0_i32, %c0_i32_0 : i32, i32
  }
  func.func @transform_12(%arg0: i32) -> (i32, i32) {
    %c0_i32 = arith.constant 0 : i32
    %c0_i32_0 = arith.constant 0 : i32
    %c0_i32_1 = arith.constant 0 : i32
    return %c0_i32, %c0_i32_0 : i32, i32
  }
  func.func @transform_13(%arg0: i32) -> (i32, i32) {
    %c0_i32 = arith.constant 0 : i32
    %c0_i32_0 = arith.constant 0 : i32
    %c0_i32_1 = arith.constant 0 : i32
    return %c0_i32, %c0_i32_0 : i32, i32
  }
  func.func @transform_14(%arg0: i32) -> (i32, i32) {
    %c0_i32 = arith.constant 0 : i32
    %c0_i32_0 = arith.constant 0 : i32
    %c0_i32_1 = arith.constant 0 : i32
    return %c0_i32, %c0_i32_0 : i32, i32
  }
  func.func @transform_15(%arg0: i32) -> (i32, i32) {
    %c0_i32 = arith.constant 0 : i32
    %c0_i32_0 = arith.constant 0 : i32
    %c0_i32_1 = arith.constant 0 : i32
    return %c0_i32, %c0_i32_0 : i32, i32
  }
  func.func @transform_16(%arg0: i32) -> (i32, i32) {
    %c0_i32 = arith.constant 0 : i32
    %c0_i32_0 = arith.constant 0 : i32
    %c0_i32_1 = arith.constant 0 : i32
    return %c0_i32, %c0_i32_0 : i32, i32
  }
  func.func @transform_17(%arg0: i32) -> (i32, i32) {
    %c0_i32 = arith.constant 0 : i32
    %c0_i32_0 = arith.constant 0 : i32
    %c0_i32_1 = arith.constant 0 : i32
    return %c0_i32, %c0_i32_0 : i32, i32
  }
  func.func @transform_18(%arg0: i32) -> (i32, i32) {
    %c0_i32 = arith.constant 0 : i32
    %c0_i32_0 = arith.constant 0 : i32
    %c0_i32_1 = arith.constant 0 : i32
    return %c0_i32, %c0_i32_0 : i32, i32
  }
  func.func @transform_19(%arg0: i32) -> (i32, i32) {
    %c0_i32 = arith.constant 0 : i32
    %c0_i32_0 = arith.constant 0 : i32
    %c0_i32_1 = arith.constant 0 : i32
    return %c0_i32, %c0_i32_0 : i32, i32
  }
  func.func @transform_20(%arg0: i32) -> (i32, i32, i32) {
    %c0_i32 = arith.constant 0 : i32
    %c0_i32_0 = arith.constant 0 : i32
    %c0_i32_1 = arith.constant 0 : i32
    return %arg0, %c0_i32, %c0_i32_0 : i32, i32, i32
  }
  func.func @transform_21(%arg0: i32) -> (i32, i32, i32) {
    %c0_i32 = arith.constant 0 : i32
    %c0_i32_0 = arith.constant 0 : i32
    %c0_i32_1 = arith.constant 0 : i32
    return %arg0, %c0_i32, %c0_i32_0 : i32, i32, i32
  }
}

</mosaic_0001>

<llo_original>
// kernel: tpu_custom_call.1
$region0: #{tpu_custom_call.1}
  #allocation0 [shape = 'u32[]', space=smem, size = 0x4, offset = 0x4, fixed_abs, tag = 'smem constant byte address 0x4 - core index']
  #allocation1 [shape = 'u32[144,128]{1,0:T(1,128)}', space=vmem, size = 0x12000, scoped, tag = 'internal scratch']
  %s0 = inlined_call_operand.hbm [shape: bf16[2,16,512], index: 0, kind: input, shape index: {}]
  %s1 = inlined_call_operand.hbm [shape: bf16[2,32,256], index: 1, kind: input, shape index: {}]
  %s2 = inlined_call_operand.hbm [shape: bf16[2,64,128], index: 2, kind: input, shape index: {}]
  %s3 = inlined_call_operand.vmem [shape: bf16[2,256,64], index: 3, kind: input, shape index: {}]
  %s4 = inlined_call_operand.vmem [shape: bf16[512,128], index: 4, kind: input, shape index: {}]
  %s5 = inlined_call_operand.hbm [shape: f32[1,128], index: 5, kind: input, shape index: {}]
  %s6 = inlined_call_operand.vmem [shape: bf16[256,128], index: 6, kind: input, shape index: {}]
  %s7 = inlined_call_operand.hbm [shape: f32[1,128], index: 7, kind: input, shape index: {}]
  %s8 = inlined_call_operand.vmem [shape: bf16[128,128], index: 8, kind: input, shape index: {}]
  %s9 = inlined_call_operand.hbm [shape: f32[1,128], index: 9, kind: input, shape index: {}]
  %s10 = inlined_call_operand.hbm [shape: bf16[64,128], index: 10, kind: input, shape index: {}]
  %s11 = inlined_call_operand.hbm [shape: f32[1,128], index: 11, kind: input, shape index: {}]
  %s12 = inlined_call_operand.vmem [shape: bf16[8,128], index: 12, kind: input, shape index: {}]
  %s13 = inlined_call_operand.vmem [shape: f32[8,1], index: 13, kind: input, shape index: {}]
  %s14 = inlined_call_operand.vmem [shape: bf16[4,2], index: 14, kind: input, shape index: {}]
  %s15 = inlined_call_operand.vmem [shape: bf16[8,8], index: 15, kind: input, shape index: {}]
  %s16 = inlined_call_operand.vmem [shape: bf16[8,4], index: 16, kind: input, shape index: {}]
  %s17 = inlined_call_operand.vmem [shape: bf16[8,8], index: 17, kind: input, shape index: {}]
  %s18 = inlined_call_operand.vmem [shape: bf16[16,8], index: 18, kind: input, shape index: {}]
  %s19 = inlined_call_operand.vmem [shape: bf16[16,8], index: 19, kind: input, shape index: {}]
  %s20 = inlined_call_operand.hbm [shape: bf16[2,256,128], index: 20, kind: output, shape index: {0}]
  %s21 = inlined_call_operand.hbm [shape: f32[2,8,256], index: 21, kind: output, shape index: {1}]
  %22 = xla_tuple %s20, %s21
  %s23 = sld [smem:[#allocation0]]
  $region153: #{tpu_custom_call.1} parent=0
    _
  %s25 = ssub.s32 1, %s23
  %s26 = scalar_select 0, %s25, %s23
  $region1: #{tpu_custom_call.1} parent=0
    #allocation2 [shape = 'u8[32768]{0}', space=vmem, size = 0x8000, scoped, tag = 'input window, operand 0']
    #allocation3 [shape = 's32[2]{0}', space=sflag, size = 0x8, scoped, tag = 'scoped memory for tpu_custom_call.1']
    #allocation4 [shape = 's32[2]{0}', space=sflag, size = 0x8, scoped, tag = 'scoped memory for tpu_custom_call.1']
    #allocation5 [shape = 'u8[32768]{0}', space=vmem, size = 0x8000, scoped, tag = 'input window, operand 1']
    #allocation6 [shape = 's32[2]{0}', space=sflag, size = 0x8, scoped, tag = 'scoped memory for tpu_custom_call.1']
    #allocation7 [shape = 'u8[32768]{0}', space=vmem, size = 0x8000, scoped, tag = 'input window, operand 2']
    #allocation8 [shape = 'u8[512]{0}', space=vmem, size = 0x400, scoped, tag = 'input window, operand 5, single buffered']
    #allocation9 [shape = 's32[1]{0}', space=sflag, size = 0x4, scoped, tag = 'scoped memory for tpu_custom_call.1']
    #allocation10 [shape = 'u8[512]{0}', space=vmem, size = 0x400, scoped, tag = 'input window, operand 7, single buffered']
    #allocation11 [shape = 'u8[512]{0}', space=vmem, size = 0x400, scoped, tag = 'input window, operand 9, single buffered']
    #allocation12 [shape = 's32[1]{0}', space=sflag, size = 0x4, scoped, tag = 'scoped memory for tpu_custom_call.1']
    #allocation13 [shape = 'u8[16384]{0}', space=vmem, size = 0x4000, scoped, tag = 'input window, operand 10, single buffered']
    #allocation14 [shape = 'u8[512]{0}', space=vmem, size = 0x400, scoped, tag = 'input window, operand 11, single buffered']
    #allocation15 [shape = 's32[1]{0}', space=sflag, size = 0x4, scoped, tag = 'scoped memory for tpu_custom_call.1']
    #allocation16 [shape = 'u8[131072]{0}', space=vmem, size = 0x20000, scoped, tag = 'output window, operand 0']
    #allocation17 [shape = 'u8[16384]{0}', space=vmem, size = 0x4000, scoped, tag = 'output window, operand 1']
    #allocation18 [shape = 's32[2]{0}', space=sflag, size = 0x8, scoped, tag = 'scoped memory for tpu_custom_call.1']
    %27 = vsyncpa [#allocation3], 0
    %s28 = scalar_lea.sflag [#allocation3], 1
    %29 = vsyncpa %s28, 0
    %30 = vsyncpa [#allocation6], 0
    %s31 = scalar_lea.sflag [#allocation6], 1
    %32 = vsyncpa %s31, 0
    %33 = vsyncpa [#allocation9], 0
    %34 = vsyncpa [#allocation12], 0
    %35 = vsyncpa [#allocation15], 0
    %36 = vsyncpa [#allocation4], 0
    %s37 = scalar_lea.sflag [#allocation4], 1
    %38 = vsyncpa %s37, 0
    %39 = vsyncpa [#allocation18], 0
    %s40 = scalar_lea.sflag [#allocation18], 1
    %41 = vsyncpa %s40, 0
    loop: start=0, step=1, limit=4
    $region2: #{tpu_custom_call.1} parent=1 // loop_pre_header
      _
    $region3: #{tpu_custom_call.1} parent=1 // loop_header
      %s43 = sphi 0, %s47
      %p44 = scmp.ge.s32.totalorder %s43, 4
      %s53 = sphi 0, %s55
      %s56 = sphi 0, %s53
      %s57 = sphi 0, %s56
      %s73 = sphi 0, %s57
      %s79 = sphi 0, %s81
      %s82 = sphi 0, %s79
      %s83 = sphi 0, %s82
      %s99 = sphi 0, %s83
      %s105 = sphi 0, %s107
      %s108 = sphi 0, %s105
      %s109 = sphi 0, %s108
      %s125 = sphi 0, %s109
      %s131 = sphi 0, %s133
      %s134 = sphi 0, %s131
      %s135 = sphi 0, %s134
      %s151 = sphi 0, %s135
      %s155 = sphi 0, %s155
      %s157 = sphi 0, %s155
      %s158 = sphi 0, %s157
      %s172 = sphi 0, %s158
      %s176 = sphi 0, %s176
      %s178 = sphi 0, %s176
      %s179 = sphi 0, %s178
      %s193 = sphi 0, %s179
      %s197 = sphi 0, %s197
      %s199 = sphi 0, %s197
      %s200 = sphi 0, %s199
      %s214 = sphi 0, %s200
      %s218 = sphi 0, %s218
      %s220 = sphi 0, %s218
      %s221 = sphi 0, %s220
      %s235 = sphi 0, %s221
      %s239 = sphi 0, %s239
      %s241 = sphi 0, %s239
      %s242 = sphi 0, %s241
      %s256 = sphi 0, %s242
      %s260 = sphi 0, %s260
      %s262 = sphi 0, %s260
      %s263 = sphi 0, %s262
      %s277 = sphi 0, %s263
      %s281 = sphi 0, %s281
      %s283 = sphi 0, %s281
      %s284 = sphi 0, %s283
      %s298 = sphi 0, %s284
      %s302 = sphi 0, %s302
      %s304 = sphi 0, %s302
      %s305 = sphi 0, %s304
      %s319 = sphi 0, %s305
      %s323 = sphi 0, %s323
      %s325 = sphi 0, %s323
      %s326 = sphi 0, %s325
      %s340 = sphi 0, %s326
      %s344 = sphi 0, %s344
      %s346 = sphi 0, %s344
      %s347 = sphi 0, %s346
      %s361 = sphi 0, %s347
      %s365 = sphi 0, %s365
      %s367 = sphi 0, %s365
      %s368 = sphi 0, %s367
      %s382 = sphi 0, %s368
      %s386 = sphi 0, %s386
      %s388 = sphi 0, %s386
      %s389 = sphi 0, %s388
      %s403 = sphi 0, %s389
      %s407 = sphi 0, %s407
      %s409 = sphi 0, %s407
      %s410 = sphi 0, %s409
      %s424 = sphi 0, %s410
      %s428 = sphi 0, %s428
      %s430 = sphi 0, %s428
      %s431 = sphi 0, %s430
      %s445 = sphi 0, %s431
      %s449 = sphi 0, %s449
      %s451 = sphi 0, %s449
      %s452 = sphi 0, %s451
      %s466 = sphi 0, %s452
      %s470 = sphi 0, %s470
      %s472 = sphi 0, %s470
      %s473 = sphi 0, %s472
      %s487 = sphi 0, %s473
      %s493 = sphi 0, %s495
      %s496 = sphi 0, %s493
      %s497 = sphi 0, %s496
      %s513 = sphi 0, %s497
      %s519 = sphi 0, %s521
      %s522 = sphi 0, %s519
      %s523 = sphi 0, %s522
      %s539 = sphi 0, %s523
    $region4: #{tpu_custom_call.1} parent=1 // loop_header_branch
      %46 = sbr.rel (%p44) target = $region8
    $region5: #{tpu_custom_call.1} parent=1 // loop_body
      %s48 = ssub.s32 %s43, 1
      %s49 = ssub.s32 %s43, 2
      %s50 = sadd.s32 %s43, 1
      %s51 = ssub.s32 %s43, %s50
      %p52 = scmp.eq.s32.totalorder %s51, 0
      %s54 = sadd.s32 %s53, 1
      %s55 = scalar_select %p52, %s53, %s54
      %p58 = pneg %p52
      %p59 = scmp.eq.s32.totalorder %s43, 1
      %p60 = por %p58, %p59
      %p61 = scmp.ne.s32.totalorder %s53, %s56
      %p62 = scmp.eq.s32.totalorder %s43, 0
      %p63 = por %p61, %p62
      %p64 = scmp.ne.s32.totalorder %s53, %s56
      %p65 = scmp.eq.s32.totalorder %s48, 1
      %p66 = por %p64, %p65
      %p67 = scmp.ne.s32.totalorder %s56, %s57
      %p68 = scmp.eq.s32.totalorder %s48, 0
      %p69 = por %p67, %p68
      %p70 = scmp.ne.s32.totalorder %s56, %s57
      %p71 = scmp.eq.s32.totalorder %s49, 1
      %p72 = por %p70, %p71
      %p74 = scmp.ne.s32.totalorder %s57, %s73
      %p75 = scmp.eq.s32.totalorder %s49, 0
      %p76 = por %p74, %p75
      %s77 = ssub.s32 %s43, %s50
      %p78 = scmp.eq.s32.totalorder %s77, 0
      %s80 = sadd.s32 %s79, 1
      %s81 = scalar_select %p78, %s79, %s80
      %p84 = pneg %p78
      %p85 = scmp.eq.s32.totalorder %s43, 1
      %p86 = por %p84, %p85
      %p87 = scmp.ne.s32.totalorder %s79, %s82
      %p88 = scmp.eq.s32.totalorder %s43, 0
      %p89 = por %p87, %p88
      %p90 = scmp.ne.s32.totalorder %s79, %s82
      %p91 = scmp.eq.s32.totalorder %s48, 1
      %p92 = por %p90, %p91
      %p93 = scmp.ne.s32.totalorder %s82, %s83
      %p94 = scmp.eq.s32.totalorder %s48, 0
      %p95 = por %p93, %p94
      %p96 = scmp.ne.s32.totalorder %s82, %s83
      %p97 = scmp.eq.s32.totalorder %s49, 1
      %p98 = por %p96, %p97
      %p100 = scmp.ne.s32.totalorder %s83, %s99
      %p101 = scmp.eq.s32.totalorder %s49, 0
      %p102 = por %p100, %p101
      %s103 = ssub.s32 %s43, %s50
      %p104 = scmp.eq.s32.totalorder %s103, 0
      %s106 = sadd.s32 %s105, 1
      %s107 = scalar_select %p104, %s105, %s106
      %p110 = pneg %p104
      %p111 = scmp.eq.s32.totalorder %s43, 1
      %p112 = por %p110, %p111
      %p113 = scmp.ne.s32.totalorder %s105, %s108
      %p114 = scmp.eq.s32.totalorder %s43, 0
      %p115 = por %p113, %p114
      %p116 = scmp.ne.s32.totalorder %s105, %s108
      %p117 = scmp.eq.s32.totalorder %s48, 1
      %p118 = por %p116, %p117
      %p119 = scmp.ne.s32.totalorder %s108, %s109
      %p120 = scmp.eq.s32.totalorder %s48, 0
      %p121 = por %p119, %p120
      %p122 = scmp.ne.s32.totalorder %s108, %s109
      %p123 = scmp.eq.s32.totalorder %s49, 1
      %p124 = por %p122, %p123
      %p126 = scmp.ne.s32.totalorder %s109, %s125
      %p127 = scmp.eq.s32.totalorder %s49, 0
      %p128 = por %p126, %p127
      %s129 = ssub.s32 %s43, %s50
      %p130 = scmp.eq.s32.totalorder %s129, 0
      %s132 = sadd.s32 %s131, 1
      %s133 = scalar_select %p130, %s131, %s132
      %p136 = pneg %p130
      %p137 = scmp.eq.s32.totalorder %s43, 1
      %p138 = por %p136, %p137
      %p139 = scmp.ne.s32.totalorder %s131, %s134
      %p140 = scmp.eq.s32.totalorder %s43, 0
      %p141 = por %p139, %p140
      %p142 = scmp.ne.s32.totalorder %s131, %s134
      %p143 = scmp.eq.s32.totalorder %s48, 1
      %p144 = por %p142, %p143
      %p145 = scmp.ne.s32.totalorder %s134, %s135
      %p146 = scmp.eq.s32.totalorder %s48, 0
      %p147 = por %p145, %p146
      %p148 = scmp.ne.s32.totalorder %s134, %s135
      %p149 = scmp.eq.s32.totalorder %s49, 1
      %p150 = por %p148, %p149
      %p152 = scmp.ne.s32.totalorder %s135, %s151
      %p153 = scmp.eq.s32.totalorder %s49, 0
      %p154 = por %p152, %p153
      %s156 = sadd.s32 %s155, 1
      %p159 = scmp.eq.s32.totalorder %s43, 1
      %p160 = scmp.ne.s32.totalorder %s155, %s157
      %p161 = scmp.eq.s32.totalorder %s43, 0
      %p162 = por %p160, %p161
      %p163 = scmp.ne.s32.totalorder %s155, %s157
      %p164 = scmp.eq.s32.totalorder %s48, 1
      %p165 = por %p163, %p164
      %p166 = scmp.ne.s32.totalorder %s157, %s158
      %p167 = scmp.eq.s32.totalorder %s48, 0
      %p168 = por %p166, %p167
      %p169 = scmp.ne.s32.totalorder %s157, %s158
      %p170 = scmp.eq.s32.totalorder %s49, 1
      %p171 = por %p169, %p170
      %p173 = scmp.ne.s32.totalorder %s158, %s172
      %p174 = scmp.eq.s32.totalorder %s49, 0
      %p175 = por %p173, %p174
      %s177 = sadd.s32 %s176, 1
      %p180 = scmp.eq.s32.totalorder %s43, 1
      %p181 = scmp.ne.s32.totalorder %s176, %s178
      %p182 = scmp.eq.s32.totalorder %s43, 0
      %p183 = por %p181, %p182
      %p184 = scmp.ne.s32.totalorder %s176, %s178
      %p185 = scmp.eq.s32.totalorder %s48, 1
      %p186 = por %p184, %p185
      %p187 = scmp.ne.s32.totalorder %s178, %s179
      %p188 = scmp.eq.s32.totalorder %s48, 0
      %p189 = por %p187, %p188
      %p190 = scmp.ne.s32.totalorder %s178, %s179
      %p191 = scmp.eq.s32.totalorder %s49, 1
      %p192 = por %p190, %p191
      %p194 = scmp.ne.s32.totalorder %s179, %s193
      %p195 = scmp.eq.s32.totalorder %s49, 0
      %p196 = por %p194, %p195
      %s198 = sadd.s32 %s197, 1
      %p201 = scmp.eq.s32.totalorder %s43, 1
      %p202 = scmp.ne.s32.totalorder %s197, %s199
      %p203 = scmp.eq.s32.totalorder %s43, 0
      %p204 = por %p202, %p203
      %p205 = scmp.ne.s32.totalorder %s197, %s199
      %p206 = scmp.eq.s32.totalorder %s48, 1
      %p207 = por %p205, %p206
      %p208 = scmp.ne.s32.totalorder %s199, %s200
      %p209 = scmp.eq.s32.totalorder %s48, 0
      %p210 = por %p208, %p209
      %p211 = scmp.ne.s32.totalorder %s199, %s200
      %p212 = scmp.eq.s32.totalorder %s49, 1
      %p213 = por %p211, %p212
      %p215 = scmp.ne.s32.totalorder %s200, %s214
      %p216 = scmp.eq.s32.totalorder %s49, 0
      %p217 = por %p215, %p216
      %s219 = sadd.s32 %s218, 1
      %p222 = scmp.eq.s32.totalorder %s43, 1
      %p223 = scmp.ne.s32.totalorder %s218, %s220
      %p224 = scmp.eq.s32.totalorder %s43, 0
      %p225 = por %p223, %p224
      %p226 = scmp.ne.s32.totalorder %s218, %s220
      %p227 = scmp.eq.s32.totalorder %s48, 1
      %p228 = por %p226, %p227
      %p229 = scmp.ne.s32.totalorder %s220, %s221
      %p230 = scmp.eq.s32.totalorder %s48, 0
      %p231 = por %p229, %p230
      %p232 = scmp.ne.s32.totalorder %s220, %s221
      %p233 = scmp.eq.s32.totalorder %s49, 1
      %p234 = por %p232, %p233
      %p236 = scmp.ne.s32.totalorder %s221, %s235
      %p237 = scmp.eq.s32.totalorder %s49, 0
      %p238 = por %p236, %p237
      %s240 = sadd.s32 %s239, 1
      %p243 = scmp.eq.s32.totalorder %s43, 1
      %p244 = scmp.ne.s32.totalorder %s239, %s241
      %p245 = scmp.eq.s32.totalorder %s43, 0
      %p246 = por %p244, %p245
      %p247 = scmp.ne.s32.totalorder %s239, %s241
      %p248 = scmp.eq.s32.totalorder %s48, 1
      %p249 = por %p247, %p248
      %p250 = scmp.ne.s32.totalorder %s241, %s242
      %p251 = scmp.eq.s32.totalorder %s48, 0
      %p252 = por %p250, %p251
      %p253 = scmp.ne.s32.totalorder %s241, %s242
      %p254 = scmp.eq.s32.totalorder %s49, 1
      %p255 = por %p253, %p254
      %p257 = scmp.ne.s32.totalorder %s242, %s256
      %p258 = scmp.eq.s32.totalorder %s49, 0
      %p259 = por %p257, %p258
      %s261 = sadd.s32 %s260, 1
      %p264 = scmp.eq.s32.totalorder %s43, 1
      %p265 = scmp.ne.s32.totalorder %s260, %s262
      %p266 = scmp.eq.s32.totalorder %s43, 0
      %p267 = por %p265, %p266
      %p268 = scmp.ne.s32.totalorder %s260, %s262
      %p269 = scmp.eq.s32.totalorder %s48, 1
      %p270 = por %p268, %p269
      %p271 = scmp.ne.s32.totalorder %s262, %s263
      %p272 = scmp.eq.s32.totalorder %s48, 0
      %p273 = por %p271, %p272
      %p274 = scmp.ne.s32.totalorder %s262, %s263
      %p275 = scmp.eq.s32.totalorder %s49, 1
      %p276 = por %p274, %p275
      %p278 = scmp.ne.s32.totalorder %s263, %s277
      %p279 = scmp.eq.s32.totalorder %s49, 0
      %p280 = por %p278, %p279
      %s282 = sadd.s32 %s281, 1
      %p285 = scmp.eq.s32.totalorder %s43, 1
      %p286 = scmp.ne.s32.totalorder %s281, %s283
      %p287 = scmp.eq.s32.totalorder %s43, 0
      %p288 = por %p286, %p287
      %p289 = scmp.ne.s32.totalorder %s281, %s283
      %p290 = scmp.eq.s32.totalorder %s48, 1
      %p291 = por %p289, %p290
      %p292 = scmp.ne.s32.totalorder %s283, %s284
      %p293 = scmp.eq.s32.totalorder %s48, 0
      %p294 = por %p292, %p293
      %p295 = scmp.ne.s32.totalorder %s283, %s284
      %p296 = scmp.eq.s32.totalorder %s49, 1
      %p297 = por %p295, %p296
      %p299 = scmp.ne.s32.totalorder %s284, %s298
      %p300 = scmp.eq.s32.totalorder %s49, 0
      %p301 = por %p299, %p300
      %s303 = sadd.s32 %s302, 1
      %p306 = scmp.eq.s32.totalorder %s43, 1
      %p307 = scmp.ne.s32.totalorder %s302, %s304
      %p308 = scmp.eq.s32.totalorder %s43, 0
      %p309 = por %p307, %p308
      %p310 = scmp.ne.s32.totalorder %s302, %s304
      %p311 = scmp.eq.s32.totalorder %s48, 1
      %p312 = por %p310, %p311
      %p313 = scmp.ne.s32.totalorder %s304, %s305
      %p314 = scmp.eq.s32.totalorder %s48, 0
      %p315 = por %p313, %p314
      %p316 = scmp.ne.s32.totalorder %s304, %s305
      %p317 = scmp.eq.s32.totalorder %s49, 1
      %p318 = por %p316, %p317
      %p320 = scmp.ne.s32.totalorder %s305, %s319
      %p321 = scmp.eq.s32.totalorder %s49, 0
      %p322 = por %p320, %p321
      %s324 = sadd.s32 %s323, 1
      %p327 = scmp.eq.s32.totalorder %s43, 1
      %p328 = scmp.ne.s32.totalorder %s323, %s325
      %p329 = scmp.eq.s32.totalorder %s43, 0
      %p330 = por %p328, %p329
      %p331 = scmp.ne.s32.totalorder %s323, %s325
      %p332 = scmp.eq.s32.totalorder %s48, 1
      %p333 = por %p331, %p332
      %p334 = scmp.ne.s32.totalorder %s325, %s326
      %p335 = scmp.eq.s32.totalorder %s48, 0
      %p336 = por %p334, %p335
      %p337 = scmp.ne.s32.totalorder %s325, %s326
      %p338 = scmp.eq.s32.totalorder %s49, 1
      %p339 = por %p337, %p338
      %p341 = scmp.ne.s32.totalorder %s326, %s340
      %p342 = scmp.eq.s32.totalorder %s49, 0
      %p343 = por %p341, %p342
      %s345 = sadd.s32 %s344, 1
      %p348 = scmp.eq.s32.totalorder %s43, 1
      %p349 = scmp.ne.s32.totalorder %s344, %s346
      %p350 = scmp.eq.s32.totalorder %s43, 0
      %p351 = por %p349, %p350
      %p352 = scmp.ne.s32.totalorder %s344, %s346
      %p353 = scmp.eq.s32.totalorder %s48, 1
      %p354 = por %p352, %p353
      %p355 = scmp.ne.s32.totalorder %s346, %s347
      %p356 = scmp.eq.s32.totalorder %s48, 0
      %p357 = por %p355, %p356
      %p358 = scmp.ne.s32.totalorder %s346, %s347
      %p359 = scmp.eq.s32.totalorder %s49, 1
      %p360 = por %p358, %p359
      %p362 = scmp.ne.s32.totalorder %s347, %s361
      %p363 = scmp.eq.s32.totalorder %s49, 0
      %p364 = por %p362, %p363
      %s366 = sadd.s32 %s365, 1
      %p369 = scmp.eq.s32.totalorder %s43, 1
      %p370 = scmp.ne.s32.totalorder %s365, %s367
      %p371 = scmp.eq.s32.totalorder %s43, 0
      %p372 = por %p370, %p371
      %p373 = scmp.ne.s32.totalorder %s365, %s367
      %p374 = scmp.eq.s32.totalorder %s48, 1
      %p375 = por %p373, %p374
      %p376 = scmp.ne.s32.totalorder %s367, %s368
      %p377 = scmp.eq.s32.totalorder %s48, 0
      %p378 = por %p376, %p377
      %p379 = scmp.ne.s32.totalorder %s367, %s368
      %p380 = scmp.eq.s32.totalorder %s49, 1
      %p381 = por %p379, %p380
      %p383 = scmp.ne.s32.totalorder %s368, %s382
      %p384 = scmp.eq.s32.totalorder %s49, 0
      %p385 = por %p383, %p384
      %s387 = sadd.s32 %s386, 1
      %p390 = scmp.eq.s32.totalorder %s43, 1
      %p391 = scmp.ne.s32.totalorder %s386, %s388
      %p392 = scmp.eq.s32.totalorder %s43, 0
      %p393 = por %p391, %p392
      %p394 = scmp.ne.s32.totalorder %s386, %s388
      %p395 = scmp.eq.s32.totalorder %s48, 1
      %p396 = por %p394, %p395
      %p397 = scmp.ne.s32.totalorder %s388, %s389
      %p398 = scmp.eq.s32.totalorder %s48, 0
      %p399 = por %p397, %p398
      %p400 = scmp.ne.s32.totalorder %s388, %s389
      %p401 = scmp.eq.s32.totalorder %s49, 1
      %p402 = por %p400, %p401
      %p404 = scmp.ne.s32.totalorder %s389, %s403
      %p405 = scmp.eq.s32.totalorder %s49, 0
      %p406 = por %p404, %p405
      %s408 = sadd.s32 %s407, 1
      %p411 = scmp.eq.s32.totalorder %s43, 1
      %p412 = scmp.ne.s32.totalorder %s407, %s409
      %p413 = scmp.eq.s32.totalorder %s43, 0
      %p414 = por %p412, %p413
      %p415 = scmp.ne.s32.totalorder %s407, %s409
      %p416 = scmp.eq.s32.totalorder %s48, 1
      %p417 = por %p415, %p416
      %p418 = scmp.ne.s32.totalorder %s409, %s410
      %p419 = scmp.eq.s32.totalorder %s48, 0
      %p420 = por %p418, %p419
      %p421 = scmp.ne.s32.totalorder %s409, %s410
      %p422 = scmp.eq.s32.totalorder %s49, 1
      %p423 = por %p421, %p422
      %p425 = scmp.ne.s32.totalorder %s410, %s424
      %p426 = scmp.eq.s32.totalorder %s49, 0
      %p427 = por %p425, %p426
      %s429 = sadd.s32 %s428, 1
      %p432 = scmp.eq.s32.totalorder %s43, 1
      %p433 = scmp.ne.s32.totalorder %s428, %s430
      %p434 = scmp.eq.s32.totalorder %s43, 0
      %p435 = por %p433, %p434
      %p436 = scmp.ne.s32.totalorder %s428, %s430
      %p437 = scmp.eq.s32.totalorder %s48, 1
      %p438 = por %p436, %p437
      %p439 = scmp.ne.s32.totalorder %s430, %s431
      %p440 = scmp.eq.s32.totalorder %s48, 0
      %p441 = por %p439, %p440
      %p442 = scmp.ne.s32.totalorder %s430, %s431
      %p443 = scmp.eq.s32.totalorder %s49, 1
      %p444 = por %p442, %p443
      %p446 = scmp.ne.s32.totalorder %s431, %s445
      %p447 = scmp.eq.s32.totalorder %s49, 0
      %p448 = por %p446, %p447
      %s450 = sadd.s32 %s449, 1
      %p453 = scmp.eq.s32.totalorder %s43, 1
      %p454 = scmp.ne.s32.totalorder %s449, %s451
      %p455 = scmp.eq.s32.totalorder %s43, 0
      %p456 = por %p454, %p455
      %p457 = scmp.ne.s32.totalorder %s449, %s451
      %p458 = scmp.eq.s32.totalorder %s48, 1
      %p459 = por %p457, %p458
      %p460 = scmp.ne.s32.totalorder %s451, %s452
      %p461 = scmp.eq.s32.totalorder %s48, 0
      %p462 = por %p460, %p461
      %p463 = scmp.ne.s32.totalorder %s451, %s452
      %p464 = scmp.eq.s32.totalorder %s49, 1
      %p465 = por %p463, %p464
      %p467 = scmp.ne.s32.totalorder %s452, %s466
      %p468 = scmp.eq.s32.totalorder %s49, 0
      %p469 = por %p467, %p468
      %s471 = sadd.s32 %s470, 1
      %p474 = scmp.eq.s32.totalorder %s43, 1
      %p475 = scmp.ne.s32.totalorder %s470, %s472
      %p476 = scmp.eq.s32.totalorder %s43, 0
      %p477 = por %p475, %p476
      %p478 = scmp.ne.s32.totalorder %s470, %s472
      %p479 = scmp.eq.s32.totalorder %s48, 1
      %p480 = por %p478, %p479
      %p481 = scmp.ne.s32.totalorder %s472, %s473
      %p482 = scmp.eq.s32.totalorder %s48, 0
      %p483 = por %p481, %p482
      %p484 = scmp.ne.s32.totalorder %s472, %s473
      %p485 = scmp.eq.s32.totalorder %s49, 1
      %p486 = por %p484, %p485
      %p488 = scmp.ne.s32.totalorder %s473, %s487
      %p489 = scmp.eq.s32.totalorder %s49, 0
      %p490 = por %p488, %p489
      %s491 = ssub.s32 %s43, %s50
      %p492 = scmp.eq.s32.totalorder %s491, 0
      %s494 = sadd.s32 %s493, 1
      %s495 = scalar_select %p492, %s493, %s494
      %p498 = pneg %p492
      %p499 = scmp.eq.s32.totalorder %s43, 1
      %p500 = por %p498, %p499
      %p501 = scmp.ne.s32.totalorder %s493, %s496
      %p502 = scmp.eq.s32.totalorder %s43, 0
      %p503 = por %p501, %p502
      %p504 = scmp.ne.s32.totalorder %s493, %s496
      %p505 = scmp.eq.s32.totalorder %s48, 1
      %p506 = por %p504, %p505
      %p507 = scmp.ne.s32.totalorder %s496, %s497
      %p508 = scmp.eq.s32.totalorder %s48, 0
      %p509 = por %p507, %p508
      %p510 = scmp.ne.s32.totalorder %s496, %s497
      %p511 = scmp.eq.s32.totalorder %s49, 1
      %p512 = por %p510, %p511
      %p514 = scmp.ne.s32.totalorder %s497, %s513
      %p515 = scmp.eq.s32.totalorder %s49, 0
      %p516 = por %p514, %p515
      %s517 = ssub.s32 %s43, %s50
      %p518 = scmp.eq.s32.totalorder %s517, 0
      %s520 = sadd.s32 %s519, 1
      %s521 = scalar_select %p518, %s519, %s520
      %p524 = pneg %p518
      %p525 = scmp.eq.s32.totalorder %s43, 1
      %p526 = por %p524, %p525
      %p527 = scmp.ne.s32.totalorder %s519, %s522
      %p528 = scmp.eq.s32.totalorder %s43, 0
      %p529 = por %p527, %p528
      %p530 = scmp.ne.s32.totalorder %s519, %s522
      %p531 = scmp.eq.s32.totalorder %s48, 1
      %p532 = por %p530, %p531
      %p533 = scmp.ne.s32.totalorder %s522, %s523
      %p534 = scmp.eq.s32.totalorder %s48, 0
      %p535 = por %p533, %p534
      %p536 = scmp.ne.s32.totalorder %s522, %s523
      %p537 = scmp.eq.s32.totalorder %s49, 1
      %p538 = por %p536, %p537
      %p540 = scmp.ne.s32.totalorder %s523, %s539
      %p541 = scmp.eq.s32.totalorder %s49, 0
      %p542 = por %p540, %p541
      %p543 = scmp.le.s32.totalorder 1, %s43
      %p544 = scmp.lt.s32.totalorder %s43, 3
      %p545 = pnand %p543, %p544
      %p546 = pneg %p545
      // Predicated region
      $region9: #{tpu_custom_call.1} parent=5 // pred_check
        _
      $region10: #{tpu_custom_call.1} parent=5 // pred_check_branch
        %548 = sbr.rel (%p545) target = $region12
      $region11: #{tpu_custom_call.1} parent=5 // pred_region
        %s549 = ssub.s32 %s43, 1
        // Predicated region
        $region13: #{tpu_custom_call.1} parent=11 // pred_check
          %p550 = pneg %p168
        $region14: #{tpu_custom_call.1} parent=11 // pred_check_branch
          %552 = sbr.rel (%p550) target = $region16
        $region15: #{tpu_custom_call.1} parent=11 // pred_region
          _
        $region16: #{tpu_custom_call.1} parent=11 // pred_fallthru
          _
        // Predicated region
        $region17: #{tpu_custom_call.1} parent=11 // pred_check
          %p553 = pneg %p189
        $region18: #{tpu_custom_call.1} parent=11 // pred_check_branch
          %555 = sbr.rel (%p553) target = $region20
        $region19: #{tpu_custom_call.1} parent=11 // pred_region
          %s557 = ssub.s32 16, 16
          %558 = vsyncadd [#allocation9], %s557
          %s560 = sshll.u32 [#allocation8], 4
          %s561 = int_to_ptr.vmem [resolvable:$true] %s560
          %563 = dma.hbm_to_vmem [thread:$0]  %s5, 16, %s561, [#allocation9]
        $region20: #{tpu_custom_call.1} parent=11 // pred_fallthru
          _
        // Predicated region
        $region21: #{tpu_custom_call.1} parent=11 // pred_check
          %p564 = pneg %p210
        $region22: #{tpu_custom_call.1} parent=11 // pred_check_branch
          %566 = sbr.rel (%p564) target = $region24
        $region23: #{tpu_custom_call.1} parent=11 // pred_region
          _
        $region24: #{tpu_custom_call.1} parent=11 // pred_fallthru
          _
        // Predicated region
        $region25: #{tpu_custom_call.1} parent=11 // pred_check
          %p567 = pneg %p231
        $region26: #{tpu_custom_call.1} parent=11 // pred_check_branch
          %569 = sbr.rel (%p567) target = $region28
        $region27: #{tpu_custom_call.1} parent=11 // pred_region
          %s571 = ssub.s32 16, 16
          %572 = vsyncadd [#allocation9], %s571
          %s574 = sshll.u32 [#allocation10], 4
          %s575 = int_to_ptr.vmem [resolvable:$true] %s574
          %577 = dma.hbm_to_vmem [thread:$0]  %s7, 16, %s575, [#allocation9]
        $region28: #{tpu_custom_call.1} parent=11 // pred_fallthru
          _
        // Predicated region
        $region29: #{tpu_custom_call.1} parent=11 // pred_check
          %p578 = pneg %p252
        $region30: #{tpu_custom_call.1} parent=11 // pred_check_branch
          %580 = sbr.rel (%p578) target = $region32
        $region31: #{tpu_custom_call.1} parent=11 // pred_region
          _
        $region32: #{tpu_custom_call.1} parent=11 // pred_fallthru
          _
        // Predicated region
        $region33: #{tpu_custom_call.1} parent=11 // pred_check
          %p581 = pneg %p273
        $region34: #{tpu_custom_call.1} parent=11 // pred_check_branch
          %583 = sbr.rel (%p581) target = $region36
        $region35: #{tpu_custom_call.1} parent=11 // pred_region
          %s585 = ssub.s32 16, 16
          %586 = vsyncadd [#allocation12], %s585
          %s588 = sshll.u32 [#allocation11], 4
          %s589 = int_to_ptr.vmem [resolvable:$true] %s588
          %591 = dma.hbm_to_vmem [thread:$0]  %s9, 16, %s589, [#allocation12]
        $region36: #{tpu_custom_call.1} parent=11 // pred_fallthru
          _
        // Predicated region
        $region37: #{tpu_custom_call.1} parent=11 // pred_check
          %p592 = pneg %p294
        $region38: #{tpu_custom_call.1} parent=11 // pred_check_branch
          %594 = sbr.rel (%p592) target = $region40
        $region39: #{tpu_custom_call.1} parent=11 // pred_region
          %s596 = ssub.s32 512, 512
          %597 = vsyncadd [#allocation12], %s596
          %s598 = sshll.u32 [#allocation13], 4
          %s599 = int_to_ptr.vmem [resolvable:$true] %s598
          %604 = dma.hbm_to_vmem [thread:$0]  %s10, 512, %s599, [#allocation12], 64, 64, 4
        $region40: #{tpu_custom_call.1} parent=11 // pred_fallthru
          _
        // Predicated region
        $region41: #{tpu_custom_call.1} parent=11 // pred_check
          %p605 = pneg %p315
        $region42: #{tpu_custom_call.1} parent=11 // pred_check_branch
          %607 = sbr.rel (%p605) target = $region44
        $region43: #{tpu_custom_call.1} parent=11 // pred_region
          %s609 = ssub.s32 16, 16
          %610 = vsyncadd [#allocation15], %s609
          %s612 = sshll.u32 [#allocation14], 4
          %s613 = int_to_ptr.vmem [resolvable:$true] %s612
          %615 = dma.hbm_to_vmem [thread:$0]  %s11, 16, %s613, [#allocation15]
        $region44: #{tpu_custom_call.1} parent=11 // pred_fallthru
          _
        // Predicated region
        $region45: #{tpu_custom_call.1} parent=11 // pred_check
          %p616 = pneg %p336
        $region46: #{tpu_custom_call.1} parent=11 // pred_check_branch
          %618 = sbr.rel (%p616) target = $region48
        $region47: #{tpu_custom_call.1} parent=11 // pred_region
          _
        $region48: #{tpu_custom_call.1} parent=11 // pred_fallthru
          _
        // Predicated region
        $region49: #{tpu_custom_call.1} parent=11 // pred_check
          %p619 = pneg %p357
        $region50: #{tpu_custom_call.1} parent=11 // pred_check_branch
          %621 = sbr.rel (%p619) target = $region52
        $region51: #{tpu_custom_call.1} parent=11 // pred_region
          _
        $region52: #{tpu_custom_call.1} parent=11 // pred_fallthru
          _
        // Predicated region
        $region53: #{tpu_custom_call.1} parent=11 // pred_check
          %p622 = pneg %p378
        $region54: #{tpu_custom_call.1} parent=11 // pred_check_branch
          %624 = sbr.rel (%p622) target = $region56
        $region55: #{tpu_custom_call.1} parent=11 // pred_region
          _
        $region56: #{tpu_custom_call.1} parent=11 // pred_fallthru
          _
        // Predicated region
        $region57: #{tpu_custom_call.1} parent=11 // pred_check
          %p625 = pneg %p399
        $region58: #{tpu_custom_call.1} parent=11 // pred_check_branch
          %627 = sbr.rel (%p625) target = $region60
        $region59: #{tpu_custom_call.1} parent=11 // pred_region
          _
        $region60: #{tpu_custom_call.1} parent=11 // pred_fallthru
          _
        // Predicated region
        $region61: #{tpu_custom_call.1} parent=11 // pred_check
          %p628 = pneg %p420
        $region62: #{tpu_custom_call.1} parent=11 // pred_check_branch
          %630 = sbr.rel (%p628) target = $region64
        $region63: #{tpu_custom_call.1} parent=11 // pred_region
          _
        $region64: #{tpu_custom_call.1} parent=11 // pred_fallthru
          _
        // Predicated region
        $region65: #{tpu_custom_call.1} parent=11 // pred_check
          %p631 = pneg %p441
        $region66: #{tpu_custom_call.1} parent=11 // pred_check_branch
          %633 = sbr.rel (%p631) target = $region68
        $region67: #{tpu_custom_call.1} parent=11 // pred_region
          _
        $region68: #{tpu_custom_call.1} parent=11 // pred_fallthru
          _
        // Predicated region
        $region69: #{tpu_custom_call.1} parent=11 // pred_check
          %p634 = pneg %p462
        $region70: #{tpu_custom_call.1} parent=11 // pred_check_branch
          %636 = sbr.rel (%p634) target = $region72
        $region71: #{tpu_custom_call.1} parent=11 // pred_region
          _
        $region72: #{tpu_custom_call.1} parent=11 // pred_fallthru
          _
        // Predicated region
        $region73: #{tpu_custom_call.1} parent=11 // pred_check
          %p637 = pneg %p483
        $region74: #{tpu_custom_call.1} parent=11 // pred_check_branch
          %639 = sbr.rel (%p637) target = $region76
        $region75: #{tpu_custom_call.1} parent=11 // pred_region
          _
        $region76: #{tpu_custom_call.1} parent=11 // pred_fallthru
          _
      $region12: #{tpu_custom_call.1} parent=5 // pred_fallthru
        _
      %p640 = scmp.lt.s32.totalorder %s43, 2
      // Predicated region
      $region77: #{tpu_custom_call.1} parent=5 // pred_check
        %p641 = pneg %p640
      $region78: #{tpu_custom_call.1} parent=5 // pred_check_branch
        %643 = sbr.rel (%p641) target = $region80
      $region79: #{tpu_custom_call.1} parent=5 // pred_region
        // Predicated region
        $region81: #{tpu_custom_call.1} parent=79 // pred_check
          %p644 = pneg %p63
        $region82: #{tpu_custom_call.1} parent=79 // pred_check_branch
          %646 = sbr.rel (%p644) target = $region84
        $region83: #{tpu_custom_call.1} parent=79 // pred_region
          %s647 = sand.u32 %s53, 1
          %s648 = scalar_lea.sflag [#allocation3], %s647
          %s649 = sand.u32 %s53, 1
          %s650 = smul.addr %s649, 32
          %s651 = scalar_lea.vmem [#allocation2], %s650
          %s653 = ssub.s32 512, 512
          %654 = vsyncadd %s648, %s653
          %s655 = smul.addr %s43, 8
          %s656 = smul.addr %s655, 64
          %s657 = scalar_lea.hbm %s0, %s656
          %s658 = sshll.u32 %s651, 4
          %s659 = int_to_ptr.vmem [resolvable:$true] %s658
          %664 = dma.hbm_to_vmem [thread:$0]  %s657, 512, %s659, %s648, 256, 256, 16
        $region84: #{tpu_custom_call.1} parent=79 // pred_fallthru
          _
        // Predicated region
        $region85: #{tpu_custom_call.1} parent=79 // pred_check
          %p665 = pneg %p89
        $region86: #{tpu_custom_call.1} parent=79 // pred_check_branch
          %667 = sbr.rel (%p665) target = $region88
        $region87: #{tpu_custom_call.1} parent=79 // pred_region
          %s668 = sand.u32 %s43, 1
          %s669 = scalar_lea.sflag [#allocation6], %s668
          %s670 = sand.u32 %s79, 1
          %s671 = smul.addr %s670, 32
          %s672 = scalar_lea.vmem [#allocation5], %s671
          %s674 = ssub.s32 512, 512
          %675 = vsyncadd %s669, %s674
          %s676 = smul.addr %s43, 8
          %s677 = smul.addr %s676, 64
          %s678 = scalar_lea.hbm %s1, %s677
          %s679 = sshll.u32 %s672, 4
          %s680 = int_to_ptr.vmem [resolvable:$true] %s679
          %685 = dma.hbm_to_vmem [thread:$0]  %s678, 512, %s680, %s669, 128, 128, 8
        $region88: #{tpu_custom_call.1} parent=79 // pred_fallthru
          _
        // Predicated region
        $region89: #{tpu_custom_call.1} parent=79 // pred_check
          %p686 = pneg %p115
        $region90: #{tpu_custom_call.1} parent=79 // pred_check_branch
          %688 = sbr.rel (%p686) target = $region92
        $region91: #{tpu_custom_call.1} parent=79 // pred_region
          %s689 = sand.u32 %s43, 1
          %s690 = scalar_lea.sflag [#allocation6], %s689
          %s691 = sand.u32 %s105, 1
          %s692 = smul.addr %s691, 32
          %s693 = scalar_lea.vmem [#allocation7], %s692
          %s695 = ssub.s32 512, 512
          %696 = vsyncadd %s690, %s695
          %s697 = smul.addr %s43, 8
          %s698 = smul.addr %s697, 64
          %s699 = scalar_lea.hbm %s2, %s698
          %s700 = sshll.u32 %s693, 4
          %s701 = int_to_ptr.vmem [resolvable:$true] %s700
          %706 = dma.hbm_to_vmem [thread:$0]  %s699, 512, %s701, %s690, 64, 64, 4
        $region92: #{tpu_custom_call.1} parent=79 // pred_fallthru
          _
        // Predicated region
        $region93: #{tpu_custom_call.1} parent=79 // pred_check
          %p707 = pneg %p141
        $region94: #{tpu_custom_call.1} parent=79 // pred_check_branch
          %709 = sbr.rel (%p707) target = $region96
        $region95: #{tpu_custom_call.1} parent=79 // pred_region
          %p710 = scmp.lt.s32.totalorder %s43, 1
          %s711 = scalar_select %p710, %s43, 1
          %s712 = smul.addr %s711, 32
          %s713 = smul.addr %s712, 4
          %s714 = scalar_lea.vmem %s3, %s713
        $region96: #{tpu_custom_call.1} parent=79 // pred_fallthru
          _
      $region80: #{tpu_custom_call.1} parent=5 // pred_fallthru
        _
      %p715 = scmp.le.s32.totalorder 1, %s43
      %p716 = scmp.lt.s32.totalorder %s43, 3
      %p717 = pnand %p715, %p716
      %p718 = pneg %p717
      // Predicated region
      $region97: #{tpu_custom_call.1} parent=5 // pred_check
        _
      $region98: #{tpu_custom_call.1} parent=5 // pred_check_branch
        %720 = sbr.rel (%p717) target = $region100
      $region99: #{tpu_custom_call.1} parent=5 // pred_region
        %s721 = ssub.s32 %s43, 1
        %s722 = sand.u32 %s56, 1
        %s723 = scalar_lea.sflag [#allocation3], %s722
        %s724 = sand.u32 %s56, 1
        %s725 = smul.addr %s724, 32
        %s726 = scalar_lea.vmem [#allocation2], %s725
        // Predicated region
        $region101: #{tpu_custom_call.1} parent=99 // pred_check
          %p727 = pneg %p69
        $region102: #{tpu_custom_call.1} parent=99 // pred_check_branch
          %729 = sbr.rel (%p727) target = $region104
        $region103: #{tpu_custom_call.1} parent=99 // pred_region
          %730 = dma.done %s723, 512
        $region104: #{tpu_custom_call.1} parent=99 // pred_fallthru
          _
        %s731 = sand.u32 %s48, 1
        %s732 = scalar_lea.sflag [#allocation6], %s731
        %s733 = sand.u32 %s82, 1
        %s734 = smul.addr %s733, 32
        %s735 = scalar_lea.vmem [#allocation5], %s734
        // Predicated region
        $region105: #{tpu_custom_call.1} parent=99 // pred_check
          %p736 = pneg %p95
        $region106: #{tpu_custom_call.1} parent=99 // pred_check_branch
          %738 = sbr.rel (%p736) target = $region108
        $region107: #{tpu_custom_call.1} parent=99 // pred_region
          %739 = dma.done %s732, 512
        $region108: #{tpu_custom_call.1} parent=99 // pred_fallthru
          _
        %s740 = sand.u32 %s48, 1
        %s741 = scalar_lea.sflag [#allocation6], %s740
        %s742 = sand.u32 %s108, 1
        %s743 = smul.addr %s742, 32
        %s744 = scalar_lea.vmem [#allocation7], %s743
        // Predicated region
        $region109: #{tpu_custom_call.1} parent=99 // pred_check
          %p745 = pneg %p121
        $region110: #{tpu_custom_call.1} parent=99 // pred_check_branch
          %747 = sbr.rel (%p745) target = $region112
        $region111: #{tpu_custom_call.1} parent=99 // pred_region
          %748 = dma.done %s741, 512
        $region112: #{tpu_custom_call.1} parent=99 // pred_fallthru
          _
        // Predicated region
        $region113: #{tpu_custom_call.1} parent=99 // pred_check
          %p749 = pneg %p189
        $region114: #{tpu_custom_call.1} parent=99 // pred_check_branch
          %751 = sbr.rel (%p749) target = $region116
        $region115: #{tpu_custom_call.1} parent=99 // pred_region
          %752 = dma.done [#allocation9], 16
        $region116: #{tpu_custom_call.1} parent=99 // pred_fallthru
          _
        // Predicated region
        $region117: #{tpu_custom_call.1} parent=99 // pred_check
          %p753 = pneg %p231
        $region118: #{tpu_custom_call.1} parent=99 // pred_check_branch
          %755 = sbr.rel (%p753) target = $region120
        $region119: #{tpu_custom_call.1} parent=99 // pred_region
          %756 = dma.done [#allocation9], 16
        $region120: #{tpu_custom_call.1} parent=99 // pred_fallthru
          _
        // Predicated region
        $region121: #{tpu_custom_call.1} parent=99 // pred_check
          %p757 = pneg %p273
        $region122: #{tpu_custom_call.1} parent=99 // pred_check_branch
          %759 = sbr.rel (%p757) target = $region124
        $region123: #{tpu_custom_call.1} parent=99 // pred_region
          %760 = dma.done [#allocation12], 16
        $region124: #{tpu_custom_call.1} parent=99 // pred_fallthru
          _
        // Predicated region
        $region125: #{tpu_custom_call.1} parent=99 // pred_check
          %p761 = pneg %p294
        $region126: #{tpu_custom_call.1} parent=99 // pred_check_branch
          %763 = sbr.rel (%p761) target = $region128
        $region127: #{tpu_custom_call.1} parent=99 // pred_region
          %764 = dma.done [#allocation12], 512
        $region128: #{tpu_custom_call.1} parent=99 // pred_fallthru
          _
        // Predicated region
        $region129: #{tpu_custom_call.1} parent=99 // pred_check
          %p765 = pneg %p315
        $region130: #{tpu_custom_call.1} parent=99 // pred_check_branch
          %767 = sbr.rel (%p765) target = $region132
        $region131: #{tpu_custom_call.1} parent=99 // pred_region
          %768 = dma.done [#allocation15], 16
        $region132: #{tpu_custom_call.1} parent=99 // pred_fallthru
          _
        %s769 = sand.u32 %s56, 1
        %s770 = scalar_lea.sflag [#allocation3], %s769
        %s771 = sand.u32 %s56, 1
        %s772 = smul.addr %s771, 32
        %s773 = scalar_lea.vmem [#allocation2], %s772
        %p774 = pneg %p69
        %p775 = pneg %p66
        %s776 = sand.u32 %s48, 1
        %s777 = scalar_lea.sflag [#allocation6], %s776
        %s778 = sand.u32 %s82, 1
        %s779 = smul.addr %s778, 32
        %s780 = scalar_lea.vmem [#allocation5], %s779
        %p781 = pneg %p95
        %p782 = pneg %p92
        %s783 = sand.u32 %s48, 1
        %s784 = scalar_lea.sflag [#allocation6], %s783
        %s785 = sand.u32 %s108, 1
        %s786 = smul.addr %s785, 32
        %s787 = scalar_lea.vmem [#allocation7], %s786
        %p788 = pneg %p121
        %p789 = pneg %p118
        %p790 = scmp.lt.s32.totalorder %s48, 1
        %s791 = scalar_select %p790, %s48, 1
        %s792 = smul.addr %s791, 32
        %s793 = smul.addr %s792, 4
        %s794 = scalar_lea.vmem %s3, %s793
        %p795 = pneg %p147
        %p796 = pneg %p144
        %p797 = pneg %p168
        %p798 = pneg %p165
        %p799 = pneg %p189
        %p800 = pneg %p186
        %p801 = pneg %p210
        %p802 = pneg %p207
        %p803 = pneg %p231
        %p804 = pneg %p228
        %p805 = pneg %p252
        %p806 = pneg %p249
        %p807 = pneg %p273
        %p808 = pneg %p270
        %p809 = pneg %p294
        %p810 = pneg %p291
        %p811 = pneg %p315
        %p812 = pneg %p312
        %p813 = pneg %p336
        %p814 = pneg %p333
        %p815 = pneg %p357
        %p816 = pneg %p354
        %p817 = pneg %p378
        %p818 = pneg %p375
        %p819 = pneg %p399
        %p820 = pneg %p396
        %p821 = pneg %p420
        %p822 = pneg %p417
        %p823 = pneg %p441
        %p824 = pneg %p438
        %p825 = pneg %p462
        %p826 = pneg %p459
        %p827 = pneg %p483
        %p828 = pneg %p480
        %p829 = pneg %p509
        %p830 = pneg %p506
        %s831 = sand.u32 %s496, 1
        %s832 = scalar_lea.sflag [#allocation4], %s831
        %s833 = sand.u32 %s496, 1
        %s834 = smul.addr %s833, 128
        %s835 = scalar_lea.vmem [#allocation16], %s834
        %p836 = pneg %p535
        %p837 = pneg %p532
        %s838 = sand.u32 %s522, 1
        %s839 = scalar_lea.sflag [#allocation18], %s838
        %s840 = sand.u32 %s522, 1
        %s841 = smul.addr %s840, 16
        %s842 = scalar_lea.vmem [#allocation17], %s841
        %p843 = scmp.lt.s32.totalorder %s48, 1
        %s844 = scalar_select %p843, %s48, 1
        %s845 = smul.addr %s844, 32
        %s846 = smul.addr %s845, 4
        %s847 = scalar_lea.vmem %s3, %s846
        %v849 = vld [vmem:[%s726] sm:$0xff]
        %v850 = vld [vmem:[%s726 + $0x8] sm:$0xff]
        %v851 = vld [vmem:[%s726 + $0x10] sm:$0xff]
        %v852 = vld [vmem:[%s726 + $0x18] sm:$0xff]
        %v853 = vld [vmem:[%s4] sm:$0xf]
        %v854 = vld [vmem:[%s4 + $0x4] sm:$0xf]
        %v855 = vld [vmem:[%s4 + $0x8] sm:$0xf]
        %v856 = vld [vmem:[%s4 + $0xc] sm:$0xf]
        %v857 = vld [vmem:[%s4 + $0x10] sm:$0xf]
        %v858 = vld [vmem:[%s4 + $0x14] sm:$0xf]
        %v859 = vld [vmem:[%s4 + $0x18] sm:$0xf]
        %v860 = vld [vmem:[%s4 + $0x1c] sm:$0xf]
        %v861 = vld [vmem:[%s4 + $0x20] sm:$0xf]
        %v862 = vld [vmem:[%s4 + $0x24] sm:$0xf]
        %v863 = vld [vmem:[%s4 + $0x28] sm:$0xf]
        %v864 = vld [vmem:[%s4 + $0x2c] sm:$0xf]
        %v865 = vld [vmem:[%s4 + $0x30] sm:$0xf]
        %v866 = vld [vmem:[%s4 + $0x34] sm:$0xf]
        %v867 = vld [vmem:[%s4 + $0x38] sm:$0xf]
        %v868 = vld [vmem:[%s4 + $0x3c] sm:$0xf]
        %v869 = vld [vmem:[%s4 + $0x40] sm:$0xf]
        %v870 = vld [vmem:[%s4 + $0x44] sm:$0xf]
        %v871 = vld [vmem:[%s4 + $0x48] sm:$0xf]
        %v872 = vld [vmem:[%s4 + $0x4c] sm:$0xf]
        %v873 = vld [vmem:[%s4 + $0x50] sm:$0xf]
        %v874 = vld [vmem:[%s4 + $0x54] sm:$0xf]
        %v875 = vld [vmem:[%s4 + $0x58] sm:$0xf]
        %v876 = vld [vmem:[%s4 + $0x5c] sm:$0xf]
        %v877 = vld [vmem:[%s4 + $0x60] sm:$0xf]
        %v878 = vld [vmem:[%s4 + $0x64] sm:$0xf]
        %v879 = vld [vmem:[%s4 + $0x68] sm:$0xf]
        %v880 = vld [vmem:[%s4 + $0x6c] sm:$0xf]
        %v881 = vld [vmem:[%s4 + $0x70] sm:$0xf]
        %v882 = vld [vmem:[%s4 + $0x74] sm:$0xf]
        %v883 = vld [vmem:[%s4 + $0x78] sm:$0xf]
        %v884 = vld [vmem:[%s4 + $0x7c] sm:$0xf]
        %v885 = vld [vmem:[%s4 + $0x80] sm:$0xf]
        %v886 = vld [vmem:[%s4 + $0x84] sm:$0xf]
        %v887 = vld [vmem:[%s4 + $0x88] sm:$0xf]
        %v888 = vld [vmem:[%s4 + $0x8c] sm:$0xf]
        %v889 = vld [vmem:[%s4 + $0x90] sm:$0xf]
        %v890 = vld [vmem:[%s4 + $0x94] sm:$0xf]
        %v891 = vld [vmem:[%s4 + $0x98] sm:$0xf]
        %v892 = vld [vmem:[%s4 + $0x9c] sm:$0xf]
        %v893 = vld [vmem:[%s4 + $0xa0] sm:$0xf]
        %v894 = vld [vmem:[%s4 + $0xa4] sm:$0xf]
        %v895 = vld [vmem:[%s4 + $0xa8] sm:$0xf]
        %v896 = vld [vmem:[%s4 + $0xac] sm:$0xf]
        %v897 = vld [vmem:[%s4 + $0xb0] sm:$0xf]
        %v898 = vld [vmem:[%s4 + $0xb4] sm:$0xf]
        %v899 = vld [vmem:[%s4 + $0xb8] sm:$0xf]
        %v900 = vld [vmem:[%s4 + $0xbc] sm:$0xf]
        %v901 = vld [vmem:[%s4 + $0xc0] sm:$0xf]
        %v902 = vld [vmem:[%s4 + $0xc4] sm:$0xf]
        %v903 = vld [vmem:[%s4 + $0xc8] sm:$0xf]
        %v904 = vld [vmem:[%s4 + $0xcc] sm:$0xf]
        %v905 = vld [vmem:[%s4 + $0xd0] sm:$0xf]
        %v906 = vld [vmem:[%s4 + $0xd4] sm:$0xf]
        %v907 = vld [vmem:[%s4 + $0xd8] sm:$0xf]
        %v908 = vld [vmem:[%s4 + $0xdc] sm:$0xf]
        %v909 = vld [vmem:[%s4 + $0xe0] sm:$0xf]
        %v910 = vld [vmem:[%s4 + $0xe4] sm:$0xf]
        %v911 = vld [vmem:[%s4 + $0xe8] sm:$0xf]
        %v912 = vld [vmem:[%s4 + $0xec] sm:$0xf]
        %v913 = vld [vmem:[%s4 + $0xf0] sm:$0xf]
        %v914 = vld [vmem:[%s4 + $0xf4] sm:$0xf]
        %v915 = vld [vmem:[%s4 + $0xf8] sm:$0xf]
        %v916 = vld [vmem:[%s4 + $0xfc] sm:$0xf]
        %v917 = vld [vmem:[#allocation8] sm:$0x1]
        %v919 = vlaneseq
        %v920 = vshrl.u32 %v919, 7
        %v921 = vsub.s32 0, %v920
        %v922 = vrot.slane %v917, %v921
        %v928 = vunpack.c.l.b16 %v849
        %v929 = vunpack.c.h.b16 %v849
        %v930 = vunpack.c.l.b16 %v850
        %v931 = vunpack.c.h.b16 %v850
        %v932 = vunpack.c.l.b16 %v851
        %v933 = vunpack.c.h.b16 %v851
        %v934 = vunpack.c.l.b16 %v852
        %v935 = vunpack.c.h.b16 %v852
        %v936 = vpack.c.b16 %v932, %v928
        %v937 = vpack.c.b16 %v933, %v929
        %v938 = vpack.c.b16 %v934, %v930
        %v939 = vpack.c.b16 %v935, %v931
        %v1008 = vunpack.c.l.b16 %v853
        %v1009 = vunpack.c.l.b16 %v854
        %v1010 = vunpack.c.l.b16 %v855
        %v1011 = vunpack.c.l.b16 %v856
        %v1012 = vunpack.c.l.b16 %v857
        %v1013 = vunpack.c.l.b16 %v858
        %v1014 = vunpack.c.l.b16 %v859
        %v1015 = vunpack.c.l.b16 %v860
        %v1016 = vunpack.c.l.b16 %v861
        %v1017 = vunpack.c.l.b16 %v862
        %v1018 = vunpack.c.l.b16 %v863
        %v1019 = vunpack.c.l.b16 %v864
        %v1020 = vunpack.c.l.b16 %v865
        %v1021 = vunpack.c.l.b16 %v866
        %v1022 = vunpack.c.l.b16 %v867
        %v1023 = vunpack.c.l.b16 %v868
        %v1024 = vunpack.c.l.b16 %v869
        %v1025 = vunpack.c.l.b16 %v870
        %v1026 = vunpack.c.l.b16 %v871
        %v1027 = vunpack.c.l.b16 %v872
        %v1028 = vunpack.c.l.b16 %v873
        %v1029 = vunpack.c.l.b16 %v874
        %v1030 = vunpack.c.l.b16 %v875
        %v1031 = vunpack.c.l.b16 %v876
        %v1032 = vunpack.c.l.b16 %v877
        %v1033 = vunpack.c.l.b16 %v878
        %v1034 = vunpack.c.l.b16 %v879
        %v1035 = vunpack.c.l.b16 %v880
        %v1036 = vunpack.c.l.b16 %v881
        %v1037 = vunpack.c.l.b16 %v882
        %v1038 = vunpack.c.l.b16 %v883
        %v1039 = vunpack.c.l.b16 %v884
        %v1040 = vunpack.c.l.b16 %v885
        %v1041 = vunpack.c.l.b16 %v886
        %v1042 = vunpack.c.l.b16 %v887
        %v1043 = vunpack.c.l.b16 %v888
        %v1044 = vunpack.c.l.b16 %v889
        %v1045 = vunpack.c.l.b16 %v890
        %v1046 = vunpack.c.l.b16 %v891
        %v1047 = vunpack.c.l.b16 %v892
        %v1048 = vunpack.c.l.b16 %v893
        %v1049 = vunpack.c.l.b16 %v894
        %v1050 = vunpack.c.l.b16 %v895
        %v1051 = vunpack.c.l.b16 %v896
        %v1052 = vunpack.c.l.b16 %v897
        %v1053 = vunpack.c.l.b16 %v898
        %v1054 = vunpack.c.l.b16 %v899
        %v1055 = vunpack.c.l.b16 %v900
        %v1056 = vunpack.c.l.b16 %v901
        %v1057 = vunpack.c.l.b16 %v902
        %v1058 = vunpack.c.l.b16 %v903
        %v1059 = vunpack.c.l.b16 %v904
        %v1060 = vunpack.c.l.b16 %v905
        %v1061 = vunpack.c.l.b16 %v906
        %v1062 = vunpack.c.l.b16 %v907
        %v1063 = vunpack.c.l.b16 %v908
        %v1064 = vunpack.c.l.b16 %v909
        %v1065 = vunpack.c.l.b16 %v910
        %v1066 = vunpack.c.l.b16 %v911
        %v1067 = vunpack.c.l.b16 %v912
        %v1068 = vunpack.c.l.b16 %v913
        %v1069 = vunpack.c.l.b16 %v914
        %v1070 = vunpack.c.l.b16 %v915
        %v1071 = vunpack.c.l.b16 %v916
        %v1072 = vpack.c.b16 %v1009, %v1008
        %v1073 = vpack.c.b16 %v1011, %v1010
        %v1074 = vpack.c.b16 %v1013, %v1012
        %v1075 = vpack.c.b16 %v1015, %v1014
        %v1076 = vpack.c.b16 %v1017, %v1016
        %v1077 = vpack.c.b16 %v1019, %v1018
        %v1078 = vpack.c.b16 %v1021, %v1020
        %v1079 = vpack.c.b16 %v1023, %v1022
        %v1080 = vpack.c.b16 %v1025, %v1024
        %v1081 = vpack.c.b16 %v1027, %v1026
        %v1082 = vpack.c.b16 %v1029, %v1028
        %v1083 = vpack.c.b16 %v1031, %v1030
        %v1084 = vpack.c.b16 %v1033, %v1032
        %v1085 = vpack.c.b16 %v1035, %v1034
        %v1086 = vpack.c.b16 %v1037, %v1036
        %v1087 = vpack.c.b16 %v1039, %v1038
        %v1088 = vpack.c.b16 %v1041, %v1040
        %v1089 = vpack.c.b16 %v1043, %v1042
        %v1090 = vpack.c.b16 %v1045, %v1044
        %v1091 = vpack.c.b16 %v1047, %v1046
        %v1092 = vpack.c.b16 %v1049, %v1048
        %v1093 = vpack.c.b16 %v1051, %v1050
        %v1094 = vpack.c.b16 %v1053, %v1052
        %v1095 = vpack.c.b16 %v1055, %v1054
        %v1096 = vpack.c.b16 %v1057, %v1056
        %v1097 = vpack.c.b16 %v1059, %v1058
        %v1098 = vpack.c.b16 %v1061, %v1060
        %v1099 = vpack.c.b16 %v1063, %v1062
        %v1100 = vpack.c.b16 %v1065, %v1064
        %v1101 = vpack.c.b16 %v1067, %v1066
        %v1102 = vpack.c.b16 %v1069, %v1068
        %v1103 = vpack.c.b16 %v1071, %v1070
        %1136 = vmatprep.subr.bf16.mxu0 0
        %1137 = vmatpush1.bf16.msra.mxu0 %v1072
        %1138 = vmatprep.subr.bf16.mxu0 0
        %1139 = vmatpush1.bf16.msra.mxu0 %v1073
        %1140 = vmatprep.subr.bf16.mxu0 0
        %1141 = vmatpush1.bf16.msra.mxu0 %v1074
        %1142 = vmatprep.subr.bf16.mxu0 0
        %1143 = vmatpush1.bf16.msra.mxu0 %v1075
        %1144 = vmatprep.subr.bf16.mxu0 0
        %1145 = vmatpush1.bf16.msra.mxu0 %v1076
        %1146 = vmatprep.subr.bf16.mxu0 0
        %1147 = vmatpush1.bf16.msra.mxu0 %v1077
        %1148 = vmatprep.subr.bf16.mxu0 0
        %1149 = vmatpush1.bf16.msra.mxu0 %v1078
        %1150 = vmatprep.subr.bf16.mxu0 0
        %1151 = vmatpush1.bf16.msra.mxu0 %v1079
        %1152 = vmatprep.subr.bf16.mxu0 0
        %1153 = vmatpush1.bf16.msra.mxu0 %v1080
        %1154 = vmatprep.subr.bf16.mxu0 0
        %1155 = vmatpush1.bf16.msra.mxu0 %v1081
        %1156 = vmatprep.subr.bf16.mxu0 0
        %1157 = vmatpush1.bf16.msra.mxu0 %v1082
        %1158 = vmatprep.subr.bf16.mxu0 0
        %1159 = vmatpush1.bf16.msra.mxu0 %v1083
        %1160 = vmatprep.subr.bf16.mxu0 0
        %1161 = vmatpush1.bf16.msra.mxu0 %v1084
        %1162 = vmatprep.subr.bf16.mxu0 0
        %1163 = vmatpush1.bf16.msra.mxu0 %v1085
        %1164 = vmatprep.subr.bf16.mxu0 0
        %1165 = vmatpush1.bf16.msra.mxu0 %v1086
        %1166 = vmatprep.subr.bf16.mxu0 0
        %1167 = vmatpush1.bf16.msra.mxu0 %v1087
        %1168 = vmatprep.mubr.bf16.mxu0 %v937
        %1169 = vmatmul.mubr.bf16.gmra.mrb[0].mxu0 %v936
        %v1170 = vpop.f32.mrb[0].mxu0
        %v1171 = vadd.f32 %v922, %v1170
        %v1172 = vpop.f32.mrb[0].mxu0
        %v1173 = vpop.f32.mrb[0].mxu0
        %v1174 = vadd.f32 %v922, %v1173
        %v1175 = vpop.f32.mrb[0].mxu0
        %1176 = vdwg.mxu0
        %1177 = vmatprep.subr.bf16.mxu0 0
        %1178 = vmatpush1.bf16.msra.mxu0 %v1088
        %1179 = vmatprep.subr.bf16.mxu0 0
        %1180 = vmatpush1.bf16.msra.mxu0 %v1089
        %1181 = vmatprep.subr.bf16.mxu0 0
        %1182 = vmatpush1.bf16.msra.mxu0 %v1090
        %1183 = vmatprep.subr.bf16.mxu0 0
        %1184 = vmatpush1.bf16.msra.mxu0 %v1091
        %1185 = vmatprep.subr.bf16.mxu0 0
        %1186 = vmatpush1.bf16.msra.mxu0 %v1092
        %1187 = vmatprep.subr.bf16.mxu0 0
        %1188 = vmatpush1.bf16.msra.mxu0 %v1093
        %1189 = vmatprep.subr.bf16.mxu0 0
        %1190 = vmatpush1.bf16.msra.mxu0 %v1094
        %1191 = vmatprep.subr.bf16.mxu0 0
        %1192 = vmatpush1.bf16.msra.mxu0 %v1095
        %1193 = vmatprep.subr.bf16.mxu0 0
        %1194 = vmatpush1.bf16.msra.mxu0 %v1096
        %1195 = vmatprep.subr.bf16.mxu0 0
        %1196 = vmatpush1.bf16.msra.mxu0 %v1097
        %1197 = vmatprep.subr.bf16.mxu0 0
        %1198 = vmatpush1.bf16.msra.mxu0 %v1098
        %1199 = vmatprep.subr.bf16.mxu0 0
        %1200 = vmatpush1.bf16.msra.mxu0 %v1099
        %1201 = vmatprep.subr.bf16.mxu0 0
        %1202 = vmatpush1.bf16.msra.mxu0 %v1100
        %1203 = vmatprep.subr.bf16.mxu0 0
        %1204 = vmatpush1.bf16.msra.mxu0 %v1101
        %1205 = vmatprep.subr.bf16.mxu0 0
        %1206 = vmatpush1.bf16.msra.mxu0 %v1102
        %1207 = vmatprep.subr.bf16.mxu0 0
        %1208 = vmatpush1.bf16.msra.mxu0 %v1103
        %1209 = vmatprep.mubr.bf16.mxu0 %v939
        %1210 = vmatmul.mubr.bf16.gmra.mrb[0].mxu0 %v938
        %v1211 = vpop.f32.mrb[0].mxu0
        %v1212 = vadd.f32 %v1171, %v1211
        %v1213 = vpop.f32.mrb[0].mxu0
        %v1214 = vpop.f32.mrb[0].mxu0
        %v1215 = vadd.f32 %v1174, %v1214
        %v1216 = vpop.f32.mrb[0].mxu0
        %1217 = vdwg.mxu0
        %v1218 = vpack.c.bf16 %v1215, %v1212
        %v1220 = vunpack.i.l.s16 %v1218
        %v1221 = vunpack.i.h.s16 %v1218
        %v1222 = vpack.c.b16 %v1221, %v1220
        %v1223 = vunpack.i.l.s16 %v1222
        %v1224 = vunpack.i.h.s16 %v1222
        %v1225 = vpack.c.b16 %v1224, %v1223
        %v1226 = vunpack.i.l.s16 %v1225
        %v1227 = vunpack.i.h.s16 %v1225
        %v1228 = vpack.c.b16 %v1227, %v1226
        %v1229 = vld [vmem:[%s14] sm:$0x3]
        %v1230 = vcombine.high %v1228, %v1228
        %v1232 = vunpack.c.l.s4 1966171168
        %v1233 = vunpack.c.0.s8 %v1232
        %v1234 = vlaneseq
        %v1235 = vshrl.u32 %v1234, 7
        %v1236 = vsub.s32 %v1233, %v1235
        %v1237 = vrot.slane %v1228, %v1236
        %v1239 = vunpack.c.l.s4 1966171168
        %v1240 = vunpack.c.0.s8 %v1239
        %v1241 = vlaneseq
        %v1242 = vshrl.u32 %v1241, 7
        %v1243 = vsub.s32 %v1240, %v1242
        %v1244 = vrot.slane %v1230, %v1243
        %v1245 = vcombine.high %v1237, %v1237
        %v1246 = vcombine.high %v1244, %v1244
        %v1248 = vunpack.c.l.s4 1966171168
        %v1249 = vunpack.c.0.s8 %v1248
        %v1250 = vlaneseq
        %v1251 = vshrl.u32 %v1250, 7
        %v1252 = vsub.s32 %v1249, %v1251
        %v1253 = vrot.slane %v1237, %v1252
        %v1255 = vunpack.c.l.s4 1966171168
        %v1256 = vunpack.c.0.s8 %v1255
        %v1257 = vlaneseq
        %v1258 = vshrl.u32 %v1257, 7
        %v1259 = vsub.s32 %v1256, %v1258
        %v1260 = vrot.slane %v1244, %v1259
        %v1262 = vunpack.c.l.s4 1966171168
        %v1263 = vunpack.c.0.s8 %v1262
        %v1264 = vlaneseq
        %v1265 = vshrl.u32 %v1264, 7
        %v1266 = vsub.s32 %v1263, %v1265
        %v1267 = vrot.slane %v1245, %v1266
        %v1269 = vunpack.c.l.s4 1966171168
        %v1270 = vunpack.c.0.s8 %v1269
        %v1271 = vlaneseq
        %v1272 = vshrl.u32 %v1271, 7
        %v1273 = vsub.s32 %v1270, %v1272
        %v1274 = vrot.slane %v1246, %v1273
        %v1275 = vcombine.high %v1253, %v1253
        %v1276 = vcombine.high %v1260, %v1260
        %v1277 = vcombine.high %v1267, %v1267
        %v1278 = vcombine.high %v1274, %v1274
        %vm1279 = vcmask 15360
        %v1281 = vsel %vm1279, %v1229, 0
        %vm1283 = vcmask 1040384
        %v1285 = vsel %vm1283, %v1253, 0
        %v1288 = vsel %vm1283, %v1267, 0
        %v1291 = vsel %vm1283, %v1275, 0
        %v1294 = vsel %vm1283, %v1277, 0
        %v1297 = vsel %vm1283, %v1260, 0
        %v1300 = vsel %vm1283, %v1274, 0
        %v1303 = vsel %vm1283, %v1276, 0
        %v1306 = vsel %vm1283, %v1278, 0
        %1308 = vmatprep.subr.bf16.mxu0 %v1288
        %1309 = vmatpush1.bf16.msra.mxu0 %v1285
        %1310 = vmatprep.subr.bf16.mxu0 0
        %1311 = vmatpush1.bf16.msra.mxu0 0
        %1312 = vmatprep.subr.bf16.mxu0 0
        %1313 = vmatpush1.bf16.msra.mxu0 0
        %1314 = vmatprep.subr.bf16.mxu0 0
        %1315 = vmatpush1.bf16.msra.mxu0 0
        %1316 = vmatprep.subr.bf16.mxu0 0
        %1317 = vmatpush1.bf16.msra.mxu0 0
        %1318 = vmatprep.subr.bf16.mxu0 0
        %1319 = vmatpush1.bf16.msra.mxu0 0
        %1320 = vmatprep.subr.bf16.mxu0 0
        %1321 = vmatpush1.bf16.msra.mxu0 0
        %1322 = vmatprep.subr.bf16.mxu0 0
        %1323 = vmatpush1.bf16.msra.mxu0 0
        %1324 = vmatprep.subr.bf16.mxu0 0
        %1325 = vmatpush1.bf16.msra.mxu0 0
        %1326 = vmatprep.subr.bf16.mxu0 0
        %1327 = vmatpush1.bf16.msra.mxu0 0
        %1328 = vmatprep.subr.bf16.mxu0 0
        %1329 = vmatpush1.bf16.msra.mxu0 0
        %1330 = vmatprep.subr.bf16.mxu0 0
        %1331 = vmatpush1.bf16.msra.mxu0 0
        %1332 = vmatprep.subr.bf16.mxu0 0
        %1333 = vmatpush1.bf16.msra.mxu0 0
        %1334 = vmatprep.subr.bf16.mxu0 0
        %1335 = vmatpush1.bf16.msra.mxu0 0
        %1336 = vmatprep.subr.bf16.mxu0 0
        %1337 = vmatpush1.bf16.msra.mxu0 0
        %1338 = vmatprep.subr.bf16.mxu0 0
        %1339 = vmatpush1.bf16.msra.mxu0 0
        %1340 = vmatprep.mubr.bf16.mxu0 0
        %1341 = vmatmul.mubr.bf16.gmra.mrb[0].mxu0 %v1281
        %v1342 = vpop.f32.mrb[0].mxu0
        %v1343 = vadd.f32 0.0, %v1342
        %v1344 = vpop.f32.mrb[0].mxu0
        %v1345 = vadd.f32 0.0, %v1344
        %v1346 = vpop.f32.mrb[0].mxu0
        %v1347 = vpop.f32.mrb[0].mxu0
        %1348 = vdwg.mxu0
        %1349 = vmatprep.subr.bf16.mxu0 %v1294
        %1350 = vmatpush1.bf16.msra.mxu0 %v1291
        %1351 = vmatprep.subr.bf16.mxu0 0
        %1352 = vmatpush1.bf16.msra.mxu0 0
        %1353 = vmatprep.subr.bf16.mxu0 0
        %1354 = vmatpush1.bf16.msra.mxu0 0
        %1355 = vmatprep.subr.bf16.mxu0 0
        %1356 = vmatpush1.bf16.msra.mxu0 0
        %1357 = vmatprep.subr.bf16.mxu0 0
        %1358 = vmatpush1.bf16.msra.mxu0 0
        %1359 = vmatprep.subr.bf16.mxu0 0
        %1360 = vmatpush1.bf16.msra.mxu0 0
        %1361 = vmatprep.subr.bf16.mxu0 0
        %1362 = vmatpush1.bf16.msra.mxu0 0
        %1363 = vmatprep.subr.bf16.mxu0 0
        %1364 = vmatpush1.bf16.msra.mxu0 0
        %1365 = vmatprep.subr.bf16.mxu0 0
        %1366 = vmatpush1.bf16.msra.mxu0 0
        %1367 = vmatprep.subr.bf16.mxu0 0
        %1368 = vmatpush1.bf16.msra.mxu0 0
        %1369 = vmatprep.subr.bf16.mxu0 0
        %1370 = vmatpush1.bf16.msra.mxu0 0
        %1371 = vmatprep.subr.bf16.mxu0 0
        %1372 = vmatpush1.bf16.msra.mxu0 0
        %1373 = vmatprep.subr.bf16.mxu0 0
        %1374 = vmatpush1.bf16.msra.mxu0 0
        %1375 = vmatprep.subr.bf16.mxu0 0
        %1376 = vmatpush1.bf16.msra.mxu0 0
        %1377 = vmatprep.subr.bf16.mxu0 0
        %1378 = vmatpush1.bf16.msra.mxu0 0
        %1379 = vmatprep.subr.bf16.mxu0 0
        %1380 = vmatpush1.bf16.msra.mxu0 0
        %1381 = vmatprep.mubr.bf16.mxu0 0
        %1382 = vmatmul.mubr.bf16.gmra.mrb[0].mxu0 %v1281
        %v1383 = vpop.f32.mrb[0].mxu0
        %v1384 = vadd.f32 0.0, %v1383
        %v1385 = vpop.f32.mrb[0].mxu0
        %v1386 = vadd.f32 0.0, %v1385
        %v1387 = vpop.f32.mrb[0].mxu0
        %v1388 = vpop.f32.mrb[0].mxu0
        %1389 = vdwg.mxu0
        %1390 = vmatprep.subr.bf16.mxu0 %v1300
        %1391 = vmatpush1.bf16.msra.mxu0 %v1297
        %1392 = vmatprep.subr.bf16.mxu0 0
        %1393 = vmatpush1.bf16.msra.mxu0 0
        %1394 = vmatprep.subr.bf16.mxu0 0
        %1395 = vmatpush1.bf16.msra.mxu0 0
        %1396 = vmatprep.subr.bf16.mxu0 0
        %1397 = vmatpush1.bf16.msra.mxu0 0
        %1398 = vmatprep.subr.bf16.mxu0 0
        %1399 = vmatpush1.bf16.msra.mxu0 0
        %1400 = vmatprep.subr.bf16.mxu0 0
        %1401 = vmatpush1.bf16.msra.mxu0 0
        %1402 = vmatprep.subr.bf16.mxu0 0
        %1403 = vmatpush1.bf16.msra.mxu0 0
        %1404 = vmatprep.subr.bf16.mxu0 0
        %1405 = vmatpush1.bf16.msra.mxu0 0
        %1406 = vmatprep.subr.bf16.mxu0 0
        %1407 = vmatpush1.bf16.msra.mxu0 0
        %1408 = vmatprep.subr.bf16.mxu0 0
        %1409 = vmatpush1.bf16.msra.mxu0 0
        %1410 = vmatprep.subr.bf16.mxu0 0
        %1411 = vmatpush1.bf16.msra.mxu0 0
        %1412 = vmatprep.subr.bf16.mxu0 0
        %1413 = vmatpush1.bf16.msra.mxu0 0
        %1414 = vmatprep.subr.bf16.mxu0 0
        %1415 = vmatpush1.bf16.msra.mxu0 0
        %1416 = vmatprep.subr.bf16.mxu0 0
        %1417 = vmatpush1.bf16.msra.mxu0 0
        %1418 = vmatprep.subr.bf16.mxu0 0
        %1419 = vmatpush1.bf16.msra.mxu0 0
        %1420 = vmatprep.subr.bf16.mxu0 0
        %1421 = vmatpush1.bf16.msra.mxu0 0
        %1422 = vmatprep.mubr.bf16.mxu0 0
        %1423 = vmatmul.mubr.bf16.gmra.mrb[0].mxu0 %v1281
        %v1424 = vpop.f32.mrb[0].mxu0
        %v1425 = vadd.f32 0.0, %v1424
        %v1426 = vpop.f32.mrb[0].mxu0
        %v1427 = vadd.f32 0.0, %v1426
        %v1428 = vpop.f32.mrb[0].mxu0
        %v1429 = vpop.f32.mrb[0].mxu0
        %1430 = vdwg.mxu0
        %1431 = vmatprep.subr.bf16.mxu0 %v1306
        %1432 = vmatpush1.bf16.msra.mxu0 %v1303
        %1433 = vmatprep.subr.bf16.mxu0 0
        %1434 = vmatpush1.bf16.msra.mxu0 0
        %1435 = vmatprep.subr.bf16.mxu0 0
        %1436 = vmatpush1.bf16.msra.mxu0 0
        %1437 = vmatprep.subr.bf16.mxu0 0
        %1438 = vmatpush1.bf16.msra.mxu0 0
        %1439 = vmatprep.subr.bf16.mxu0 0
        %1440 = vmatpush1.bf16.msra.mxu0 0
        %1441 = vmatprep.subr.bf16.mxu0 0
        %1442 = vmatpush1.bf16.msra.mxu0 0
        %1443 = vmatprep.subr.bf16.mxu0 0
        %1444 = vmatpush1.bf16.msra.mxu0 0
        %1445 = vmatprep.subr.bf16.mxu0 0
        %1446 = vmatpush1.bf16.msra.mxu0 0
        %1447 = vmatprep.subr.bf16.mxu0 0
        %1448 = vmatpush1.bf16.msra.mxu0 0
        %1449 = vmatprep.subr.bf16.mxu0 0
        %1450 = vmatpush1.bf16.msra.mxu0 0
        %1451 = vmatprep.subr.bf16.mxu0 0
        %1452 = vmatpush1.bf16.msra.mxu0 0
        %1453 = vmatprep.subr.bf16.mxu0 0
        %1454 = vmatpush1.bf16.msra.mxu0 0
        %1455 = vmatprep.subr.bf16.mxu0 0
        %1456 = vmatpush1.bf16.msra.mxu0 0
        %1457 = vmatprep.subr.bf16.mxu0 0
        %1458 = vmatpush1.bf16.msra.mxu0 0
        %1459 = vmatprep.subr.bf16.mxu0 0
        %1460 = vmatpush1.bf16.msra.mxu0 0
        %1461 = vmatprep.subr.bf16.mxu0 0
        %1462 = vmatpush1.bf16.msra.mxu0 0
        %1463 = vmatprep.mubr.bf16.mxu0 0
        %1464 = vmatmul.mubr.bf16.gmra.mrb[0].mxu0 %v1281
        %v1465 = vpop.f32.mrb[0].mxu0
        %v1466 = vadd.f32 0.0, %v1465
        %v1467 = vpop.f32.mrb[0].mxu0
        %v1468 = vadd.f32 0.0, %v1467
        %v1469 = vpop.f32.mrb[0].mxu0
        %v1470 = vpop.f32.mrb[0].mxu0
        %1471 = vdwg.mxu0
        %v1472 = vpack.c.bf16 %v1343, %v1343
        %v1473 = vpack.c.bf16 %v1345, %v1345
        %v1474 = vpack.c.bf16 %v1384, %v1384
        %v1475 = vpack.c.bf16 %v1386, %v1386
        %v1476 = vpack.c.bf16 %v1425, %v1425
        %v1477 = vpack.c.bf16 %v1427, %v1427
        %v1478 = vpack.c.bf16 %v1466, %v1466
        %v1479 = vpack.c.bf16 %v1468, %v1468
        %v1480 = vcombine.low %v1472, %v1476
        %v1482 = vunpack.c.l.s4 1983009808
        %v1483 = vunpack.c.0.s8 %v1482
        %v1484 = vlaneseq
        %v1485 = vshrl.u32 %v1484, 7
        %v1486 = vsub.s32 %v1483, %v1485
        %v1487 = vrot.slane %v1480, %v1486
        %v1488 = vcombine.low %v1474, %v1478
        %v1490 = vunpack.c.l.s4 1983009808
        %v1491 = vunpack.c.0.s8 %v1490
        %v1492 = vlaneseq
        %v1493 = vshrl.u32 %v1492, 7
        %v1494 = vsub.s32 %v1491, %v1493
        %v1495 = vrot.slane %v1488, %v1494
        %v1496 = vcombine.low %v1487, %v1495
        %v1498 = vunpack.c.l.s4 1934713408
        %v1499 = vunpack.c.0.s8 %v1498
        %v1500 = vlaneseq
        %v1501 = vshrl.u32 %v1500, 7
        %v1502 = vsub.s32 %v1499, %v1501
        %v1503 = vrot.slane %v1496, %v1502
        %v1504 = vcombine.high %v1503, 0
        %v1505 = vcombine.low %v1473, %v1477
        %v1507 = vunpack.c.l.s4 1983009808
        %v1508 = vunpack.c.0.s8 %v1507
        %v1509 = vlaneseq
        %v1510 = vshrl.u32 %v1509, 7
        %v1511 = vsub.s32 %v1508, %v1510
        %v1512 = vrot.slane %v1505, %v1511
        %v1513 = vcombine.low %v1475, %v1479
        %v1515 = vunpack.c.l.s4 1983009808
        %v1516 = vunpack.c.0.s8 %v1515
        %v1517 = vlaneseq
        %v1518 = vshrl.u32 %v1517, 7
        %v1519 = vsub.s32 %v1516, %v1518
        %v1520 = vrot.slane %v1513, %v1519
        %v1521 = vcombine.low %v1512, %v1520
        %v1523 = vunpack.c.l.s4 1934713408
        %v1524 = vunpack.c.0.s8 %v1523
        %v1525 = vlaneseq
        %v1526 = vshrl.u32 %v1525, 7
        %v1527 = vsub.s32 %v1524, %v1526
        %v1528 = vrot.slane %v1521, %v1527
        %v1529 = vcombine.high %v1528, 0
        %v1532 = vpack.i.b16 %v1528, %v1503
        %v1533 = vshrl.u32 %v1503, 16
        %v1534 = vshrl.u32 %v1528, 16
        %v1535 = vpack.i.b16 %v1534, %v1533
        %v1538 = vpack.i.b16 %v1529, %v1504
        %v1539 = vshrl.u32 %v1504, 16
        %v1540 = vshrl.u32 %v1529, 16
        %v1541 = vpack.i.b16 %v1540, %v1539
        %v1542 = vld [vmem:[%s15] sm:$0xf]
        %vm1543 = vcmask 64512
        %v1545 = vsel %vm1543, %v1542, 0
        %vm1547 = vcmask 1043456
        %v1549 = vsel %vm1547, %v1532, 0
        %1551 = vmatprep.subr.bf16.mxu0 0
        %1552 = vmatpush1.bf16.msra.mxu0 %v1549
        %1553 = vmatprep.subr.bf16.mxu0 0
        %1554 = vmatpush1.bf16.msra.mxu0 0
        %1555 = vmatprep.subr.bf16.mxu0 0
        %1556 = vmatpush1.bf16.msra.mxu0 0
        %1557 = vmatprep.subr.bf16.mxu0 0
        %1558 = vmatpush1.bf16.msra.mxu0 0
        %1559 = vmatprep.subr.bf16.mxu0 0
        %1560 = vmatpush1.bf16.msra.mxu0 0
        %1561 = vmatprep.subr.bf16.mxu0 0
        %1562 = vmatpush1.bf16.msra.mxu0 0
        %1563 = vmatprep.subr.bf16.mxu0 0
        %1564 = vmatpush1.bf16.msra.mxu0 0
        %1565 = vmatprep.subr.bf16.mxu0 0
        %1566 = vmatpush1.bf16.msra.mxu0 0
        %1567 = vmatprep.subr.bf16.mxu0 0
        %1568 = vmatpush1.bf16.msra.mxu0 0
        %1569 = vmatprep.subr.bf16.mxu0 0
        %1570 = vmatpush1.bf16.msra.mxu0 0
        %1571 = vmatprep.subr.bf16.mxu0 0
        %1572 = vmatpush1.bf16.msra.mxu0 0
        %1573 = vmatprep.subr.bf16.mxu0 0
        %1574 = vmatpush1.bf16.msra.mxu0 0
        %1575 = vmatprep.subr.bf16.mxu0 0
        %1576 = vmatpush1.bf16.msra.mxu0 0
        %1577 = vmatprep.subr.bf16.mxu0 0
        %1578 = vmatpush1.bf16.msra.mxu0 0
        %1579 = vmatprep.subr.bf16.mxu0 0
        %1580 = vmatpush1.bf16.msra.mxu0 0
        %1581 = vmatprep.subr.bf16.mxu0 0
        %1582 = vmatpush1.bf16.msra.mxu0 0
        %1583 = vmatprep.mubr.bf16.mxu0 0
        %1584 = vmatmul.mubr.bf16.gmra.mrb[0].mxu0 %v1545
        %v1585 = vpop.f32.mrb[0].mxu0
        %v1586 = vadd.f32 0.0, %v1585
        %v1587 = vpop.f32.mrb[0].mxu0
        %v1588 = vpop.f32.mrb[0].mxu0
        %v1589 = vpop.f32.mrb[0].mxu0
        %1590 = vdwg.mxu0
        %v1592 = vsel %vm1547, %v1535, 0
        %1594 = vmatprep.subr.bf16.mxu0 0
        %1595 = vmatpush1.bf16.msra.mxu0 %v1592
        %1596 = vmatprep.subr.bf16.mxu0 0
        %1597 = vmatpush1.bf16.msra.mxu0 0
        %1598 = vmatprep.subr.bf16.mxu0 0
        %1599 = vmatpush1.bf16.msra.mxu0 0
        %1600 = vmatprep.subr.bf16.mxu0 0
        %1601 = vmatpush1.bf16.msra.mxu0 0
        %1602 = vmatprep.subr.bf16.mxu0 0
        %1603 = vmatpush1.bf16.msra.mxu0 0
        %1604 = vmatprep.subr.bf16.mxu0 0
        %1605 = vmatpush1.bf16.msra.mxu0 0
        %1606 = vmatprep.subr.bf16.mxu0 0
        %1607 = vmatpush1.bf16.msra.mxu0 0
        %1608 = vmatprep.subr.bf16.mxu0 0
        %1609 = vmatpush1.bf16.msra.mxu0 0
        %1610 = vmatprep.subr.bf16.mxu0 0
        %1611 = vmatpush1.bf16.msra.mxu0 0
        %1612 = vmatprep.subr.bf16.mxu0 0
        %1613 = vmatpush1.bf16.msra.mxu0 0
        %1614 = vmatprep.subr.bf16.mxu0 0
        %1615 = vmatpush1.bf16.msra.mxu0 0
        %1616 = vmatprep.subr.bf16.mxu0 0
        %1617 = vmatpush1.bf16.msra.mxu0 0
        %1618 = vmatprep.subr.bf16.mxu0 0
        %1619 = vmatpush1.bf16.msra.mxu0 0
        %1620 = vmatprep.subr.bf16.mxu0 0
        %1621 = vmatpush1.bf16.msra.mxu0 0
        %1622 = vmatprep.subr.bf16.mxu0 0
        %1623 = vmatpush1.bf16.msra.mxu0 0
        %1624 = vmatprep.subr.bf16.mxu0 0
        %1625 = vmatpush1.bf16.msra.mxu0 0
        %1626 = vmatprep.mubr.bf16.mxu0 0
        %1627 = vmatmul.mubr.bf16.gmra.mrb[0].mxu0 %v1545
        %v1628 = vpop.f32.mrb[0].mxu0
        %v1629 = vadd.f32 0.0, %v1628
        %v1630 = vpop.f32.mrb[0].mxu0
        %v1631 = vpop.f32.mrb[0].mxu0
        %v1632 = vpop.f32.mrb[0].mxu0
        %1633 = vdwg.mxu0
        %v1635 = vsel %vm1547, %v1538, 0
        %1637 = vmatprep.subr.bf16.mxu0 0
        %1638 = vmatpush1.bf16.msra.mxu0 %v1635
        %1639 = vmatprep.subr.bf16.mxu0 0
        %1640 = vmatpush1.bf16.msra.mxu0 0
        %1641 = vmatprep.subr.bf16.mxu0 0
        %1642 = vmatpush1.bf16.msra.mxu0 0
        %1643 = vmatprep.subr.bf16.mxu0 0
        %1644 = vmatpush1.bf16.msra.mxu0 0
        %1645 = vmatprep.subr.bf16.mxu0 0
        %1646 = vmatpush1.bf16.msra.mxu0 0
        %1647 = vmatprep.subr.bf16.mxu0 0
        %1648 = vmatpush1.bf16.msra.mxu0 0
        %1649 = vmatprep.subr.bf16.mxu0 0
        %1650 = vmatpush1.bf16.msra.mxu0 0
        %1651 = vmatprep.subr.bf16.mxu0 0
        %1652 = vmatpush1.bf16.msra.mxu0 0
        %1653 = vmatprep.subr.bf16.mxu0 0
        %1654 = vmatpush1.bf16.msra.mxu0 0
        %1655 = vmatprep.subr.bf16.mxu0 0
        %1656 = vmatpush1.bf16.msra.mxu0 0
        %1657 = vmatprep.subr.bf16.mxu0 0
        %1658 = vmatpush1.bf16.msra.mxu0 0
        %1659 = vmatprep.subr.bf16.mxu0 0
        %1660 = vmatpush1.bf16.msra.mxu0 0
        %1661 = vmatprep.subr.bf16.mxu0 0
        %1662 = vmatpush1.bf16.msra.mxu0 0
        %1663 = vmatprep.subr.bf16.mxu0 0
        %1664 = vmatpush1.bf16.msra.mxu0 0
        %1665 = vmatprep.subr.bf16.mxu0 0
        %1666 = vmatpush1.bf16.msra.mxu0 0
        %1667 = vmatprep.subr.bf16.mxu0 0
        %1668 = vmatpush1.bf16.msra.mxu0 0
        %1669 = vmatprep.mubr.bf16.mxu0 0
        %1670 = vmatmul.mubr.bf16.gmra.mrb[0].mxu0 %v1545
        %v1671 = vpop.f32.mrb[0].mxu0
        %v1672 = vadd.f32 0.0, %v1671
        %v1673 = vpop.f32.mrb[0].mxu0
        %v1674 = vpop.f32.mrb[0].mxu0
        %v1675 = vpop.f32.mrb[0].mxu0
        %1676 = vdwg.mxu0
        %v1678 = vsel %vm1547, %v1541, 0
        %1680 = vmatprep.subr.bf16.mxu0 0
        %1681 = vmatpush1.bf16.msra.mxu0 %v1678
        %1682 = vmatprep.subr.bf16.mxu0 0
        %1683 = vmatpush1.bf16.msra.mxu0 0
        %1684 = vmatprep.subr.bf16.mxu0 0
        %1685 = vmatpush1.bf16.msra.mxu0 0
        %1686 = vmatprep.subr.bf16.mxu0 0
        %1687 = vmatpush1.bf16.msra.mxu0 0
        %1688 = vmatprep.subr.bf16.mxu0 0
        %1689 = vmatpush1.bf16.msra.mxu0 0
        %1690 = vmatprep.subr.bf16.mxu0 0
        %1691 = vmatpush1.bf16.msra.mxu0 0
        %1692 = vmatprep.subr.bf16.mxu0 0
        %1693 = vmatpush1.bf16.msra.mxu0 0
        %1694 = vmatprep.subr.bf16.mxu0 0
        %1695 = vmatpush1.bf16.msra.mxu0 0
        %1696 = vmatprep.subr.bf16.mxu0 0
        %1697 = vmatpush1.bf16.msra.mxu0 0
        %1698 = vmatprep.subr.bf16.mxu0 0
        %1699 = vmatpush1.bf16.msra.mxu0 0
        %1700 = vmatprep.subr.bf16.mxu0 0
        %1701 = vmatpush1.bf16.msra.mxu0 0
        %1702 = vmatprep.subr.bf16.mxu0 0
        %1703 = vmatpush1.bf16.msra.mxu0 0
        %1704 = vmatprep.subr.bf16.mxu0 0
        %1705 = vmatpush1.bf16.msra.mxu0 0
        %1706 = vmatprep.subr.bf16.mxu0 0
        %1707 = vmatpush1.bf16.msra.mxu0 0
        %1708 = vmatprep.subr.bf16.mxu0 0
        %1709 = vmatpush1.bf16.msra.mxu0 0
        %1710 = vmatprep.subr.bf16.mxu0 0
        %1711 = vmatpush1.bf16.msra.mxu0 0
        %1712 = vmatprep.mubr.bf16.mxu0 0
        %1713 = vmatmul.mubr.bf16.gmra.mrb[0].mxu0 %v1545
        %v1714 = vpop.f32.mrb[0].mxu0
        %v1715 = vadd.f32 0.0, %v1714
        %v1716 = vpop.f32.mrb[0].mxu0
        %v1717 = vpop.f32.mrb[0].mxu0
        %v1718 = vpop.f32.mrb[0].mxu0
        %1719 = vdwg.mxu0
        %v1720 = vld [vmem:[%s735] sm:$0xff]
        %v1721 = vld [vmem:[%s735 + $0x8] sm:$0xff]
        %v1722 = vld [vmem:[%s735 + $0x10] sm:$0xff]
        %v1723 = vld [vmem:[%s735 + $0x18] sm:$0xff]
        %v1724 = vld [vmem:[%s6] sm:$0xf]
        %v1725 = vld [vmem:[%s6 + $0x4] sm:$0xf]
        %v1726 = vld [vmem:[%s6 + $0x8] sm:$0xf]
        %v1727 = vld [vmem:[%s6 + $0xc] sm:$0xf]
        %v1728 = vld [vmem:[%s6 + $0x10] sm:$0xf]
        %v1729 = vld [vmem:[%s6 + $0x14] sm:$0xf]
        %v1730 = vld [vmem:[%s6 + $0x18] sm:$0xf]
        %v1731 = vld [vmem:[%s6 + $0x1c] sm:$0xf]
        %v1732 = vld [vmem:[%s6 + $0x20] sm:$0xf]
        %v1733 = vld [vmem:[%s6 + $0x24] sm:$0xf]
        %v1734 = vld [vmem:[%s6 + $0x28] sm:$0xf]
        %v1735 = vld [vmem:[%s6 + $0x2c] sm:$0xf]
        %v1736 = vld [vmem:[%s6 + $0x30] sm:$0xf]
        %v1737 = vld [vmem:[%s6 + $0x34] sm:$0xf]
        %v1738 = vld [vmem:[%s6 + $0x38] sm:$0xf]
        %v1739 = vld [vmem:[%s6 + $0x3c] sm:$0xf]
        %v1740 = vld [vmem:[%s6 + $0x40] sm:$0xf]
        %v1741 = vld [vmem:[%s6 + $0x44] sm:$0xf]
        %v1742 = vld [vmem:[%s6 + $0x48] sm:$0xf]
        %v1743 = vld [vmem:[%s6 + $0x4c] sm:$0xf]
        %v1744 = vld [vmem:[%s6 + $0x50] sm:$0xf]
        %v1745 = vld [vmem:[%s6 + $0x54] sm:$0xf]
        %v1746 = vld [vmem:[%s6 + $0x58] sm:$0xf]
        %v1747 = vld [vmem:[%s6 + $0x5c] sm:$0xf]
        %v1748 = vld [vmem:[%s6 + $0x60] sm:$0xf]
        %v1749 = vld [vmem:[%s6 + $0x64] sm:$0xf]
        %v1750 = vld [vmem:[%s6 + $0x68] sm:$0xf]
        %v1751 = vld [vmem:[%s6 + $0x6c] sm:$0xf]
        %v1752 = vld [vmem:[%s6 + $0x70] sm:$0xf]
        %v1753 = vld [vmem:[%s6 + $0x74] sm:$0xf]
        %v1754 = vld [vmem:[%s6 + $0x78] sm:$0xf]
        %v1755 = vld [vmem:[%s6 + $0x7c] sm:$0xf]
        %v1756 = vld [vmem:[#allocation10] sm:$0x1]
        %v1758 = vlaneseq
        %v1759 = vshrl.u32 %v1758, 7
        %v1760 = vsub.s32 0, %v1759
        %v1761 = vrot.slane %v1756, %v1760
        %v1767 = vunpack.c.l.b16 %v1720
        %v1768 = vunpack.c.h.b16 %v1720
        %v1769 = vunpack.c.l.b16 %v1721
        %v1770 = vunpack.c.h.b16 %v1721
        %v1771 = vunpack.c.l.b16 %v1722
        %v1772 = vunpack.c.h.b16 %v1722
        %v1773 = vunpack.c.l.b16 %v1723
        %v1774 = vunpack.c.h.b16 %v1723
        %v1775 = vpack.c.b16 %v1769, %v1767
        %v1776 = vpack.c.b16 %v1770, %v1768
        %v1777 = vpack.c.b16 %v1773, %v1771
        %v1778 = vpack.c.b16 %v1774, %v1772
        %v1815 = vunpack.c.l.b16 %v1724
        %v1816 = vunpack.c.l.b16 %v1725
        %v1817 = vunpack.c.l.b16 %v1726
        %v1818 = vunpack.c.l.b16 %v1727
        %v1819 = vunpack.c.l.b16 %v1728
        %v1820 = vunpack.c.l.b16 %v1729
        %v1821 = vunpack.c.l.b16 %v1730
        %v1822 = vunpack.c.l.b16 %v1731
        %v1823 = vunpack.c.l.b16 %v1732
        %v1824 = vunpack.c.l.b16 %v1733
        %v1825 = vunpack.c.l.b16 %v1734
        %v1826 = vunpack.c.l.b16 %v1735
        %v1827 = vunpack.c.l.b16 %v1736
        %v1828 = vunpack.c.l.b16 %v1737
        %v1829 = vunpack.c.l.b16 %v1738
        %v1830 = vunpack.c.l.b16 %v1739
        %v1831 = vunpack.c.l.b16 %v1740
        %v1832 = vunpack.c.l.b16 %v1741
        %v1833 = vunpack.c.l.b16 %v1742
        %v1834 = vunpack.c.l.b16 %v1743
        %v1835 = vunpack.c.l.b16 %v1744
        %v1836 = vunpack.c.l.b16 %v1745
        %v1837 = vunpack.c.l.b16 %v1746
        %v1838 = vunpack.c.l.b16 %v1747
        %v1839 = vunpack.c.l.b16 %v1748
        %v1840 = vunpack.c.l.b16 %v1749
        %v1841 = vunpack.c.l.b16 %v1750
        %v1842 = vunpack.c.l.b16 %v1751
        %v1843 = vunpack.c.l.b16 %v1752
        %v1844 = vunpack.c.l.b16 %v1753
        %v1845 = vunpack.c.l.b16 %v1754
        %v1846 = vunpack.c.l.b16 %v1755
        %v1847 = vpack.c.b16 %v1816, %v1815
        %v1848 = vpack.c.b16 %v1818, %v1817
        %v1849 = vpack.c.b16 %v1820, %v1819
        %v1850 = vpack.c.b16 %v1822, %v1821
        %v1851 = vpack.c.b16 %v1824, %v1823
        %v1852 = vpack.c.b16 %v1826, %v1825
        %v1853 = vpack.c.b16 %v1828, %v1827
        %v1854 = vpack.c.b16 %v1830, %v1829
        %v1855 = vpack.c.b16 %v1832, %v1831
        %v1856 = vpack.c.b16 %v1834, %v1833
        %v1857 = vpack.c.b16 %v1836, %v1835
        %v1858 = vpack.c.b16 %v1838, %v1837
        %v1859 = vpack.c.b16 %v1840, %v1839
        %v1860 = vpack.c.b16 %v1842, %v1841
        %v1861 = vpack.c.b16 %v1844, %v1843
        %v1862 = vpack.c.b16 %v1846, %v1845
        %1879 = vmatprep.subr.bf16.mxu0 0
        %1880 = vmatpush1.bf16.msra.mxu0 %v1847
        %1881 = vmatprep.subr.bf16.mxu0 0
        %1882 = vmatpush1.bf16.msra.mxu0 %v1848
        %1883 = vmatprep.subr.bf16.mxu0 0
        %1884 = vmatpush1.bf16.msra.mxu0 %v1849
        %1885 = vmatprep.subr.bf16.mxu0 0
        %1886 = vmatpush1.bf16.msra.mxu0 %v1850
        %1887 = vmatprep.subr.bf16.mxu0 0
        %1888 = vmatpush1.bf16.msra.mxu0 %v1851
        %1889 = vmatprep.subr.bf16.mxu0 0
        %1890 = vmatpush1.bf16.msra.mxu0 %v1852
        %1891 = vmatprep.subr.bf16.mxu0 0
        %1892 = vmatpush1.bf16.msra.mxu0 %v1853
        %1893 = vmatprep.subr.bf16.mxu0 0
        %1894 = vmatpush1.bf16.msra.mxu0 %v1854
        %1895 = vmatprep.subr.bf16.mxu0 0
        %1896 = vmatpush1.bf16.msra.mxu0 %v1855
        %1897 = vmatprep.subr.bf16.mxu0 0
        %1898 = vmatpush1.bf16.msra.mxu0 %v1856
        %1899 = vmatprep.subr.bf16.mxu0 0
        %1900 = vmatpush1.bf16.msra.mxu0 %v1857
        %1901 = vmatprep.subr.bf16.mxu0 0
        %1902 = vmatpush1.bf16.msra.mxu0 %v1858
        %1903 = vmatprep.subr.bf16.mxu0 0
        %1904 = vmatpush1.bf16.msra.mxu0 %v1859
        %1905 = vmatprep.subr.bf16.mxu0 0
        %1906 = vmatpush1.bf16.msra.mxu0 %v1860
        %1907 = vmatprep.subr.bf16.mxu0 0
        %1908 = vmatpush1.bf16.msra.mxu0 %v1861
        %1909 = vmatprep.subr.bf16.mxu0 0
        %1910 = vmatpush1.bf16.msra.mxu0 %v1862
        %1911 = vmatprep.mubr.bf16.mxu0 %v1776
        %1912 = vmatmul.mubr.bf16.gmra.mrb[0].mxu0 %v1775
        %v1913 = vpop.f32.mrb[0].mxu0
        %v1914 = vadd.f32 %v1761, %v1913
        %v1915 = vpop.f32.mrb[0].mxu0
        %v1916 = vpop.f32.mrb[0].mxu0
        %v1917 = vadd.f32 %v1761, %v1916
        %v1918 = vpop.f32.mrb[0].mxu0
        %1919 = vmatprep.mubr.bf16.mxu0 %v1778
        %1920 = vmatmul.mubr.bf16.gmra.mrb[0].mxu0 %v1777
        %v1921 = vpop.f32.mrb[0].mxu0
        %v1922 = vadd.f32 %v1761, %v1921
        %v1923 = vpop.f32.mrb[0].mxu0
        %v1924 = vpop.f32.mrb[0].mxu0
        %v1925 = vadd.f32 %v1761, %v1924
        %v1926 = vpop.f32.mrb[0].mxu0
        %1927 = vdwg.mxu0
        %v1928 = vadd.f32 %v1586, %v1914
        %v1929 = vadd.f32 %v1629, %v1917
        %v1930 = vadd.f32 %v1672, %v1922
        %v1931 = vadd.f32 %v1715, %v1925
        %v1932 = vpack.c.bf16 %v1929, %v1928
        %v1933 = vpack.c.bf16 %v1931, %v1930
        %v1935 = vunpack.i.l.s16 %v1932
        %v1936 = vunpack.i.h.s16 %v1932
        %v1937 = vpack.c.b16 %v1936, %v1935
        %v1938 = vunpack.i.l.s16 %v1937
        %v1939 = vunpack.i.h.s16 %v1937
        %v1940 = vpack.c.b16 %v1939, %v1938
        %v1941 = vunpack.i.l.s16 %v1940
        %v1942 = vunpack.i.h.s16 %v1940
        %v1943 = vpack.c.b16 %v1942, %v1941
        %v1945 = vunpack.i.l.s16 %v1933
        %v1946 = vunpack.i.h.s16 %v1933
        %v1947 = vpack.c.b16 %v1946, %v1945
        %v1948 = vunpack.i.l.s16 %v1947
        %v1949 = vunpack.i.h.s16 %v1947
        %v1950 = vpack.c.b16 %v1949, %v1948
        %v1951 = vunpack.i.l.s16 %v1950
        %v1952 = vunpack.i.h.s16 %v1950
        %v1953 = vpack.c.b16 %v1952, %v1951
        %v1954 = vld [vmem:[%s16] sm:$0xf]
        %v1955 = vcombine.low %v1943, %v1953
        %v1956 = vcombine.high %v1943, %v1953
        %v1958 = vunpack.c.l.s4 1966171168
        %v1959 = vunpack.c.0.s8 %v1958
        %v1960 = vlaneseq
        %v1961 = vshrl.u32 %v1960, 7
        %v1962 = vsub.s32 %v1959, %v1961
        %v1963 = vrot.slane %v1955, %v1962
        %v1965 = vunpack.c.l.s4 1966171168
        %v1966 = vunpack.c.0.s8 %v1965
        %v1967 = vlaneseq
        %v1968 = vshrl.u32 %v1967, 7
        %v1969 = vsub.s32 %v1966, %v1968
        %v1970 = vrot.slane %v1956, %v1969
        %v1971 = vcombine.high %v1963, %v1963
        %v1972 = vcombine.high %v1970, %v1970
        %v1974 = vunpack.c.l.s4 1966171168
        %v1975 = vunpack.c.0.s8 %v1974
        %v1976 = vlaneseq
        %v1977 = vshrl.u32 %v1976, 7
        %v1978 = vsub.s32 %v1975, %v1977
        %v1979 = vrot.slane %v1963, %v1978
        %v1981 = vunpack.c.l.s4 1966171168
        %v1982 = vunpack.c.0.s8 %v1981
        %v1983 = vlaneseq
        %v1984 = vshrl.u32 %v1983, 7
        %v1985 = vsub.s32 %v1982, %v1984
        %v1986 = vrot.slane %v1970, %v1985
        %v1988 = vunpack.c.l.s4 1966171168
        %v1989 = vunpack.c.0.s8 %v1988
        %v1990 = vlaneseq
        %v1991 = vshrl.u32 %v1990, 7
        %v1992 = vsub.s32 %v1989, %v1991
        %v1993 = vrot.slane %v1971, %v1992
        %v1995 = vunpack.c.l.s4 1966171168
        %v1996 = vunpack.c.0.s8 %v1995
        %v1997 = vlaneseq
        %v1998 = vshrl.u32 %v1997, 7
        %v1999 = vsub.s32 %v1996, %v1998
        %v2000 = vrot.slane %v1972, %v1999
        %v2001 = vcombine.high %v1979, %v1979
        %v2002 = vcombine.high %v1986, %v1986
        %v2003 = vcombine.high %v1993, %v1993
        %v2004 = vcombine.high %v2000, %v2000
        %vm2005 = vcmask 31744
        %v2007 = vsel %vm2005, %v1954, 0
        %vm2009 = vcmask 1041408
        %v2011 = vsel %vm2009, %v1979, 0
        %v2014 = vsel %vm2009, %v1993, 0
        %v2017 = vsel %vm2009, %v2001, 0
        %v2020 = vsel %vm2009, %v2003, 0
        %v2023 = vsel %vm2009, %v1986, 0
        %v2026 = vsel %vm2009, %v2000, 0
        %v2029 = vsel %vm2009, %v2002, 0
        %v2032 = vsel %vm2009, %v2004, 0
        %2034 = vmatprep.subr.bf16.mxu0 %v2014
        %2035 = vmatpush1.bf16.msra.mxu0 %v2011
        %2036 = vmatprep.subr.bf16.mxu0 0
        %2037 = vmatpush1.bf16.msra.mxu0 0
        %2038 = vmatprep.subr.bf16.mxu0 0
        %2039 = vmatpush1.bf16.msra.mxu0 0
        %2040 = vmatprep.subr.bf16.mxu0 0
        %2041 = vmatpush1.bf16.msra.mxu0 0
        %2042 = vmatprep.subr.bf16.mxu0 0
        %2043 = vmatpush1.bf16.msra.mxu0 0
        %2044 = vmatprep.subr.bf16.mxu0 0
        %2045 = vmatpush1.bf16.msra.mxu0 0
        %2046 = vmatprep.subr.bf16.mxu0 0
        %2047 = vmatpush1.bf16.msra.mxu0 0
        %2048 = vmatprep.subr.bf16.mxu0 0
        %2049 = vmatpush1.bf16.msra.mxu0 0
        %2050 = vmatprep.subr.bf16.mxu0 0
        %2051 = vmatpush1.bf16.msra.mxu0 0
        %2052 = vmatprep.subr.bf16.mxu0 0
        %2053 = vmatpush1.bf16.msra.mxu0 0
        %2054 = vmatprep.subr.bf16.mxu0 0
        %2055 = vmatpush1.bf16.msra.mxu0 0
        %2056 = vmatprep.subr.bf16.mxu0 0
        %2057 = vmatpush1.bf16.msra.mxu0 0
        %2058 = vmatprep.subr.bf16.mxu0 0
        %2059 = vmatpush1.bf16.msra.mxu0 0
        %2060 = vmatprep.subr.bf16.mxu0 0
        %2061 = vmatpush1.bf16.msra.mxu0 0
        %2062 = vmatprep.subr.bf16.mxu0 0
        %2063 = vmatpush1.bf16.msra.mxu0 0
        %2064 = vmatprep.subr.bf16.mxu0 0
        %2065 = vmatpush1.bf16.msra.mxu0 0
        %2066 = vmatprep.mubr.bf16.mxu0 0
        %2067 = vmatmul.mubr.bf16.gmra.mrb[0].mxu0 %v2007
        %v2068 = vpop.f32.mrb[0].mxu0
        %v2069 = vadd.f32 0.0, %v2068
        %v2070 = vpop.f32.mrb[0].mxu0
        %v2071 = vadd.f32 0.0, %v2070
        %v2072 = vpop.f32.mrb[0].mxu0
        %v2073 = vpop.f32.mrb[0].mxu0
        %2074 = vdwg.mxu0
        %2075 = vmatprep.subr.bf16.mxu0 %v2020
        %2076 = vmatpush1.bf16.msra.mxu0 %v2017
        %2077 = vmatprep.subr.bf16.mxu0 0
        %2078 = vmatpush1.bf16.msra.mxu0 0
        %2079 = vmatprep.subr.bf16.mxu0 0
        %2080 = vmatpush1.bf16.msra.mxu0 0
        %2081 = vmatprep.subr.bf16.mxu0 0
        %2082 = vmatpush1.bf16.msra.mxu0 0
        %2083 = vmatprep.subr.bf16.mxu0 0
        %2084 = vmatpush1.bf16.msra.mxu0 0
        %2085 = vmatprep.subr.bf16.mxu0 0
        %2086 = vmatpush1.bf16.msra.mxu0 0
        %2087 = vmatprep.subr.bf16.mxu0 0
        %2088 = vmatpush1.bf16.msra.mxu0 0
        %2089 = vmatprep.subr.bf16.mxu0 0
        %2090 = vmatpush1.bf16.msra.mxu0 0
        %2091 = vmatprep.subr.bf16.mxu0 0
        %2092 = vmatpush1.bf16.msra.mxu0 0
        %2093 = vmatprep.subr.bf16.mxu0 0
        %2094 = vmatpush1.bf16.msra.mxu0 0
        %2095 = vmatprep.subr.bf16.mxu0 0
        %2096 = vmatpush1.bf16.msra.mxu0 0
        %2097 = vmatprep.subr.bf16.mxu0 0
        %2098 = vmatpush1.bf16.msra.mxu0 0
        %2099 = vmatprep.subr.bf16.mxu0 0
        %2100 = vmatpush1.bf16.msra.mxu0 0
        %2101 = vmatprep.subr.bf16.mxu0 0
        %2102 = vmatpush1.bf16.msra.mxu0 0
        %2103 = vmatprep.subr.bf16.mxu0 0
        %2104 = vmatpush1.bf16.msra.mxu0 0
        %2105 = vmatprep.subr.bf16.mxu0 0
        %2106 = vmatpush1.bf16.msra.mxu0 0
        %2107 = vmatprep.mubr.bf16.mxu0 0
        %2108 = vmatmul.mubr.bf16.gmra.mrb[0].mxu0 %v2007
        %v2109 = vpop.f32.mrb[0].mxu0
        %v2110 = vadd.f32 0.0, %v2109
        %v2111 = vpop.f32.mrb[0].mxu0
        %v2112 = vadd.f32 0.0, %v2111
        %v2113 = vpop.f32.mrb[0].mxu0
        %v2114 = vpop.f32.mrb[0].mxu0
        %2115 = vdwg.mxu0
        %2116 = vmatprep.subr.bf16.mxu0 %v2026
        %2117 = vmatpush1.bf16.msra.mxu0 %v2023
        %2118 = vmatprep.subr.bf16.mxu0 0
        %2119 = vmatpush1.bf16.msra.mxu0 0
        %2120 = vmatprep.subr.bf16.mxu0 0
        %2121 = vmatpush1.bf16.msra.mxu0 0
        %2122 = vmatprep.subr.bf16.mxu0 0
        %2123 = vmatpush1.bf16.msra.mxu0 0
        %2124 = vmatprep.subr.bf16.mxu0 0
        %2125 = vmatpush1.bf16.msra.mxu0 0
        %2126 = vmatprep.subr.bf16.mxu0 0
        %2127 = vmatpush1.bf16.msra.mxu0 0
        %2128 = vmatprep.subr.bf16.mxu0 0
        %2129 = vmatpush1.bf16.msra.mxu0 0
        %2130 = vmatprep.subr.bf16.mxu0 0
        %2131 = vmatpush1.bf16.msra.mxu0 0
        %2132 = vmatprep.subr.bf16.mxu0 0
        %2133 = vmatpush1.bf16.msra.mxu0 0
        %2134 = vmatprep.subr.bf16.mxu0 0
        %2135 = vmatpush1.bf16.msra.mxu0 0
        %2136 = vmatprep.subr.bf16.mxu0 0
        %2137 = vmatpush1.bf16.msra.mxu0 0
        %2138 = vmatprep.subr.bf16.mxu0 0
        %2139 = vmatpush1.bf16.msra.mxu0 0
        %2140 = vmatprep.subr.bf16.mxu0 0
        %2141 = vmatpush1.bf16.msra.mxu0 0
        %2142 = vmatprep.subr.bf16.mxu0 0
        %2143 = vmatpush1.bf16.msra.mxu0 0
        %2144 = vmatprep.subr.bf16.mxu0 0
        %2145 = vmatpush1.bf16.msra.mxu0 0
        %2146 = vmatprep.subr.bf16.mxu0 0
        %2147 = vmatpush1.bf16.msra.mxu0 0
        %2148 = vmatprep.mubr.bf16.mxu0 0
        %2149 = vmatmul.mubr.bf16.gmra.mrb[0].mxu0 %v2007
        %v2150 = vpop.f32.mrb[0].mxu0
        %v2151 = vadd.f32 0.0, %v2150
        %v2152 = vpop.f32.mrb[0].mxu0
        %v2153 = vadd.f32 0.0, %v2152
        %v2154 = vpop.f32.mrb[0].mxu0
        %v2155 = vpop.f32.mrb[0].mxu0
        %2156 = vdwg.mxu0
        %2157 = vmatprep.subr.bf16.mxu0 %v2032
        %2158 = vmatpush1.bf16.msra.mxu0 %v2029
        %2159 = vmatprep.subr.bf16.mxu0 0
        %2160 = vmatpush1.bf16.msra.mxu0 0
        %2161 = vmatprep.subr.bf16.mxu0 0
        %2162 = vmatpush1.bf16.msra.mxu0 0
        %2163 = vmatprep.subr.bf16.mxu0 0
        %2164 = vmatpush1.bf16.msra.mxu0 0
        %2165 = vmatprep.subr.bf16.mxu0 0
        %2166 = vmatpush1.bf16.msra.mxu0 0
        %2167 = vmatprep.subr.bf16.mxu0 0
        %2168 = vmatpush1.bf16.msra.mxu0 0
        %2169 = vmatprep.subr.bf16.mxu0 0
        %2170 = vmatpush1.bf16.msra.mxu0 0
        %2171 = vmatprep.subr.bf16.mxu0 0
        %2172 = vmatpush1.bf16.msra.mxu0 0
        %2173 = vmatprep.subr.bf16.mxu0 0
        %2174 = vmatpush1.bf16.msra.mxu0 0
        %2175 = vmatprep.subr.bf16.mxu0 0
        %2176 = vmatpush1.bf16.msra.mxu0 0
        %2177 = vmatprep.subr.bf16.mxu0 0
        %2178 = vmatpush1.bf16.msra.mxu0 0
        %2179 = vmatprep.subr.bf16.mxu0 0
        %2180 = vmatpush1.bf16.msra.mxu0 0
        %2181 = vmatprep.subr.bf16.mxu0 0
        %2182 = vmatpush1.bf16.msra.mxu0 0
        %2183 = vmatprep.subr.bf16.mxu0 0
        %2184 = vmatpush1.bf16.msra.mxu0 0
        %2185 = vmatprep.subr.bf16.mxu0 0
        %2186 = vmatpush1.bf16.msra.mxu0 0
        %2187 = vmatprep.subr.bf16.mxu0 0
        %2188 = vmatpush1.bf16.msra.mxu0 0
        %2189 = vmatprep.mubr.bf16.mxu0 0
        %2190 = vmatmul.mubr.bf16.gmra.mrb[0].mxu0 %v2007
        %v2191 = vpop.f32.mrb[0].mxu0
        %v2192 = vadd.f32 0.0, %v2191
        %v2193 = vpop.f32.mrb[0].mxu0
        %v2194 = vadd.f32 0.0, %v2193
        %v2195 = vpop.f32.mrb[0].mxu0
        %v2196 = vpop.f32.mrb[0].mxu0
        %2197 = vdwg.mxu0
        %v2198 = vpack.c.bf16 %v2069, %v2069
        %v2199 = vpack.c.bf16 %v2071, %v2071
        %v2200 = vpack.c.bf16 %v2110, %v2110
        %v2201 = vpack.c.bf16 %v2112, %v2112
        %v2202 = vpack.c.bf16 %v2151, %v2151
        %v2203 = vpack.c.bf16 %v2153, %v2153
        %v2204 = vpack.c.bf16 %v2192, %v2192
        %v2205 = vpack.c.bf16 %v2194, %v2194
        %v2206 = vcombine.low %v2198, %v2202
        %v2208 = vunpack.c.l.s4 1983009808
        %v2209 = vunpack.c.0.s8 %v2208
        %v2210 = vlaneseq
        %v2211 = vshrl.u32 %v2210, 7
        %v2212 = vsub.s32 %v2209, %v2211
        %v2213 = vrot.slane %v2206, %v2212
        %v2214 = vcombine.low %v2200, %v2204
        %v2216 = vunpack.c.l.s4 1983009808
        %v2217 = vunpack.c.0.s8 %v2216
        %v2218 = vlaneseq
        %v2219 = vshrl.u32 %v2218, 7
        %v2220 = vsub.s32 %v2217, %v2219
        %v2221 = vrot.slane %v2214, %v2220
        %v2222 = vcombine.low %v2213, %v2221
        %v2223 = vcombine.high %v2213, %v2221
        %v2225 = vunpack.c.l.s4 1934713408
        %v2226 = vunpack.c.0.s8 %v2225
        %v2227 = vlaneseq
        %v2228 = vshrl.u32 %v2227, 7
        %v2229 = vsub.s32 %v2226, %v2228
        %v2230 = vrot.slane %v2222, %v2229
        %v2232 = vunpack.c.l.s4 1934713408
        %v2233 = vunpack.c.0.s8 %v2232
        %v2234 = vlaneseq
        %v2235 = vshrl.u32 %v2234, 7
        %v2236 = vsub.s32 %v2233, %v2235
        %v2237 = vrot.slane %v2223, %v2236
        %v2238 = vcombine.high %v2230, 0
        %v2239 = vcombine.high %v2237, 0
        %v2240 = vcombine.low %v2199, %v2203
        %v2242 = vunpack.c.l.s4 1983009808
        %v2243 = vunpack.c.0.s8 %v2242
        %v2244 = vlaneseq
        %v2245 = vshrl.u32 %v2244, 7
        %v2246 = vsub.s32 %v2243, %v2245
        %v2247 = vrot.slane %v2240, %v2246
        %v2248 = vcombine.low %v2201, %v2205
        %v2250 = vunpack.c.l.s4 1983009808
        %v2251 = vunpack.c.0.s8 %v2250
        %v2252 = vlaneseq
        %v2253 = vshrl.u32 %v2252, 7
        %v2254 = vsub.s32 %v2251, %v2253
        %v2255 = vrot.slane %v2248, %v2254
        %v2256 = vcombine.low %v2247, %v2255
        %v2257 = vcombine.high %v2247, %v2255
        %v2259 = vunpack.c.l.s4 1934713408
        %v2260 = vunpack.c.0.s8 %v2259
        %v2261 = vlaneseq
        %v2262 = vshrl.u32 %v2261, 7
        %v2263 = vsub.s32 %v2260, %v2262
        %v2264 = vrot.slane %v2256, %v2263
        %v2266 = vunpack.c.l.s4 1934713408
        %v2267 = vunpack.c.0.s8 %v2266
        %v2268 = vlaneseq
        %v2269 = vshrl.u32 %v2268, 7
        %v2270 = vsub.s32 %v2267, %v2269
        %v2271 = vrot.slane %v2257, %v2270
        %v2272 = vcombine.high %v2264, 0
        %v2273 = vcombine.high %v2271, 0
        %v2276 = vpack.i.b16 %v2264, %v2230
        %v2277 = vshrl.u32 %v2230, 16
        %v2278 = vshrl.u32 %v2264, 16
        %v2279 = vpack.i.b16 %v2278, %v2277
        %v2282 = vpack.i.b16 %v2272, %v2238
        %v2283 = vshrl.u32 %v2238, 16
        %v2284 = vshrl.u32 %v2272, 16
        %v2285 = vpack.i.b16 %v2284, %v2283
        %v2288 = vpack.i.b16 %v2271, %v2237
        %v2289 = vshrl.u32 %v2237, 16
        %v2290 = vshrl.u32 %v2271, 16
        %v2291 = vpack.i.b16 %v2290, %v2289
        %v2294 = vpack.i.b16 %v2273, %v2239
        %v2295 = vshrl.u32 %v2239, 16
        %v2296 = vshrl.u32 %v2273, 16
        %v2297 = vpack.i.b16 %v2296, %v2295
        %v2298 = vld [vmem:[%s17] sm:$0xf]
        %v2300 = vsel %vm1543, %v2298, 0
        %v2303 = vsel %vm1547, %v2276, 0
        %2305 = vmatprep.subr.bf16.mxu0 0
        %2306 = vmatpush1.bf16.msra.mxu0 %v2303
        %2307 = vmatprep.subr.bf16.mxu0 0
        %2308 = vmatpush1.bf16.msra.mxu0 0
        %2309 = vmatprep.subr.bf16.mxu0 0
        %2310 = vmatpush1.bf16.msra.mxu0 0
        %2311 = vmatprep.subr.bf16.mxu0 0
        %2312 = vmatpush1.bf16.msra.mxu0 0
        %2313 = vmatprep.subr.bf16.mxu0 0
        %2314 = vmatpush1.bf16.msra.mxu0 0
        %2315 = vmatprep.subr.bf16.mxu0 0
        %2316 = vmatpush1.bf16.msra.mxu0 0
        %2317 = vmatprep.subr.bf16.mxu0 0
        %2318 = vmatpush1.bf16.msra.mxu0 0
        %2319 = vmatprep.subr.bf16.mxu0 0
        %2320 = vmatpush1.bf16.msra.mxu0 0
        %2321 = vmatprep.subr.bf16.mxu0 0
        %2322 = vmatpush1.bf16.msra.mxu0 0
        %2323 = vmatprep.subr.bf16.mxu0 0
        %2324 = vmatpush1.bf16.msra.mxu0 0
        %2325 = vmatprep.subr.bf16.mxu0 0
        %2326 = vmatpush1.bf16.msra.mxu0 0
        %2327 = vmatprep.subr.bf16.mxu0 0
        %2328 = vmatpush1.bf16.msra.mxu0 0
        %2329 = vmatprep.subr.bf16.mxu0 0
        %2330 = vmatpush1.bf16.msra.mxu0 0
        %2331 = vmatprep.subr.bf16.mxu0 0
        %2332 = vmatpush1.bf16.msra.mxu0 0
        %2333 = vmatprep.subr.bf16.mxu0 0
        %2334 = vmatpush1.bf16.msra.mxu0 0
        %2335 = vmatprep.subr.bf16.mxu0 0
        %2336 = vmatpush1.bf16.msra.mxu0 0
        %2337 = vmatprep.mubr.bf16.mxu0 0
        %2338 = vmatmul.mubr.bf16.gmra.mrb[0].mxu0 %v2300
        %v2339 = vpop.f32.mrb[0].mxu0
        %v2340 = vadd.f32 0.0, %v2339
        %v2341 = vpop.f32.mrb[0].mxu0
        %v2342 = vpop.f32.mrb[0].mxu0
        %v2343 = vpop.f32.mrb[0].mxu0
        %2344 = vdwg.mxu0
        %v2346 = vsel %vm1547, %v2279, 0
        %2348 = vmatprep.subr.bf16.mxu0 0
        %2349 = vmatpush1.bf16.msra.mxu0 %v2346
        %2350 = vmatprep.subr.bf16.mxu0 0
        %2351 = vmatpush1.bf16.msra.mxu0 0
        %2352 = vmatprep.subr.bf16.mxu0 0
        %2353 = vmatpush1.bf16.msra.mxu0 0
        %2354 = vmatprep.subr.bf16.mxu0 0
        %2355 = vmatpush1.bf16.msra.mxu0 0
        %2356 = vmatprep.subr.bf16.mxu0 0
        %2357 = vmatpush1.bf16.msra.mxu0 0
        %2358 = vmatprep.subr.bf16.mxu0 0
        %2359 = vmatpush1.bf16.msra.mxu0 0
        %2360 = vmatprep.subr.bf16.mxu0 0
        %2361 = vmatpush1.bf16.msra.mxu0 0
        %2362 = vmatprep.subr.bf16.mxu0 0
        %2363 = vmatpush1.bf16.msra.mxu0 0
        %2364 = vmatprep.subr.bf16.mxu0 0
        %2365 = vmatpush1.bf16.msra.mxu0 0
        %2366 = vmatprep.subr.bf16.mxu0 0
        %2367 = vmatpush1.bf16.msra.mxu0 0
        %2368 = vmatprep.subr.bf16.mxu0 0
        %2369 = vmatpush1.bf16.msra.mxu0 0
        %2370 = vmatprep.subr.bf16.mxu0 0
        %2371 = vmatpush1.bf16.msra.mxu0 0
        %2372 = vmatprep.subr.bf16.mxu0 0
        %2373 = vmatpush1.bf16.msra.mxu0 0
        %2374 = vmatprep.subr.bf16.mxu0 0
        %2375 = vmatpush1.bf16.msra.mxu0 0
        %2376 = vmatprep.subr.bf16.mxu0 0
        %2377 = vmatpush1.bf16.msra.mxu0 0
        %2378 = vmatprep.subr.bf16.mxu0 0
        %2379 = vmatpush1.bf16.msra.mxu0 0
        %2380 = vmatprep.mubr.bf16.mxu0 0
        %2381 = vmatmul.mubr.bf16.gmra.mrb[0].mxu0 %v2300
        %v2382 = vpop.f32.mrb[0].mxu0
        %v2383 = vadd.f32 0.0, %v2382
        %v2384 = vpop.f32.mrb[0].mxu0
        %v2385 = vpop.f32.mrb[0].mxu0
        %v2386 = vpop.f32.mrb[0].mxu0
        %2387 = vdwg.mxu0
        %v2389 = vsel %vm1547, %v2282, 0
        %2391 = vmatprep.subr.bf16.mxu0 0
        %2392 = vmatpush1.bf16.msra.mxu0 %v2389
        %2393 = vmatprep.subr.bf16.mxu0 0
        %2394 = vmatpush1.bf16.msra.mxu0 0
        %2395 = vmatprep.subr.bf16.mxu0 0
        %2396 = vmatpush1.bf16.msra.mxu0 0
        %2397 = vmatprep.subr.bf16.mxu0 0
        %2398 = vmatpush1.bf16.msra.mxu0 0
        %2399 = vmatprep.subr.bf16.mxu0 0
        %2400 = vmatpush1.bf16.msra.mxu0 0
        %2401 = vmatprep.subr.bf16.mxu0 0
        %2402 = vmatpush1.bf16.msra.mxu0 0
        %2403 = vmatprep.subr.bf16.mxu0 0
        %2404 = vmatpush1.bf16.msra.mxu0 0
        %2405 = vmatprep.subr.bf16.mxu0 0
        %2406 = vmatpush1.bf16.msra.mxu0 0
        %2407 = vmatprep.subr.bf16.mxu0 0
        %2408 = vmatpush1.bf16.msra.mxu0 0
        %2409 = vmatprep.subr.bf16.mxu0 0
        %2410 = vmatpush1.bf16.msra.mxu0 0
        %2411 = vmatprep.subr.bf16.mxu0 0
        %2412 = vmatpush1.bf16.msra.mxu0 0
        %2413 = vmatprep.subr.bf16.mxu0 0
        %2414 = vmatpush1.bf16.msra.mxu0 0
        %2415 = vmatprep.subr.bf16.mxu0 0
        %2416 = vmatpush1.bf16.msra.mxu0 0
        %2417 = vmatprep.subr.bf16.mxu0 0
        %2418 = vmatpush1.bf16.msra.mxu0 0
        %2419 = vmatprep.subr.bf16.mxu0 0
        %2420 = vmatpush1.bf16.msra.mxu0 0
        %2421 = vmatprep.subr.bf16.mxu0 0
        %2422 = vmatpush1.bf16.msra.mxu0 0
        %2423 = vmatprep.mubr.bf16.mxu0 0
        %2424 = vmatmul.mubr.bf16.gmra.mrb[0].mxu0 %v2300
        %v2425 = vpop.f32.mrb[0].mxu0
        %v2426 = vadd.f32 0.0, %v2425
        %v2427 = vpop.f32.mrb[0].mxu0
        %v2428 = vpop.f32.mrb[0].mxu0
        %v2429 = vpop.f32.mrb[0].mxu0
        %2430 = vdwg.mxu0
        %v2432 = vsel %vm1547, %v2285, 0
        %2434 = vmatprep.subr.bf16.mxu0 0
        %2435 = vmatpush1.bf16.msra.mxu0 %v2432
        %2436 = vmatprep.subr.bf16.mxu0 0
        %2437 = vmatpush1.bf16.msra.mxu0 0
        %2438 = vmatprep.subr.bf16.mxu0 0
        %2439 = vmatpush1.bf16.msra.mxu0 0
        %2440 = vmatprep.subr.bf16.mxu0 0
        %2441 = vmatpush1.bf16.msra.mxu0 0
        %2442 = vmatprep.subr.bf16.mxu0 0
        %2443 = vmatpush1.bf16.msra.mxu0 0
        %2444 = vmatprep.subr.bf16.mxu0 0
        %2445 = vmatpush1.bf16.msra.mxu0 0
        %2446 = vmatprep.subr.bf16.mxu0 0
        %2447 = vmatpush1.bf16.msra.mxu0 0
        %2448 = vmatprep.subr.bf16.mxu0 0
        %2449 = vmatpush1.bf16.msra.mxu0 0
        %2450 = vmatprep.subr.bf16.mxu0 0
        %2451 = vmatpush1.bf16.msra.mxu0 0
        %2452 = vmatprep.subr.bf16.mxu0 0
        %2453 = vmatpush1.bf16.msra.mxu0 0
        %2454 = vmatprep.subr.bf16.mxu0 0
        %2455 = vmatpush1.bf16.msra.mxu0 0
        %2456 = vmatprep.subr.bf16.mxu0 0
        %2457 = vmatpush1.bf16.msra.mxu0 0
        %2458 = vmatprep.subr.bf16.mxu0 0
        %2459 = vmatpush1.bf16.msra.mxu0 0
        %2460 = vmatprep.subr.bf16.mxu0 0
        %2461 = vmatpush1.bf16.msra.mxu0 0
        %2462 = vmatprep.subr.bf16.mxu0 0
        %2463 = vmatpush1.bf16.msra.mxu0 0
        %2464 = vmatprep.subr.bf16.mxu0 0
        %2465 = vmatpush1.bf16.msra.mxu0 0
        %2466 = vmatprep.mubr.bf16.mxu0 0
        %2467 = vmatmul.mubr.bf16.gmra.mrb[0].mxu0 %v2300
        %v2468 = vpop.f32.mrb[0].mxu0
        %v2469 = vadd.f32 0.0, %v2468
        %v2470 = vpop.f32.mrb[0].mxu0
        %v2471 = vpop.f32.mrb[0].mxu0
        %v2472 = vpop.f32.mrb[0].mxu0
        %2473 = vdwg.mxu0
        %v2475 = vsel %vm1547, %v2288, 0
        %2477 = vmatprep.subr.bf16.mxu0 0
        %2478 = vmatpush1.bf16.msra.mxu0 %v2475
        %2479 = vmatprep.subr.bf16.mxu0 0
        %2480 = vmatpush1.bf16.msra.mxu0 0
        %2481 = vmatprep.subr.bf16.mxu0 0
        %2482 = vmatpush1.bf16.msra.mxu0 0
        %2483 = vmatprep.subr.bf16.mxu0 0
        %2484 = vmatpush1.bf16.msra.mxu0 0
        %2485 = vmatprep.subr.bf16.mxu0 0
        %2486 = vmatpush1.bf16.msra.mxu0 0
        %2487 = vmatprep.subr.bf16.mxu0 0
        %2488 = vmatpush1.bf16.msra.mxu0 0
        %2489 = vmatprep.subr.bf16.mxu0 0
        %2490 = vmatpush1.bf16.msra.mxu0 0
        %2491 = vmatprep.subr.bf16.mxu0 0
        %2492 = vmatpush1.bf16.msra.mxu0 0
        %2493 = vmatprep.subr.bf16.mxu0 0
        %2494 = vmatpush1.bf16.msra.mxu0 0
        %2495 = vmatprep.subr.bf16.mxu0 0
        %2496 = vmatpush1.bf16.msra.mxu0 0
        %2497 = vmatprep.subr.bf16.mxu0 0
        %2498 = vmatpush1.bf16.msra.mxu0 0
        %2499 = vmatprep.subr.bf16.mxu0 0
        %2500 = vmatpush1.bf16.msra.mxu0 0
        %2501 = vmatprep.subr.bf16.mxu0 0
        %2502 = vmatpush1.bf16.msra.mxu0 0
        %2503 = vmatprep.subr.bf16.mxu0 0
        %2504 = vmatpush1.bf16.msra.mxu0 0
        %2505 = vmatprep.subr.bf16.mxu0 0
        %2506 = vmatpush1.bf16.msra.mxu0 0
        %2507 = vmatprep.subr.bf16.mxu0 0
        %2508 = vmatpush1.bf16.msra.mxu0 0
        %2509 = vmatprep.mubr.bf16.mxu0 0
        %2510 = vmatmul.mubr.bf16.gmra.mrb[0].mxu0 %v2300
        %v2511 = vpop.f32.mrb[0].mxu0
        %v2512 = vadd.f32 0.0, %v2511
        %v2513 = vpop.f32.mrb[0].mxu0
        %v2514 = vpop.f32.mrb[0].mxu0
        %v2515 = vpop.f32.mrb[0].mxu0
        %2516 = vdwg.mxu0
        %v2518 = vsel %vm1547, %v2291, 0
        %2520 = vmatprep.subr.bf16.mxu0 0
        %2521 = vmatpush1.bf16.msra.mxu0 %v2518
        %2522 = vmatprep.subr.bf16.mxu0 0
        %2523 = vmatpush1.bf16.msra.mxu0 0
        %2524 = vmatprep.subr.bf16.mxu0 0
        %2525 = vmatpush1.bf16.msra.mxu0 0
        %2526 = vmatprep.subr.bf16.mxu0 0
        %2527 = vmatpush1.bf16.msra.mxu0 0
        %2528 = vmatprep.subr.bf16.mxu0 0
        %2529 = vmatpush1.bf16.msra.mxu0 0
        %2530 = vmatprep.subr.bf16.mxu0 0
        %2531 = vmatpush1.bf16.msra.mxu0 0
        %2532 = vmatprep.subr.bf16.mxu0 0
        %2533 = vmatpush1.bf16.msra.mxu0 0
        %2534 = vmatprep.subr.bf16.mxu0 0
        %2535 = vmatpush1.bf16.msra.mxu0 0
        %2536 = vmatprep.subr.bf16.mxu0 0
        %2537 = vmatpush1.bf16.msra.mxu0 0
        %2538 = vmatprep.subr.bf16.mxu0 0
        %2539 = vmatpush1.bf16.msra.mxu0 0
        %2540 = vmatprep.subr.bf16.mxu0 0
        %2541 = vmatpush1.bf16.msra.mxu0 0
        %2542 = vmatprep.subr.bf16.mxu0 0
        %2543 = vmatpush1.bf16.msra.mxu0 0
        %2544 = vmatprep.subr.bf16.mxu0 0
        %2545 = vmatpush1.bf16.msra.mxu0 0
        %2546 = vmatprep.subr.bf16.mxu0 0
        %2547 = vmatpush1.bf16.msra.mxu0 0
        %2548 = vmatprep.subr.bf16.mxu0 0
        %2549 = vmatpush1.bf16.msra.mxu0 0
        %2550 = vmatprep.subr.bf16.mxu0 0
        %2551 = vmatpush1.bf16.msra.mxu0 0
        %2552 = vmatprep.mubr.bf16.mxu0 0
        %2553 = vmatmul.mubr.bf16.gmra.mrb[0].mxu0 %v2300
        %v2554 = vpop.f32.mrb[0].mxu0
        %v2555 = vadd.f32 0.0, %v2554
        %v2556 = vpop.f32.mrb[0].mxu0
        %v2557 = vpop.f32.mrb[0].mxu0
        %v2558 = vpop.f32.mrb[0].mxu0
        %2559 = vdwg.mxu0
        %v2561 = vsel %vm1547, %v2294, 0
        %2563 = vmatprep.subr.bf16.mxu0 0
        %2564 = vmatpush1.bf16.msra.mxu0 %v2561
        %2565 = vmatprep.subr.bf16.mxu0 0
        %2566 = vmatpush1.bf16.msra.mxu0 0
        %2567 = vmatprep.subr.bf16.mxu0 0
        %2568 = vmatpush1.bf16.msra.mxu0 0
        %2569 = vmatprep.subr.bf16.mxu0 0
        %2570 = vmatpush1.bf16.msra.mxu0 0
        %2571 = vmatprep.subr.bf16.mxu0 0
        %2572 = vmatpush1.bf16.msra.mxu0 0
        %2573 = vmatprep.subr.bf16.mxu0 0
        %2574 = vmatpush1.bf16.msra.mxu0 0
        %2575 = vmatprep.subr.bf16.mxu0 0
        %2576 = vmatpush1.bf16.msra.mxu0 0
        %2577 = vmatprep.subr.bf16.mxu0 0
        %2578 = vmatpush1.bf16.msra.mxu0 0
        %2579 = vmatprep.subr.bf16.mxu0 0
        %2580 = vmatpush1.bf16.msra.mxu0 0
        %2581 = vmatprep.subr.bf16.mxu0 0
        %2582 = vmatpush1.bf16.msra.mxu0 0
        %2583 = vmatprep.subr.bf16.mxu0 0
        %2584 = vmatpush1.bf16.msra.mxu0 0
        %2585 = vmatprep.subr.bf16.mxu0 0
        %2586 = vmatpush1.bf16.msra.mxu0 0
        %2587 = vmatprep.subr.bf16.mxu0 0
        %2588 = vmatpush1.bf16.msra.mxu0 0
        %2589 = vmatprep.subr.bf16.mxu0 0
        %2590 = vmatpush1.bf16.msra.mxu0 0
        %2591 = vmatprep.subr.bf16.mxu0 0
        %2592 = vmatpush1.bf16.msra.mxu0 0
        %2593 = vmatprep.subr.bf16.mxu0 0
        %2594 = vmatpush1.bf16.msra.mxu0 0
        %2595 = vmatprep.mubr.bf16.mxu0 0
        %2596 = vmatmul.mubr.bf16.gmra.mrb[0].mxu0 %v2300
        %v2597 = vpop.f32.mrb[0].mxu0
        %v2598 = vadd.f32 0.0, %v2597
        %v2599 = vpop.f32.mrb[0].mxu0
        %v2600 = vpop.f32.mrb[0].mxu0
        %v2601 = vpop.f32.mrb[0].mxu0
        %2602 = vdwg.mxu0
        %v2604 = vsel %vm1547, %v2297, 0
        %2606 = vmatprep.subr.bf16.mxu0 0
        %2607 = vmatpush1.bf16.msra.mxu0 %v2604
        %2608 = vmatprep.subr.bf16.mxu0 0
        %2609 = vmatpush1.bf16.msra.mxu0 0
        %2610 = vmatprep.subr.bf16.mxu0 0
        %2611 = vmatpush1.bf16.msra.mxu0 0
        %2612 = vmatprep.subr.bf16.mxu0 0
        %2613 = vmatpush1.bf16.msra.mxu0 0
        %2614 = vmatprep.subr.bf16.mxu0 0
        %2615 = vmatpush1.bf16.msra.mxu0 0
        %2616 = vmatprep.subr.bf16.mxu0 0
        %2617 = vmatpush1.bf16.msra.mxu0 0
        %2618 = vmatprep.subr.bf16.mxu0 0
        %2619 = vmatpush1.bf16.msra.mxu0 0
        %2620 = vmatprep.subr.bf16.mxu0 0
        %2621 = vmatpush1.bf16.msra.mxu0 0
        %2622 = vmatprep.subr.bf16.mxu0 0
        %2623 = vmatpush1.bf16.msra.mxu0 0
        %2624 = vmatprep.subr.bf16.mxu0 0
        %2625 = vmatpush1.bf16.msra.mxu0 0
        %2626 = vmatprep.subr.bf16.mxu0 0
        %2627 = vmatpush1.bf16.msra.mxu0 0
        %2628 = vmatprep.subr.bf16.mxu0 0
        %2629 = vmatpush1.bf16.msra.mxu0 0
        %2630 = vmatprep.subr.bf16.mxu0 0
        %2631 = vmatpush1.bf16.msra.mxu0 0
        %2632 = vmatprep.subr.bf16.mxu0 0
        %2633 = vmatpush1.bf16.msra.mxu0 0
        %2634 = vmatprep.subr.bf16.mxu0 0
        %2635 = vmatpush1.bf16.msra.mxu0 0
        %2636 = vmatprep.subr.bf16.mxu0 0
        %2637 = vmatpush1.bf16.msra.mxu0 0
        %2638 = vmatprep.mubr.bf16.mxu0 0
        %2639 = vmatmul.mubr.bf16.gmra.mrb[0].mxu0 %v2300
        %v2640 = vpop.f32.mrb[0].mxu0
        %v2641 = vadd.f32 0.0, %v2640
        %v2642 = vpop.f32.mrb[0].mxu0
        %v2643 = vpop.f32.mrb[0].mxu0
        %v2644 = vpop.f32.mrb[0].mxu0
        %2645 = vdwg.mxu0
        %v2646 = vld [vmem:[%s744] sm:$0xf]
        %v2647 = vld [vmem:[%s744 + $0x4] sm:$0xf]
        %v2648 = vld [vmem:[%s744 + $0x8] sm:$0xf]
        %v2649 = vld [vmem:[%s744 + $0xc] sm:$0xf]
        %v2650 = vld [vmem:[%s744 + $0x10] sm:$0xf]
        %v2651 = vld [vmem:[%s744 + $0x14] sm:$0xf]
        %v2652 = vld [vmem:[%s744 + $0x18] sm:$0xf]
        %v2653 = vld [vmem:[%s744 + $0x1c] sm:$0xf]
        %v2654 = vld [vmem:[%s8] sm:$0xf]
        %v2655 = vld [vmem:[%s8 + $0x4] sm:$0xf]
        %v2656 = vld [vmem:[%s8 + $0x8] sm:$0xf]
        %v2657 = vld [vmem:[%s8 + $0xc] sm:$0xf]
        %v2658 = vld [vmem:[%s8 + $0x10] sm:$0xf]
        %v2659 = vld [vmem:[%s8 + $0x14] sm:$0xf]
        %v2660 = vld [vmem:[%s8 + $0x18] sm:$0xf]
        %v2661 = vld [vmem:[%s8 + $0x1c] sm:$0xf]
        %v2662 = vld [vmem:[%s8 + $0x20] sm:$0xf]
        %v2663 = vld [vmem:[%s8 + $0x24] sm:$0xf]
        %v2664 = vld [vmem:[%s8 + $0x28] sm:$0xf]
        %v2665 = vld [vmem:[%s8 + $0x2c] sm:$0xf]
        %v2666 = vld [vmem:[%s8 + $0x30] sm:$0xf]
        %v2667 = vld [vmem:[%s8 + $0x34] sm:$0xf]
        %v2668 = vld [vmem:[%s8 + $0x38] sm:$0xf]
        %v2669 = vld [vmem:[%s8 + $0x3c] sm:$0xf]
        %v2670 = vld [vmem:[#allocation11] sm:$0x1]
        %v2672 = vlaneseq
        %v2673 = vshrl.u32 %v2672, 7
        %v2674 = vsub.s32 0, %v2673
        %v2675 = vrot.slane %v2670, %v2674
        %v2685 = vunpack.c.l.b16 %v2646
        %v2686 = vunpack.c.l.b16 %v2647
        %v2687 = vunpack.c.l.b16 %v2648
        %v2688 = vunpack.c.l.b16 %v2649
        %v2689 = vunpack.c.l.b16 %v2650
        %v2690 = vunpack.c.l.b16 %v2651
        %v2691 = vunpack.c.l.b16 %v2652
        %v2692 = vunpack.c.l.b16 %v2653
        %v2693 = vpack.c.b16 %v2686, %v2685
        %v2694 = vpack.c.b16 %v2688, %v2687
        %v2695 = vpack.c.b16 %v2690, %v2689
        %v2696 = vpack.c.b16 %v2692, %v2691
        %v2717 = vunpack.c.l.b16 %v2654
        %v2718 = vunpack.c.l.b16 %v2655
        %v2719 = vunpack.c.l.b16 %v2656
        %v2720 = vunpack.c.l.b16 %v2657
        %v2721 = vunpack.c.l.b16 %v2658
        %v2722 = vunpack.c.l.b16 %v2659
        %v2723 = vunpack.c.l.b16 %v2660
        %v2724 = vunpack.c.l.b16 %v2661
        %v2725 = vunpack.c.l.b16 %v2662
        %v2726 = vunpack.c.l.b16 %v2663
        %v2727 = vunpack.c.l.b16 %v2664
        %v2728 = vunpack.c.l.b16 %v2665
        %v2729 = vunpack.c.l.b16 %v2666
        %v2730 = vunpack.c.l.b16 %v2667
        %v2731 = vunpack.c.l.b16 %v2668
        %v2732 = vunpack.c.l.b16 %v2669
        %v2733 = vpack.c.b16 %v2718, %v2717
        %v2734 = vpack.c.b16 %v2720, %v2719
        %v2735 = vpack.c.b16 %v2722, %v2721
        %v2736 = vpack.c.b16 %v2724, %v2723
        %v2737 = vpack.c.b16 %v2726, %v2725
        %v2738 = vpack.c.b16 %v2728, %v2727
        %v2739 = vpack.c.b16 %v2730, %v2729
        %v2740 = vpack.c.b16 %v2732, %v2731
        %2749 = vmatprep.subr.bf16.mxu0 0
        %2750 = vmatpush1.bf16.msra.mxu0 %v2733
        %2751 = vmatprep.subr.bf16.mxu0 0
        %2752 = vmatpush1.bf16.msra.mxu0 %v2734
        %2753 = vmatprep.subr.bf16.mxu0 0
        %2754 = vmatpush1.bf16.msra.mxu0 %v2735
        %2755 = vmatprep.subr.bf16.mxu0 0
        %2756 = vmatpush1.bf16.msra.mxu0 %v2736
        %2757 = vmatprep.subr.bf16.mxu0 0
        %2758 = vmatpush1.bf16.msra.mxu0 %v2737
        %2759 = vmatprep.subr.bf16.mxu0 0
        %2760 = vmatpush1.bf16.msra.mxu0 %v2738
        %2761 = vmatprep.subr.bf16.mxu0 0
        %2762 = vmatpush1.bf16.msra.mxu0 %v2739
        %2763 = vmatprep.subr.bf16.mxu0 0
        %2764 = vmatpush1.bf16.msra.mxu0 %v2740
        %2765 = vmatprep.subr.bf16.mxu0 0
        %2766 = vmatpush1.bf16.msra.mxu0 0
        %2767 = vmatprep.subr.bf16.mxu0 0
        %2768 = vmatpush1.bf16.msra.mxu0 0
        %2769 = vmatprep.subr.bf16.mxu0 0
        %2770 = vmatpush1.bf16.msra.mxu0 0
        %2771 = vmatprep.subr.bf16.mxu0 0
        %2772 = vmatpush1.bf16.msra.mxu0 0
        %2773 = vmatprep.subr.bf16.mxu0 0
        %2774 = vmatpush1.bf16.msra.mxu0 0
        %2775 = vmatprep.subr.bf16.mxu0 0
        %2776 = vmatpush1.bf16.msra.mxu0 0
        %2777 = vmatprep.subr.bf16.mxu0 0
        %2778 = vmatpush1.bf16.msra.mxu0 0
        %2779 = vmatprep.subr.bf16.mxu0 0
        %2780 = vmatpush1.bf16.msra.mxu0 0
        %2781 = vmatprep.mubr.bf16.mxu0 0
        %2782 = vmatmul.mubr.bf16.gmra.mrb[0].mxu0 %v2693
        %v2783 = vpop.f32.mrb[0].mxu0
        %v2784 = vadd.f32 %v2675, %v2783
        %v2785 = vpop.f32.mrb[0].mxu0
        %v2786 = vpop.f32.mrb[0].mxu0
        %v2787 = vadd.f32 %v2675, %v2786
        %v2788 = vpop.f32.mrb[0].mxu0
        %2789 = vmatprep.mubr.bf16.mxu0 0
        %2790 = vmatmul.mubr.bf16.gmra.mrb[0].mxu0 %v2694
        %v2791 = vpop.f32.mrb[0].mxu0
        %v2792 = vadd.f32 %v2675, %v2791
        %v2793 = vpop.f32.mrb[0].mxu0
        %v2794 = vpop.f32.mrb[0].mxu0
        %v2795 = vadd.f32 %v2675, %v2794
        %v2796 = vpop.f32.mrb[0].mxu0
        %2797 = vmatprep.mubr.bf16.mxu0 0
        %2798 = vmatmul.mubr.bf16.gmra.mrb[0].mxu0 %v2695
        %v2799 = vpop.f32.mrb[0].mxu0
        %v2800 = vadd.f32 %v2675, %v2799
        %v2801 = vpop.f32.mrb[0].mxu0
        %v2802 = vpop.f32.mrb[0].mxu0
        %v2803 = vadd.f32 %v2675, %v2802
        %v2804 = vpop.f32.mrb[0].mxu0
        %2805 = vmatprep.mubr.bf16.mxu0 0
        %2806 = vmatmul.mubr.bf16.gmra.mrb[0].mxu0 %v2696
        %v2807 = vpop.f32.mrb[0].mxu0
        %v2808 = vadd.f32 %v2675, %v2807
        %v2809 = vpop.f32.mrb[0].mxu0
        %v2810 = vpop.f32.mrb[0].mxu0
        %v2811 = vadd.f32 %v2675, %v2810
        %v2812 = vpop.f32.mrb[0].mxu0
        %2813 = vdwg.mxu0
        %v2814 = vadd.f32 %v2340, %v2784
        %v2815 = vadd.f32 %v2383, %v2787
        %v2816 = vadd.f32 %v2426, %v2792
        %v2817 = vadd.f32 %v2469, %v2795
        %v2818 = vadd.f32 %v2512, %v2800
        %v2819 = vadd.f32 %v2555, %v2803
        %v2820 = vadd.f32 %v2598, %v2808
        %v2821 = vadd.f32 %v2641, %v2811
        %v2822 = vpack.c.bf16 %v2815, %v2814
        %v2823 = vpack.c.bf16 %v2817, %v2816
        %v2824 = vpack.c.bf16 %v2819, %v2818
        %v2825 = vpack.c.bf16 %v2821, %v2820
        %v2827 = vunpack.i.l.s16 %v2822
        %v2828 = vunpack.i.h.s16 %v2822
        %v2829 = vpack.c.b16 %v2828, %v2827
        %v2830 = vunpack.i.l.s16 %v2829
        %v2831 = vunpack.i.h.s16 %v2829
        %v2832 = vpack.c.b16 %v2831, %v2830
        %v2833 = vunpack.i.l.s16 %v2832
        %v2834 = vunpack.i.h.s16 %v2832
        %v2835 = vpack.c.b16 %v2834, %v2833
        %v2837 = vunpack.i.l.s16 %v2823
        %v2838 = vunpack.i.h.s16 %v2823
        %v2839 = vpack.c.b16 %v2838, %v2837
        %v2840 = vunpack.i.l.s16 %v2839
        %v2841 = vunpack.i.h.s16 %v2839
        %v2842 = vpack.c.b16 %v2841, %v2840
        %v2843 = vunpack.i.l.s16 %v2842
        %v2844 = vunpack.i.h.s16 %v2842
        %v2845 = vpack.c.b16 %v2844, %v2843
        %v2847 = vunpack.i.l.s16 %v2824
        %v2848 = vunpack.i.h.s16 %v2824
        %v2849 = vpack.c.b16 %v2848, %v2847
        %v2850 = vunpack.i.l.s16 %v2849
        %v2851 = vunpack.i.h.s16 %v2849
        %v2852 = vpack.c.b16 %v2851, %v2850
        %v2853 = vunpack.i.l.s16 %v2852
        %v2854 = vunpack.i.h.s16 %v2852
        %v2855 = vpack.c.b16 %v2854, %v2853
        %v2857 = vunpack.i.l.s16 %v2825
        %v2858 = vunpack.i.h.s16 %v2825
        %v2859 = vpack.c.b16 %v2858, %v2857
        %v2860 = vunpack.i.l.s16 %v2859
        %v2861 = vunpack.i.h.s16 %v2859
        %v2862 = vpack.c.b16 %v2861, %v2860
        %v2863 = vunpack.i.l.s16 %v2862
        %v2864 = vunpack.i.h.s16 %v2862
        %v2865 = vpack.c.b16 %v2864, %v2863
        %v2866 = vld [vmem:[%s18] sm:$0xf]
        %v2867 = vld [vmem:[%s18 + $0x4] sm:$0xf]
        %v2870 = vunpack.c.l.b16 %v2866
        %v2871 = vunpack.c.l.b16 %v2867
        %v2872 = vpack.c.b16 %v2871, %v2870
        %v2873 = vcombine.low %v2835, %v2845
        %v2874 = vcombine.high %v2835, %v2845
        %v2875 = vcombine.low %v2855, %v2865
        %v2876 = vcombine.high %v2855, %v2865
        %v2878 = vunpack.c.l.s4 1966171168
        %v2879 = vunpack.c.0.s8 %v2878
        %v2880 = vlaneseq
        %v2881 = vshrl.u32 %v2880, 7
        %v2882 = vsub.s32 %v2879, %v2881
        %v2883 = vrot.slane %v2873, %v2882
        %v2885 = vunpack.c.l.s4 1966171168
        %v2886 = vunpack.c.0.s8 %v2885
        %v2887 = vlaneseq
        %v2888 = vshrl.u32 %v2887, 7
        %v2889 = vsub.s32 %v2886, %v2888
        %v2890 = vrot.slane %v2874, %v2889
        %v2892 = vunpack.c.l.s4 1966171168
        %v2893 = vunpack.c.0.s8 %v2892
        %v2894 = vlaneseq
        %v2895 = vshrl.u32 %v2894, 7
        %v2896 = vsub.s32 %v2893, %v2895
        %v2897 = vrot.slane %v2875, %v2896
        %v2899 = vunpack.c.l.s4 1966171168
        %v2900 = vunpack.c.0.s8 %v2899
        %v2901 = vlaneseq
        %v2902 = vshrl.u32 %v2901, 7
        %v2903 = vsub.s32 %v2900, %v2902
        %v2904 = vrot.slane %v2876, %v2903
        %v2905 = vcombine.low %v2883, %v2897
        %v2906 = vcombine.high %v2883, %v2897
        %v2907 = vcombine.low %v2890, %v2904
        %v2908 = vcombine.high %v2890, %v2904
        %v2910 = vunpack.c.l.s4 1966171168
        %v2911 = vunpack.c.0.s8 %v2910
        %v2912 = vlaneseq
        %v2913 = vshrl.u32 %v2912, 7
        %v2914 = vsub.s32 %v2911, %v2913
        %v2915 = vrot.slane %v2905, %v2914
        %v2917 = vunpack.c.l.s4 1966171168
        %v2918 = vunpack.c.0.s8 %v2917
        %v2919 = vlaneseq
        %v2920 = vshrl.u32 %v2919, 7
        %v2921 = vsub.s32 %v2918, %v2920
        %v2922 = vrot.slane %v2907, %v2921
        %v2924 = vunpack.c.l.s4 1966171168
        %v2925 = vunpack.c.0.s8 %v2924
        %v2926 = vlaneseq
        %v2927 = vshrl.u32 %v2926, 7
        %v2928 = vsub.s32 %v2925, %v2927
        %v2929 = vrot.slane %v2906, %v2928
        %v2931 = vunpack.c.l.s4 1966171168
        %v2932 = vunpack.c.0.s8 %v2931
        %v2933 = vlaneseq
        %v2934 = vshrl.u32 %v2933, 7
        %v2935 = vsub.s32 %v2932, %v2934
        %v2936 = vrot.slane %v2908, %v2935
        %v2937 = vcombine.high %v2915, %v2915
        %v2938 = vcombine.high %v2922, %v2922
        %v2939 = vcombine.high %v2929, %v2929
        %v2940 = vcombine.high %v2936, %v2936
        %v2942 = vsel %vm1543, %v2872, 0
        %v2945 = vsel %vm1547, %v2915, 0
        %v2948 = vsel %vm1547, %v2929, 0
        %v2951 = vsel %vm1547, %v2937, 0
        %v2954 = vsel %vm1547, %v2939, 0
        %v2957 = vsel %vm1547, %v2922, 0
        %v2960 = vsel %vm1547, %v2936, 0
        %v2963 = vsel %vm1547, %v2938, 0
        %v2966 = vsel %vm1547, %v2940, 0
        %2968 = vmatprep.subr.bf16.mxu0 %v2948
        %2969 = vmatpush1.bf16.msra.mxu0 %v2945
        %2970 = vmatprep.subr.bf16.mxu0 0
        %2971 = vmatpush1.bf16.msra.mxu0 0
        %2972 = vmatprep.subr.bf16.mxu0 0
        %2973 = vmatpush1.bf16.msra.mxu0 0
        %2974 = vmatprep.subr.bf16.mxu0 0
        %2975 = vmatpush1.bf16.msra.mxu0 0
        %2976 = vmatprep.subr.bf16.mxu0 0
        %2977 = vmatpush1.bf16.msra.mxu0 0
        %2978 = vmatprep.subr.bf16.mxu0 0
        %2979 = vmatpush1.bf16.msra.mxu0 0
        %2980 = vmatprep.subr.bf16.mxu0 0
        %2981 = vmatpush1.bf16.msra.mxu0 0
        %2982 = vmatprep.subr.bf16.mxu0 0
        %2983 = vmatpush1.bf16.msra.mxu0 0
        %2984 = vmatprep.subr.bf16.mxu0 0
        %2985 = vmatpush1.bf16.msra.mxu0 0
        %2986 = vmatprep.subr.bf16.mxu0 0
        %2987 = vmatpush1.bf16.msra.mxu0 0
        %2988 = vmatprep.subr.bf16.mxu0 0
        %2989 = vmatpush1.bf16.msra.mxu0 0
        %2990 = vmatprep.subr.bf16.mxu0 0
        %2991 = vmatpush1.bf16.msra.mxu0 0
        %2992 = vmatprep.subr.bf16.mxu0 0
        %2993 = vmatpush1.bf16.msra.mxu0 0
        %2994 = vmatprep.subr.bf16.mxu0 0
        %2995 = vmatpush1.bf16.msra.mxu0 0
        %2996 = vmatprep.subr.bf16.mxu0 0
        %2997 = vmatpush1.bf16.msra.mxu0 0
        %2998 = vmatprep.subr.bf16.mxu0 0
        %2999 = vmatpush1.bf16.msra.mxu0 0
        %3000 = vmatprep.mubr.bf16.mxu0 0
        %3001 = vmatmul.mubr.bf16.gmra.mrb[0].mxu0 %v2942
        %v3002 = vpop.f32.mrb[0].mxu0
        %v3003 = vadd.f32 0.0, %v3002
        %v3004 = vpop.f32.mrb[0].mxu0
        %v3005 = vadd.f32 0.0, %v3004
        %v3006 = vpop.f32.mrb[0].mxu0
        %v3007 = vadd.f32 0.0, %v3006
        %v3008 = vpop.f32.mrb[0].mxu0
        %v3009 = vadd.f32 0.0, %v3008
        %3010 = vdwg.mxu0
        %3011 = vmatprep.subr.bf16.mxu0 %v2954
        %3012 = vmatpush1.bf16.msra.mxu0 %v2951
        %3013 = vmatprep.subr.bf16.mxu0 0
        %3014 = vmatpush1.bf16.msra.mxu0 0
        %3015 = vmatprep.subr.bf16.mxu0 0
        %3016 = vmatpush1.bf16.msra.mxu0 0
        %3017 = vmatprep.subr.bf16.mxu0 0
        %3018 = vmatpush1.bf16.msra.mxu0 0
        %3019 = vmatprep.subr.bf16.mxu0 0
        %3020 = vmatpush1.bf16.msra.mxu0 0
        %3021 = vmatprep.subr.bf16.mxu0 0
        %3022 = vmatpush1.bf16.msra.mxu0 0
        %3023 = vmatprep.subr.bf16.mxu0 0
        %3024 = vmatpush1.bf16.msra.mxu0 0
        %3025 = vmatprep.subr.bf16.mxu0 0
        %3026 = vmatpush1.bf16.msra.mxu0 0
        %3027 = vmatprep.subr.bf16.mxu0 0
        %3028 = vmatpush1.bf16.msra.mxu0 0
        %3029 = vmatprep.subr.bf16.mxu0 0
        %3030 = vmatpush1.bf16.msra.mxu0 0
        %3031 = vmatprep.subr.bf16.mxu0 0
        %3032 = vmatpush1.bf16.msra.mxu0 0
        %3033 = vmatprep.subr.bf16.mxu0 0
        %3034 = vmatpush1.bf16.msra.mxu0 0
        %3035 = vmatprep.subr.bf16.mxu0 0
        %3036 = vmatpush1.bf16.msra.mxu0 0
        %3037 = vmatprep.subr.bf16.mxu0 0
        %3038 = vmatpush1.bf16.msra.mxu0 0
        %3039 = vmatprep.subr.bf16.mxu0 0
        %3040 = vmatpush1.bf16.msra.mxu0 0
        %3041 = vmatprep.subr.bf16.mxu0 0
        %3042 = vmatpush1.bf16.msra.mxu0 0
        %3043 = vmatprep.mubr.bf16.mxu0 0
        %3044 = vmatmul.mubr.bf16.gmra.mrb[0].mxu0 %v2942
        %v3045 = vpop.f32.mrb[0].mxu0
        %v3046 = vadd.f32 0.0, %v3045
        %v3047 = vpop.f32.mrb[0].mxu0
        %v3048 = vadd.f32 0.0, %v3047
        %v3049 = vpop.f32.mrb[0].mxu0
        %v3050 = vadd.f32 0.0, %v3049
        %v3051 = vpop.f32.mrb[0].mxu0
        %v3052 = vadd.f32 0.0, %v3051
        %3053 = vdwg.mxu0
        %3054 = vmatprep.subr.bf16.mxu0 %v2960
        %3055 = vmatpush1.bf16.msra.mxu0 %v2957
        %3056 = vmatprep.subr.bf16.mxu0 0
        %3057 = vmatpush1.bf16.msra.mxu0 0
        %3058 = vmatprep.subr.bf16.mxu0 0
        %3059 = vmatpush1.bf16.msra.mxu0 0
        %3060 = vmatprep.subr.bf16.mxu0 0
        %3061 = vmatpush1.bf16.msra.mxu0 0
        %3062 = vmatprep.subr.bf16.mxu0 0
        %3063 = vmatpush1.bf16.msra.mxu0 0
        %3064 = vmatprep.subr.bf16.mxu0 0
        %3065 = vmatpush1.bf16.msra.mxu0 0
        %3066 = vmatprep.subr.bf16.mxu0 0
        %3067 = vmatpush1.bf16.msra.mxu0 0
        %3068 = vmatprep.subr.bf16.mxu0 0
        %3069 = vmatpush1.bf16.msra.mxu0 0
        %3070 = vmatprep.subr.bf16.mxu0 0
        %3071 = vmatpush1.bf16.msra.mxu0 0
        %3072 = vmatprep.subr.bf16.mxu0 0
        %3073 = vmatpush1.bf16.msra.mxu0 0
        %3074 = vmatprep.subr.bf16.mxu0 0
        %3075 = vmatpush1.bf16.msra.mxu0 0
        %3076 = vmatprep.subr.bf16.mxu0 0
        %3077 = vmatpush1.bf16.msra.mxu0 0
        %3078 = vmatprep.subr.bf16.mxu0 0
        %3079 = vmatpush1.bf16.msra.mxu0 0
        %3080 = vmatprep.subr.bf16.mxu0 0
        %3081 = vmatpush1.bf16.msra.mxu0 0
        %3082 = vmatprep.subr.bf16.mxu0 0
        %3083 = vmatpush1.bf16.msra.mxu0 0
        %3084 = vmatprep.subr.bf16.mxu0 0
        %3085 = vmatpush1.bf16.msra.mxu0 0
        %3086 = vmatprep.mubr.bf16.mxu0 0
        %3087 = vmatmul.mubr.bf16.gmra.mrb[0].mxu0 %v2942
        %v3088 = vpop.f32.mrb[0].mxu0
        %v3089 = vadd.f32 0.0, %v3088
        %v3090 = vpop.f32.mrb[0].mxu0
        %v3091 = vadd.f32 0.0, %v3090
        %v3092 = vpop.f32.mrb[0].mxu0
        %v3093 = vadd.f32 0.0, %v3092
        %v3094 = vpop.f32.mrb[0].mxu0
        %v3095 = vadd.f32 0.0, %v3094
        %3096 = vdwg.mxu0
        %3097 = vmatprep.subr.bf16.mxu0 %v2966
        %3098 = vmatpush1.bf16.msra.mxu0 %v2963
        %3099 = vmatprep.subr.bf16.mxu0 0
        %3100 = vmatpush1.bf16.msra.mxu0 0
        %3101 = vmatprep.subr.bf16.mxu0 0
        %3102 = vmatpush1.bf16.msra.mxu0 0
        %3103 = vmatprep.subr.bf16.mxu0 0
        %3104 = vmatpush1.bf16.msra.mxu0 0
        %3105 = vmatprep.subr.bf16.mxu0 0
        %3106 = vmatpush1.bf16.msra.mxu0 0
        %3107 = vmatprep.subr.bf16.mxu0 0
        %3108 = vmatpush1.bf16.msra.mxu0 0
        %3109 = vmatprep.subr.bf16.mxu0 0
        %3110 = vmatpush1.bf16.msra.mxu0 0
        %3111 = vmatprep.subr.bf16.mxu0 0
        %3112 = vmatpush1.bf16.msra.mxu0 0
        %3113 = vmatprep.subr.bf16.mxu0 0
        %3114 = vmatpush1.bf16.msra.mxu0 0
        %3115 = vmatprep.subr.bf16.mxu0 0
        %3116 = vmatpush1.bf16.msra.mxu0 0
        %3117 = vmatprep.subr.bf16.mxu0 0
        %3118 = vmatpush1.bf16.msra.mxu0 0
        %3119 = vmatprep.subr.bf16.mxu0 0
        %3120 = vmatpush1.bf16.msra.mxu0 0
        %3121 = vmatprep.subr.bf16.mxu0 0
        %3122 = vmatpush1.bf16.msra.mxu0 0
        %3123 = vmatprep.subr.bf16.mxu0 0
        %3124 = vmatpush1.bf16.msra.mxu0 0
        %3125 = vmatprep.subr.bf16.mxu0 0
        %3126 = vmatpush1.bf16.msra.mxu0 0
        %3127 = vmatprep.subr.bf16.mxu0 0
        %3128 = vmatpush1.bf16.msra.mxu0 0
        %3129 = vmatprep.mubr.bf16.mxu0 0
        %3130 = vmatmul.mubr.bf16.gmra.mrb[0].mxu0 %v2942
        %v3131 = vpop.f32.mrb[0].mxu0
        %v3132 = vadd.f32 0.0, %v3131
        %v3133 = vpop.f32.mrb[0].mxu0
        %v3134 = vadd.f32 0.0, %v3133
        %v3135 = vpop.f32.mrb[0].mxu0
        %v3136 = vadd.f32 0.0, %v3135
        %v3137 = vpop.f32.mrb[0].mxu0
        %v3138 = vadd.f32 0.0, %v3137
        %3139 = vdwg.mxu0
        %v3140 = vpack.c.bf16 %v3007, %v3003
        %v3141 = vpack.c.bf16 %v3009, %v3005
        %v3142 = vpack.c.bf16 %v3050, %v3046
        %v3143 = vpack.c.bf16 %v3052, %v3048
        %v3144 = vpack.c.bf16 %v3093, %v3089
        %v3145 = vpack.c.bf16 %v3095, %v3091
        %v3146 = vpack.c.bf16 %v3136, %v3132
        %v3147 = vpack.c.bf16 %v3138, %v3134
        %v3150 = vpack.i.b16 %v3141, %v3140
        %v3152 = vshrl.u32 %v3140, 16
        %v3153 = vshrl.u32 %v3141, 16
        %v3154 = vpack.i.b16 %v3153, %v3152
        %v3158 = vpack.i.b16 %v3143, %v3142
        %v3160 = vshrl.u32 %v3142, 16
        %v3161 = vshrl.u32 %v3143, 16
        %v3162 = vpack.i.b16 %v3161, %v3160
        %v3166 = vpack.i.b16 %v3145, %v3144
        %v3168 = vshrl.u32 %v3144, 16
        %v3169 = vshrl.u32 %v3145, 16
        %v3170 = vpack.i.b16 %v3169, %v3168
        %v3174 = vpack.i.b16 %v3147, %v3146
        %v3176 = vshrl.u32 %v3146, 16
        %v3177 = vshrl.u32 %v3147, 16
        %v3178 = vpack.i.b16 %v3177, %v3176
        %v3180 = vcombine.low %v3150, %v3166
        %v3181 = vcombine.high %v3150, %v3166
        %v3183 = vunpack.c.l.s4 1983009808
        %v3184 = vunpack.c.0.s8 %v3183
        %v3185 = vlaneseq
        %v3186 = vshrl.u32 %v3185, 7
        %v3187 = vsub.s32 %v3184, %v3186
        %v3188 = vrot.slane %v3180, %v3187
        %v3190 = vunpack.c.l.s4 1983009808
        %v3191 = vunpack.c.0.s8 %v3190
        %v3192 = vlaneseq
        %v3193 = vshrl.u32 %v3192, 7
        %v3194 = vsub.s32 %v3191, %v3193
        %v3195 = vrot.slane %v3181, %v3194
        %v3196 = vcombine.low %v3158, %v3174
        %v3197 = vcombine.high %v3158, %v3174
        %v3199 = vunpack.c.l.s4 1983009808
        %v3200 = vunpack.c.0.s8 %v3199
        %v3201 = vlaneseq
        %v3202 = vshrl.u32 %v3201, 7
        %v3203 = vsub.s32 %v3200, %v3202
        %v3204 = vrot.slane %v3196, %v3203
        %v3206 = vunpack.c.l.s4 1983009808
        %v3207 = vunpack.c.0.s8 %v3206
        %v3208 = vlaneseq
        %v3209 = vshrl.u32 %v3208, 7
        %v3210 = vsub.s32 %v3207, %v3209
        %v3211 = vrot.slane %v3197, %v3210
        %v3212 = vcombine.low %v3188, %v3204
        %v3213 = vcombine.high %v3188, %v3204
        %v3215 = vunpack.c.l.s4 1934713408
        %v3216 = vunpack.c.0.s8 %v3215
        %v3217 = vlaneseq
        %v3218 = vshrl.u32 %v3217, 7
        %v3219 = vsub.s32 %v3216, %v3218
        %v3220 = vrot.slane %v3212, %v3219
        %v3222 = vunpack.c.l.s4 1934713408
        %v3223 = vunpack.c.0.s8 %v3222
        %v3224 = vlaneseq
        %v3225 = vshrl.u32 %v3224, 7
        %v3226 = vsub.s32 %v3223, %v3225
        %v3227 = vrot.slane %v3213, %v3226
        %v3228 = vcombine.low %v3195, %v3211
        %v3229 = vcombine.high %v3195, %v3211
        %v3231 = vunpack.c.l.s4 1934713408
        %v3232 = vunpack.c.0.s8 %v3231
        %v3233 = vlaneseq
        %v3234 = vshrl.u32 %v3233, 7
        %v3235 = vsub.s32 %v3232, %v3234
        %v3236 = vrot.slane %v3228, %v3235
        %v3238 = vunpack.c.l.s4 1934713408
        %v3239 = vunpack.c.0.s8 %v3238
        %v3240 = vlaneseq
        %v3241 = vshrl.u32 %v3240, 7
        %v3242 = vsub.s32 %v3239, %v3241
        %v3243 = vrot.slane %v3229, %v3242
        %v3244 = vcombine.high %v3220, 0
        %v3245 = vcombine.high %v3227, 0
        %v3246 = vcombine.high %v3236, 0
        %v3247 = vcombine.high %v3243, 0
        %v3248 = vcombine.low %v3154, %v3170
        %v3249 = vcombine.high %v3154, %v3170
        %v3251 = vunpack.c.l.s4 1983009808
        %v3252 = vunpack.c.0.s8 %v3251
        %v3253 = vlaneseq
        %v3254 = vshrl.u32 %v3253, 7
        %v3255 = vsub.s32 %v3252, %v3254
        %v3256 = vrot.slane %v3248, %v3255
        %v3258 = vunpack.c.l.s4 1983009808
        %v3259 = vunpack.c.0.s8 %v3258
        %v3260 = vlaneseq
        %v3261 = vshrl.u32 %v3260, 7
        %v3262 = vsub.s32 %v3259, %v3261
        %v3263 = vrot.slane %v3249, %v3262
        %v3264 = vcombine.low %v3162, %v3178
        %v3265 = vcombine.high %v3162, %v3178
        %v3267 = vunpack.c.l.s4 1983009808
        %v3268 = vunpack.c.0.s8 %v3267
        %v3269 = vlaneseq
        %v3270 = vshrl.u32 %v3269, 7
        %v3271 = vsub.s32 %v3268, %v3270
        %v3272 = vrot.slane %v3264, %v3271
        %v3274 = vunpack.c.l.s4 1983009808
        %v3275 = vunpack.c.0.s8 %v3274
        %v3276 = vlaneseq
        %v3277 = vshrl.u32 %v3276, 7
        %v3278 = vsub.s32 %v3275, %v3277
        %v3279 = vrot.slane %v3265, %v3278
        %v3280 = vcombine.low %v3256, %v3272
        %v3281 = vcombine.high %v3256, %v3272
        %v3283 = vunpack.c.l.s4 1934713408
        %v3284 = vunpack.c.0.s8 %v3283
        %v3285 = vlaneseq
        %v3286 = vshrl.u32 %v3285, 7
        %v3287 = vsub.s32 %v3284, %v3286
        %v3288 = vrot.slane %v3280, %v3287
        %v3290 = vunpack.c.l.s4 1934713408
        %v3291 = vunpack.c.0.s8 %v3290
        %v3292 = vlaneseq
        %v3293 = vshrl.u32 %v3292, 7
        %v3294 = vsub.s32 %v3291, %v3293
        %v3295 = vrot.slane %v3281, %v3294
        %v3296 = vcombine.low %v3263, %v3279
        %v3297 = vcombine.high %v3263, %v3279
        %v3299 = vunpack.c.l.s4 1934713408
        %v3300 = vunpack.c.0.s8 %v3299
        %v3301 = vlaneseq
        %v3302 = vshrl.u32 %v3301, 7
        %v3303 = vsub.s32 %v3300, %v3302
        %v3304 = vrot.slane %v3296, %v3303
        %v3306 = vunpack.c.l.s4 1934713408
        %v3307 = vunpack.c.0.s8 %v3306
        %v3308 = vlaneseq
        %v3309 = vshrl.u32 %v3308, 7
        %v3310 = vsub.s32 %v3307, %v3309
        %v3311 = vrot.slane %v3297, %v3310
        %v3312 = vcombine.high %v3288, 0
        %v3313 = vcombine.high %v3295, 0
        %v3314 = vcombine.high %v3304, 0
        %v3315 = vcombine.high %v3311, 0
        %v3316 = vld [vmem:[%s19] sm:$0xf]
        %v3317 = vld [vmem:[%s19 + $0x4] sm:$0xf]
        %v3320 = vunpack.c.l.b16 %v3316
        %v3321 = vunpack.c.l.b16 %v3317
        %v3322 = vpack.c.b16 %v3321, %v3320
        %v3324 = vsel %vm1543, %v3322, 0
        %v3327 = vsel %vm1547, %v3220, 0
        %3329 = vmatprep.subr.bf16.mxu0 0
        %3330 = vmatpush1.bf16.msra.mxu0 %v3327
        %3331 = vmatprep.subr.bf16.mxu0 0
        %3332 = vmatpush1.bf16.msra.mxu0 0
        %3333 = vmatprep.subr.bf16.mxu0 0
        %3334 = vmatpush1.bf16.msra.mxu0 0
        %3335 = vmatprep.subr.bf16.mxu0 0
        %3336 = vmatpush1.bf16.msra.mxu0 0
        %3337 = vmatprep.subr.bf16.mxu0 0
        %3338 = vmatpush1.bf16.msra.mxu0 0
        %3339 = vmatprep.subr.bf16.mxu0 0
        %3340 = vmatpush1.bf16.msra.mxu0 0
        %3341 = vmatprep.subr.bf16.mxu0 0
        %3342 = vmatpush1.bf16.msra.mxu0 0
        %3343 = vmatprep.subr.bf16.mxu0 0
        %3344 = vmatpush1.bf16.msra.mxu0 0
        %3345 = vmatprep.subr.bf16.mxu0 0
        %3346 = vmatpush1.bf16.msra.mxu0 0
        %3347 = vmatprep.subr.bf16.mxu0 0
        %3348 = vmatpush1.bf16.msra.mxu0 0
        %3349 = vmatprep.subr.bf16.mxu0 0
        %3350 = vmatpush1.bf16.msra.mxu0 0
        %3351 = vmatprep.subr.bf16.mxu0 0
        %3352 = vmatpush1.bf16.msra.mxu0 0
        %3353 = vmatprep.subr.bf16.mxu0 0
        %3354 = vmatpush1.bf16.msra.mxu0 0
        %3355 = vmatprep.subr.bf16.mxu0 0
        %3356 = vmatpush1.bf16.msra.mxu0 0
        %3357 = vmatprep.subr.bf16.mxu0 0
        %3358 = vmatpush1.bf16.msra.mxu0 0
        %3359 = vmatprep.subr.bf16.mxu0 0
        %3360 = vmatpush1.bf16.msra.mxu0 0
        %3361 = vmatprep.mubr.bf16.mxu0 0
        %3362 = vmatmul.mubr.bf16.gmra.mrb[0].mxu0 %v3324
        %v3363 = vpop.f32.mrb[0].mxu0
        %v3364 = vadd.f32 0.0, %v3363
        %v3365 = vpop.f32.mrb[0].mxu0
        %v3366 = vpop.f32.mrb[0].mxu0
        %v3367 = vadd.f32 0.0, %v3366
        %v3368 = vpop.f32.mrb[0].mxu0
        %3369 = vdwg.mxu0
        %v3371 = vsel %vm1547, %v3288, 0
        %3373 = vmatprep.subr.bf16.mxu0 0
        %3374 = vmatpush1.bf16.msra.mxu0 %v3371
        %3375 = vmatprep.subr.bf16.mxu0 0
        %3376 = vmatpush1.bf16.msra.mxu0 0
        %3377 = vmatprep.subr.bf16.mxu0 0
        %3378 = vmatpush1.bf16.msra.mxu0 0
        %3379 = vmatprep.subr.bf16.mxu0 0
        %3380 = vmatpush1.bf16.msra.mxu0 0
        %3381 = vmatprep.subr.bf16.mxu0 0
        %3382 = vmatpush1.bf16.msra.mxu0 0
        %3383 = vmatprep.subr.bf16.mxu0 0
        %3384 = vmatpush1.bf16.msra.mxu0 0
        %3385 = vmatprep.subr.bf16.mxu0 0
        %3386 = vmatpush1.bf16.msra.mxu0 0
        %3387 = vmatprep.subr.bf16.mxu0 0
        %3388 = vmatpush1.bf16.msra.mxu0 0
        %3389 = vmatprep.subr.bf16.mxu0 0
        %3390 = vmatpush1.bf16.msra.mxu0 0
        %3391 = vmatprep.subr.bf16.mxu0 0
        %3392 = vmatpush1.bf16.msra.mxu0 0
        %3393 = vmatprep.subr.bf16.mxu0 0
        %3394 = vmatpush1.bf16.msra.mxu0 0
        %3395 = vmatprep.subr.bf16.mxu0 0
        %3396 = vmatpush1.bf16.msra.mxu0 0
        %3397 = vmatprep.subr.bf16.mxu0 0
        %3398 = vmatpush1.bf16.msra.mxu0 0
        %3399 = vmatprep.subr.bf16.mxu0 0
        %3400 = vmatpush1.bf16.msra.mxu0 0
        %3401 = vmatprep.subr.bf16.mxu0 0
        %3402 = vmatpush1.bf16.msra.mxu0 0
        %3403 = vmatprep.subr.bf16.mxu0 0
        %3404 = vmatpush1.bf16.msra.mxu0 0
        %3405 = vmatprep.mubr.bf16.mxu0 0
        %3406 = vmatmul.mubr.bf16.gmra.mrb[0].mxu0 %v3324
        %v3407 = vpop.f32.mrb[0].mxu0
        %v3408 = vadd.f32 0.0, %v3407
        %v3409 = vpop.f32.mrb[0].mxu0
        %v3410 = vpop.f32.mrb[0].mxu0
        %v3411 = vadd.f32 0.0, %v3410
        %v3412 = vpop.f32.mrb[0].mxu0
        %3413 = vdwg.mxu0
        %v3415 = vsel %vm1547, %v3244, 0
        %3417 = vmatprep.subr.bf16.mxu0 0
        %3418 = vmatpush1.bf16.msra.mxu0 %v3415
        %3419 = vmatprep.subr.bf16.mxu0 0
        %3420 = vmatpush1.bf16.msra.mxu0 0
        %3421 = vmatprep.subr.bf16.mxu0 0
        %3422 = vmatpush1.bf16.msra.mxu0 0
        %3423 = vmatprep.subr.bf16.mxu0 0
        %3424 = vmatpush1.bf16.msra.mxu0 0
        %3425 = vmatprep.subr.bf16.mxu0 0
        %3426 = vmatpush1.bf16.msra.mxu0 0
        %3427 = vmatprep.subr.bf16.mxu0 0
        %3428 = vmatpush1.bf16.msra.mxu0 0
        %3429 = vmatprep.subr.bf16.mxu0 0
        %3430 = vmatpush1.bf16.msra.mxu0 0
        %3431 = vmatprep.subr.bf16.mxu0 0
        %3432 = vmatpush1.bf16.msra.mxu0 0
        %3433 = vmatprep.subr.bf16.mxu0 0
        %3434 = vmatpush1.bf16.msra.mxu0 0
        %3435 = vmatprep.subr.bf16.mxu0 0
        %3436 = vmatpush1.bf16.msra.mxu0 0
        %3437 = vmatprep.subr.bf16.mxu0 0
        %3438 = vmatpush1.bf16.msra.mxu0 0
        %3439 = vmatprep.subr.bf16.mxu0 0
        %3440 = vmatpush1.bf16.msra.mxu0 0
        %3441 = vmatprep.subr.bf16.mxu0 0
        %3442 = vmatpush1.bf16.msra.mxu0 0
        %3443 = vmatprep.subr.bf16.mxu0 0
        %3444 = vmatpush1.bf16.msra.mxu0 0
        %3445 = vmatprep.subr.bf16.mxu0 0
        %3446 = vmatpush1.bf16.msra.mxu0 0
        %3447 = vmatprep.subr.bf16.mxu0 0
        %3448 = vmatpush1.bf16.msra.mxu0 0
        %3449 = vmatprep.mubr.bf16.mxu0 0
        %3450 = vmatmul.mubr.bf16.gmra.mrb[0].mxu0 %v3324
        %v3451 = vpop.f32.mrb[0].mxu0
        %v3452 = vadd.f32 0.0, %v3451
        %v3453 = vpop.f32.mrb[0].mxu0
        %v3454 = vpop.f32.mrb[0].mxu0
        %v3455 = vadd.f32 0.0, %v3454
        %v3456 = vpop.f32.mrb[0].mxu0
        %3457 = vdwg.mxu0
        %v3459 = vsel %vm1547, %v3312, 0
        %3461 = vmatprep.subr.bf16.mxu0 0
        %3462 = vmatpush1.bf16.msra.mxu0 %v3459
        %3463 = vmatprep.subr.bf16.mxu0 0
        %3464 = vmatpush1.bf16.msra.mxu0 0
        %3465 = vmatprep.subr.bf16.mxu0 0
        %3466 = vmatpush1.bf16.msra.mxu0 0
        %3467 = vmatprep.subr.bf16.mxu0 0
        %3468 = vmatpush1.bf16.msra.mxu0 0
        %3469 = vmatprep.subr.bf16.mxu0 0
        %3470 = vmatpush1.bf16.msra.mxu0 0
        %3471 = vmatprep.subr.bf16.mxu0 0
        %3472 = vmatpush1.bf16.msra.mxu0 0
        %3473 = vmatprep.subr.bf16.mxu0 0
        %3474 = vmatpush1.bf16.msra.mxu0 0
        %3475 = vmatprep.subr.bf16.mxu0 0
        %3476 = vmatpush1.bf16.msra.mxu0 0
        %3477 = vmatprep.subr.bf16.mxu0 0
        %3478 = vmatpush1.bf16.msra.mxu0 0
        %3479 = vmatprep.subr.bf16.mxu0 0
        %3480 = vmatpush1.bf16.msra.mxu0 0
        %3481 = vmatprep.subr.bf16.mxu0 0
        %3482 = vmatpush1.bf16.msra.mxu0 0
        %3483 = vmatprep.subr.bf16.mxu0 0
        %3484 = vmatpush1.bf16.msra.mxu0 0
        %3485 = vmatprep.subr.bf16.mxu0 0
        %3486 = vmatpush1.bf16.msra.mxu0 0
        %3487 = vmatprep.subr.bf16.mxu0 0
        %3488 = vmatpush1.bf16.msra.mxu0 0
        %3489 = vmatprep.subr.bf16.mxu0 0
        %3490 = vmatpush1.bf16.msra.mxu0 0
        %3491 = vmatprep.subr.bf16.mxu0 0
        %3492 = vmatpush1.bf16.msra.mxu0 0
        %3493 = vmatprep.mubr.bf16.mxu0 0
        %3494 = vmatmul.mubr.bf16.gmra.mrb[0].mxu0 %v3324
        %v3495 = vpop.f32.mrb[0].mxu0
        %v3496 = vadd.f32 0.0, %v3495
        %v3497 = vpop.f32.mrb[0].mxu0
        %v3498 = vpop.f32.mrb[0].mxu0
        %v3499 = vadd.f32 0.0, %v3498
        %v3500 = vpop.f32.mrb[0].mxu0
        %3501 = vdwg.mxu0
        %v3503 = vsel %vm1547, %v3227, 0
        %3505 = vmatprep.subr.bf16.mxu0 0
        %3506 = vmatpush1.bf16.msra.mxu0 %v3503
        %3507 = vmatprep.subr.bf16.mxu0 0
        %3508 = vmatpush1.bf16.msra.mxu0 0
        %3509 = vmatprep.subr.bf16.mxu0 0
        %3510 = vmatpush1.bf16.msra.mxu0 0
        %3511 = vmatprep.subr.bf16.mxu0 0
        %3512 = vmatpush1.bf16.msra.mxu0 0
        %3513 = vmatprep.subr.bf16.mxu0 0
        %3514 = vmatpush1.bf16.msra.mxu0 0
        %3515 = vmatprep.subr.bf16.mxu0 0
        %3516 = vmatpush1.bf16.msra.mxu0 0
        %3517 = vmatprep.subr.bf16.mxu0 0
        %3518 = vmatpush1.bf16.msra.mxu0 0
        %3519 = vmatprep.subr.bf16.mxu0 0
        %3520 = vmatpush1.bf16.msra.mxu0 0
        %3521 = vmatprep.subr.bf16.mxu0 0
        %3522 = vmatpush1.bf16.msra.mxu0 0
        %3523 = vmatprep.subr.bf16.mxu0 0
        %3524 = vmatpush1.bf16.msra.mxu0 0
        %3525 = vmatprep.subr.bf16.mxu0 0
        %3526 = vmatpush1.bf16.msra.mxu0 0
        %3527 = vmatprep.subr.bf16.mxu0 0
        %3528 = vmatpush1.bf16.msra.mxu0 0
        %3529 = vmatprep.subr.bf16.mxu0 0
        %3530 = vmatpush1.bf16.msra.mxu0 0
        %3531 = vmatprep.subr.bf16.mxu0 0
        %3532 = vmatpush1.bf16.msra.mxu0 0
        %3533 = vmatprep.subr.bf16.mxu0 0
        %3534 = vmatpush1.bf16.msra.mxu0 0
        %3535 = vmatprep.subr.bf16.mxu0 0
        %3536 = vmatpush1.bf16.msra.mxu0 0
        %3537 = vmatprep.mubr.bf16.mxu0 0
        %3538 = vmatmul.mubr.bf16.gmra.mrb[0].mxu0 %v3324
        %v3539 = vpop.f32.mrb[0].mxu0
        %v3540 = vadd.f32 0.0, %v3539
        %v3541 = vpop.f32.mrb[0].mxu0
        %v3542 = vpop.f32.mrb[0].mxu0
        %v3543 = vadd.f32 0.0, %v3542
        %v3544 = vpop.f32.mrb[0].mxu0
        %3545 = vdwg.mxu0
        %v3547 = vsel %vm1547, %v3295, 0
        %3549 = vmatprep.subr.bf16.mxu0 0
        %3550 = vmatpush1.bf16.msra.mxu0 %v3547
        %3551 = vmatprep.subr.bf16.mxu0 0
        %3552 = vmatpush1.bf16.msra.mxu0 0
        %3553 = vmatprep.subr.bf16.mxu0 0
        %3554 = vmatpush1.bf16.msra.mxu0 0
        %3555 = vmatprep.subr.bf16.mxu0 0
        %3556 = vmatpush1.bf16.msra.mxu0 0
        %3557 = vmatprep.subr.bf16.mxu0 0
        %3558 = vmatpush1.bf16.msra.mxu0 0
        %3559 = vmatprep.subr.bf16.mxu0 0
        %3560 = vmatpush1.bf16.msra.mxu0 0
        %3561 = vmatprep.subr.bf16.mxu0 0
        %3562 = vmatpush1.bf16.msra.mxu0 0
        %3563 = vmatprep.subr.bf16.mxu0 0
        %3564 = vmatpush1.bf16.msra.mxu0 0
        %3565 = vmatprep.subr.bf16.mxu0 0
        %3566 = vmatpush1.bf16.msra.mxu0 0
        %3567 = vmatprep.subr.bf16.mxu0 0
        %3568 = vmatpush1.bf16.msra.mxu0 0
        %3569 = vmatprep.subr.bf16.mxu0 0
        %3570 = vmatpush1.bf16.msra.mxu0 0
        %3571 = vmatprep.subr.bf16.mxu0 0
        %3572 = vmatpush1.bf16.msra.mxu0 0
        %3573 = vmatprep.subr.bf16.mxu0 0
        %3574 = vmatpush1.bf16.msra.mxu0 0
        %3575 = vmatprep.subr.bf16.mxu0 0
        %3576 = vmatpush1.bf16.msra.mxu0 0
        %3577 = vmatprep.subr.bf16.mxu0 0
        %3578 = vmatpush1.bf16.msra.mxu0 0
        %3579 = vmatprep.subr.bf16.mxu0 0
        %3580 = vmatpush1.bf16.msra.mxu0 0
        %3581 = vmatprep.mubr.bf16.mxu0 0
        %3582 = vmatmul.mubr.bf16.gmra.mrb[0].mxu0 %v3324
        %v3583 = vpop.f32.mrb[0].mxu0
        %v3584 = vadd.f32 0.0, %v3583
        %v3585 = vpop.f32.mrb[0].mxu0
        %v3586 = vpop.f32.mrb[0].mxu0
        %v3587 = vadd.f32 0.0, %v3586
        %v3588 = vpop.f32.mrb[0].mxu0
        %3589 = vdwg.mxu0
        %v3591 = vsel %vm1547, %v3245, 0
        %3593 = vmatprep.subr.bf16.mxu0 0
        %3594 = vmatpush1.bf16.msra.mxu0 %v3591
        %3595 = vmatprep.subr.bf16.mxu0 0
        %3596 = vmatpush1.bf16.msra.mxu0 0
        %3597 = vmatprep.subr.bf16.mxu0 0
        %3598 = vmatpush1.bf16.msra.mxu0 0
        %3599 = vmatprep.subr.bf16.mxu0 0
        %3600 = vmatpush1.bf16.msra.mxu0 0
        %3601 = vmatprep.subr.bf16.mxu0 0
        %3602 = vmatpush1.bf16.msra.mxu0 0
        %3603 = vmatprep.subr.bf16.mxu0 0
        %3604 = vmatpush1.bf16.msra.mxu0 0
        %3605 = vmatprep.subr.bf16.mxu0 0
        %3606 = vmatpush1.bf16.msra.mxu0 0
        %3607 = vmatprep.subr.bf16.mxu0 0
        %3608 = vmatpush1.bf16.msra.mxu0 0
        %3609 = vmatprep.subr.bf16.mxu0 0
        %3610 = vmatpush1.bf16.msra.mxu0 0
        %3611 = vmatprep.subr.bf16.mxu0 0
        %3612 = vmatpush1.bf16.msra.mxu0 0
        %3613 = vmatprep.subr.bf16.mxu0 0
        %3614 = vmatpush1.bf16.msra.mxu0 0
        %3615 = vmatprep.subr.bf16.mxu0 0
        %3616 = vmatpush1.bf16.msra.mxu0 0
        %3617 = vmatprep.subr.bf16.mxu0 0
        %3618 = vmatpush1.bf16.msra.mxu0 0
        %3619 = vmatprep.subr.bf16.mxu0 0
        %3620 = vmatpush1.bf16.msra.mxu0 0
        %3621 = vmatprep.subr.bf16.mxu0 0
        %3622 = vmatpush1.bf16.msra.mxu0 0
        %3623 = vmatprep.subr.bf16.mxu0 0
        %3624 = vmatpush1.bf16.msra.mxu0 0
        %3625 = vmatprep.mubr.bf16.mxu0 0
        %3626 = vmatmul.mubr.bf16.gmra.mrb[0].mxu0 %v3324
        %v3627 = vpop.f32.mrb[0].mxu0
        %v3628 = vadd.f32 0.0, %v3627
        %v3629 = vpop.f32.mrb[0].mxu0
        %v3630 = vpop.f32.mrb[0].mxu0
        %v3631 = vadd.f32 0.0, %v3630
        %v3632 = vpop.f32.mrb[0].mxu0
        %3633 = vdwg.mxu0
        %v3635 = vsel %vm1547, %v3313, 0
        %3637 = vmatprep.subr.bf16.mxu0 0
        %3638 = vmatpush1.bf16.msra.mxu0 %v3635
        %3639 = vmatprep.subr.bf16.mxu0 0
        %3640 = vmatpush1.bf16.msra.mxu0 0
        %3641 = vmatprep.subr.bf16.mxu0 0
        %3642 = vmatpush1.bf16.msra.mxu0 0
        %3643 = vmatprep.subr.bf16.mxu0 0
        %3644 = vmatpush1.bf16.msra.mxu0 0
        %3645 = vmatprep.subr.bf16.mxu0 0
        %3646 = vmatpush1.bf16.msra.mxu0 0
        %3647 = vmatprep.subr.bf16.mxu0 0
        %3648 = vmatpush1.bf16.msra.mxu0 0
        %3649 = vmatprep.subr.bf16.mxu0 0
        %3650 = vmatpush1.bf16.msra.mxu0 0
        %3651 = vmatprep.subr.bf16.mxu0 0
        %3652 = vmatpush1.bf16.msra.mxu0 0
        %3653 = vmatprep.subr.bf16.mxu0 0
        %3654 = vmatpush1.bf16.msra.mxu0 0
        %3655 = vmatprep.subr.bf16.mxu0 0
        %3656 = vmatpush1.bf16.msra.mxu0 0
        %3657 = vmatprep.subr.bf16.mxu0 0
        %3658 = vmatpush1.bf16.msra.mxu0 0
        %3659 = vmatprep.subr.bf16.mxu0 0
        %3660 = vmatpush1.bf16.msra.mxu0 0
        %3661 = vmatprep.subr.bf16.mxu0 0
        %3662 = vmatpush1.bf16.msra.mxu0 0
        %3663 = vmatprep.subr.bf16.mxu0 0
        %3664 = vmatpush1.bf16.msra.mxu0 0
        %3665 = vmatprep.subr.bf16.mxu0 0
        %3666 = vmatpush1.bf16.msra.mxu0 0
        %3667 = vmatprep.subr.bf16.mxu0 0
        %3668 = vmatpush1.bf16.msra.mxu0 0
        %3669 = vmatprep.mubr.bf16.mxu0 0
        %3670 = vmatmul.mubr.bf16.gmra.mrb[0].mxu0 %v3324
        %v3671 = vpop.f32.mrb[0].mxu0
        %v3672 = vadd.f32 0.0, %v3671
        %v3673 = vpop.f32.mrb[0].mxu0
        %v3674 = vpop.f32.mrb[0].mxu0
        %v3675 = vadd.f32 0.0, %v3674
        %v3676 = vpop.f32.mrb[0].mxu0
        %3677 = vdwg.mxu0
        %v3679 = vsel %vm1547, %v3236, 0
        %3681 = vmatprep.subr.bf16.mxu0 0
        %3682 = vmatpush1.bf16.msra.mxu0 %v3679
        %3683 = vmatprep.subr.bf16.mxu0 0
        %3684 = vmatpush1.bf16.msra.mxu0 0
        %3685 = vmatprep.subr.bf16.mxu0 0
        %3686 = vmatpush1.bf16.msra.mxu0 0
        %3687 = vmatprep.subr.bf16.mxu0 0
        %3688 = vmatpush1.bf16.msra.mxu0 0
        %3689 = vmatprep.subr.bf16.mxu0 0
        %3690 = vmatpush1.bf16.msra.mxu0 0
        %3691 = vmatprep.subr.bf16.mxu0 0
        %3692 = vmatpush1.bf16.msra.mxu0 0
        %3693 = vmatprep.subr.bf16.mxu0 0
        %3694 = vmatpush1.bf16.msra.mxu0 0
        %3695 = vmatprep.subr.bf16.mxu0 0
        %3696 = vmatpush1.bf16.msra.mxu0 0
        %3697 = vmatprep.subr.bf16.mxu0 0
        %3698 = vmatpush1.bf16.msra.mxu0 0
        %3699 = vmatprep.subr.bf16.mxu0 0
        %3700 = vmatpush1.bf16.msra.mxu0 0
        %3701 = vmatprep.subr.bf16.mxu0 0
        %3702 = vmatpush1.bf16.msra.mxu0 0
        %3703 = vmatprep.subr.bf16.mxu0 0
        %3704 = vmatpush1.bf16.msra.mxu0 0
        %3705 = vmatprep.subr.bf16.mxu0 0
        %3706 = vmatpush1.bf16.msra.mxu0 0
        %3707 = vmatprep.subr.bf16.mxu0 0
        %3708 = vmatpush1.bf16.msra.mxu0 0
        %3709 = vmatprep.subr.bf16.mxu0 0
        %3710 = vmatpush1.bf16.msra.mxu0 0
        %3711 = vmatprep.subr.bf16.mxu0 0
        %3712 = vmatpush1.bf16.msra.mxu0 0
        %3713 = vmatprep.mubr.bf16.mxu0 0
        %3714 = vmatmul.mubr.bf16.gmra.mrb[0].mxu0 %v3324
        %v3715 = vpop.f32.mrb[0].mxu0
        %v3716 = vadd.f32 0.0, %v3715
        %v3717 = vpop.f32.mrb[0].mxu0
        %v3718 = vpop.f32.mrb[0].mxu0
        %v3719 = vadd.f32 0.0, %v3718
        %v3720 = vpop.f32.mrb[0].mxu0
        %3721 = vdwg.mxu0
        %v3723 = vsel %vm1547, %v3304, 0
        %3725 = vmatprep.subr.bf16.mxu0 0
        %3726 = vmatpush1.bf16.msra.mxu0 %v3723
        %3727 = vmatprep.subr.bf16.mxu0 0
        %3728 = vmatpush1.bf16.msra.mxu0 0
        %3729 = vmatprep.subr.bf16.mxu0 0
        %3730 = vmatpush1.bf16.msra.mxu0 0
        %3731 = vmatprep.subr.bf16.mxu0 0
        %3732 = vmatpush1.bf16.msra.mxu0 0
        %3733 = vmatprep.subr.bf16.mxu0 0
        %3734 = vmatpush1.bf16.msra.mxu0 0
        %3735 = vmatprep.subr.bf16.mxu0 0
        %3736 = vmatpush1.bf16.msra.mxu0 0
        %3737 = vmatprep.subr.bf16.mxu0 0
        %3738 = vmatpush1.bf16.msra.mxu0 0
        %3739 = vmatprep.subr.bf16.mxu0 0
        %3740 = vmatpush1.bf16.msra.mxu0 0
        %3741 = vmatprep.subr.bf16.mxu0 0
        %3742 = vmatpush1.bf16.msra.mxu0 0
        %3743 = vmatprep.subr.bf16.mxu0 0
        %3744 = vmatpush1.bf16.msra.mxu0 0
        %3745 = vmatprep.subr.bf16.mxu0 0
        %3746 = vmatpush1.bf16.msra.mxu0 0
        %3747 = vmatprep.subr.bf16.mxu0 0
        %3748 = vmatpush1.bf16.msra.mxu0 0
        %3749 = vmatprep.subr.bf16.mxu0 0
        %3750 = vmatpush1.bf16.msra.mxu0 0
        %3751 = vmatprep.subr.bf16.mxu0 0
        %3752 = vmatpush1.bf16.msra.mxu0 0
        %3753 = vmatprep.subr.bf16.mxu0 0
        %3754 = vmatpush1.bf16.msra.mxu0 0
        %3755 = vmatprep.subr.bf16.mxu0 0
        %3756 = vmatpush1.bf16.msra.mxu0 0
        %3757 = vmatprep.mubr.bf16.mxu0 0
        %3758 = vmatmul.mubr.bf16.gmra.mrb[0].mxu0 %v3324
        %v3759 = vpop.f32.mrb[0].mxu0
        %v3760 = vadd.f32 0.0, %v3759
        %v3761 = vpop.f32.mrb[0].mxu0
        %v3762 = vpop.f32.mrb[0].mxu0
        %v3763 = vadd.f32 0.0, %v3762
        %v3764 = vpop.f32.mrb[0].mxu0
        %3765 = vdwg.mxu0
        %v3767 = vsel %vm1547, %v3246, 0
        %3769 = vmatprep.subr.bf16.mxu0 0
        %3770 = vmatpush1.bf16.msra.mxu0 %v3767
        %3771 = vmatprep.subr.bf16.mxu0 0
        %3772 = vmatpush1.bf16.msra.mxu0 0
        %3773 = vmatprep.subr.bf16.mxu0 0
        %3774 = vmatpush1.bf16.msra.mxu0 0
        %3775 = vmatprep.subr.bf16.mxu0 0
        %3776 = vmatpush1.bf16.msra.mxu0 0
        %3777 = vmatprep.subr.bf16.mxu0 0
        %3778 = vmatpush1.bf16.msra.mxu0 0
        %3779 = vmatprep.subr.bf16.mxu0 0
        %3780 = vmatpush1.bf16.msra.mxu0 0
        %3781 = vmatprep.subr.bf16.mxu0 0
        %3782 = vmatpush1.bf16.msra.mxu0 0
        %3783 = vmatprep.subr.bf16.mxu0 0
        %3784 = vmatpush1.bf16.msra.mxu0 0
        %3785 = vmatprep.subr.bf16.mxu0 0
        %3786 = vmatpush1.bf16.msra.mxu0 0
        %3787 = vmatprep.subr.bf16.mxu0 0
        %3788 = vmatpush1.bf16.msra.mxu0 0
        %3789 = vmatprep.subr.bf16.mxu0 0
        %3790 = vmatpush1.bf16.msra.mxu0 0
        %3791 = vmatprep.subr.bf16.mxu0 0
        %3792 = vmatpush1.bf16.msra.mxu0 0
        %3793 = vmatprep.subr.bf16.mxu0 0
        %3794 = vmatpush1.bf16.msra.mxu0 0
        %3795 = vmatprep.subr.bf16.mxu0 0
        %3796 = vmatpush1.bf16.msra.mxu0 0
        %3797 = vmatprep.subr.bf16.mxu0 0
        %3798 = vmatpush1.bf16.msra.mxu0 0
        %3799 = vmatprep.subr.bf16.mxu0 0
        %3800 = vmatpush1.bf16.msra.mxu0 0
        %3801 = vmatprep.mubr.bf16.mxu0 0
        %3802 = vmatmul.mubr.bf16.gmra.mrb[0].mxu0 %v3324
        %v3803 = vpop.f32.mrb[0].mxu0
        %v3804 = vadd.f32 0.0, %v3803
        %v3805 = vpop.f32.mrb[0].mxu0
        %v3806 = vpop.f32.mrb[0].mxu0
        %v3807 = vadd.f32 0.0, %v3806
        %v3808 = vpop.f32.mrb[0].mxu0
        %3809 = vdwg.mxu0
        %v3811 = vsel %vm1547, %v3314, 0
        %3813 = vmatprep.subr.bf16.mxu0 0
        %3814 = vmatpush1.bf16.msra.mxu0 %v3811
        %3815 = vmatprep.subr.bf16.mxu0 0
        %3816 = vmatpush1.bf16.msra.mxu0 0
        %3817 = vmatprep.subr.bf16.mxu0 0
        %3818 = vmatpush1.bf16.msra.mxu0 0
        %3819 = vmatprep.subr.bf16.mxu0 0
        %3820 = vmatpush1.bf16.msra.mxu0 0
        %3821 = vmatprep.subr.bf16.mxu0 0
        %3822 = vmatpush1.bf16.msra.mxu0 0
        %3823 = vmatprep.subr.bf16.mxu0 0
        %3824 = vmatpush1.bf16.msra.mxu0 0
        %3825 = vmatprep.subr.bf16.mxu0 0
        %3826 = vmatpush1.bf16.msra.mxu0 0
        %3827 = vmatprep.subr.bf16.mxu0 0
        %3828 = vmatpush1.bf16.msra.mxu0 0
        %3829 = vmatprep.subr.bf16.mxu0 0
        %3830 = vmatpush1.bf16.msra.mxu0 0
        %3831 = vmatprep.subr.bf16.mxu0 0
        %3832 = vmatpush1.bf16.msra.mxu0 0
        %3833 = vmatprep.subr.bf16.mxu0 0
        %3834 = vmatpush1.bf16.msra.mxu0 0
        %3835 = vmatprep.subr.bf16.mxu0 0
        %3836 = vmatpush1.bf16.msra.mxu0 0
        %3837 = vmatprep.subr.bf16.mxu0 0
        %3838 = vmatpush1.bf16.msra.mxu0 0
        %3839 = vmatprep.subr.bf16.mxu0 0
        %3840 = vmatpush1.bf16.msra.mxu0 0
        %3841 = vmatprep.subr.bf16.mxu0 0
        %3842 = vmatpush1.bf16.msra.mxu0 0
        %3843 = vmatprep.subr.bf16.mxu0 0
        %3844 = vmatpush1.bf16.msra.mxu0 0
        %3845 = vmatprep.mubr.bf16.mxu0 0
        %3846 = vmatmul.mubr.bf16.gmra.mrb[0].mxu0 %v3324
        %v3847 = vpop.f32.mrb[0].mxu0
        %v3848 = vadd.f32 0.0, %v3847
        %v3849 = vpop.f32.mrb[0].mxu0
        %v3850 = vpop.f32.mrb[0].mxu0
        %v3851 = vadd.f32 0.0, %v3850
        %v3852 = vpop.f32.mrb[0].mxu0
        %3853 = vdwg.mxu0
        %v3855 = vsel %vm1547, %v3243, 0
        %3857 = vmatprep.subr.bf16.mxu0 0
        %3858 = vmatpush1.bf16.msra.mxu0 %v3855
        %3859 = vmatprep.subr.bf16.mxu0 0
        %3860 = vmatpush1.bf16.msra.mxu0 0
        %3861 = vmatprep.subr.bf16.mxu0 0
        %3862 = vmatpush1.bf16.msra.mxu0 0
        %3863 = vmatprep.subr.bf16.mxu0 0
        %3864 = vmatpush1.bf16.msra.mxu0 0
        %3865 = vmatprep.subr.bf16.mxu0 0
        %3866 = vmatpush1.bf16.msra.mxu0 0
        %3867 = vmatprep.subr.bf16.mxu0 0
        %3868 = vmatpush1.bf16.msra.mxu0 0
        %3869 = vmatprep.subr.bf16.mxu0 0
        %3870 = vmatpush1.bf16.msra.mxu0 0
        %3871 = vmatprep.subr.bf16.mxu0 0
        %3872 = vmatpush1.bf16.msra.mxu0 0
        %3873 = vmatprep.subr.bf16.mxu0 0
        %3874 = vmatpush1.bf16.msra.mxu0 0
        %3875 = vmatprep.subr.bf16.mxu0 0
        %3876 = vmatpush1.bf16.msra.mxu0 0
        %3877 = vmatprep.subr.bf16.mxu0 0
        %3878 = vmatpush1.bf16.msra.mxu0 0
        %3879 = vmatprep.subr.bf16.mxu0 0
        %3880 = vmatpush1.bf16.msra.mxu0 0
        %3881 = vmatprep.subr.bf16.mxu0 0
        %3882 = vmatpush1.bf16.msra.mxu0 0
        %3883 = vmatprep.subr.bf16.mxu0 0
        %3884 = vmatpush1.bf16.msra.mxu0 0
        %3885 = vmatprep.subr.bf16.mxu0 0
        %3886 = vmatpush1.bf16.msra.mxu0 0
        %3887 = vmatprep.subr.bf16.mxu0 0
        %3888 = vmatpush1.bf16.msra.mxu0 0
        %3889 = vmatprep.mubr.bf16.mxu0 0
        %3890 = vmatmul.mubr.bf16.gmra.mrb[0].mxu0 %v3324
        %v3891 = vpop.f32.mrb[0].mxu0
        %v3892 = vadd.f32 0.0, %v3891
        %v3893 = vpop.f32.mrb[0].mxu0
        %v3894 = vpop.f32.mrb[0].mxu0
        %v3895 = vadd.f32 0.0, %v3894
        %v3896 = vpop.f32.mrb[0].mxu0
        %3897 = vdwg.mxu0
        %v3899 = vsel %vm1547, %v3311, 0
        %3901 = vmatprep.subr.bf16.mxu0 0
        %3902 = vmatpush1.bf16.msra.mxu0 %v3899
        %3903 = vmatprep.subr.bf16.mxu0 0
        %3904 = vmatpush1.bf16.msra.mxu0 0
        %3905 = vmatprep.subr.bf16.mxu0 0
        %3906 = vmatpush1.bf16.msra.mxu0 0
        %3907 = vmatprep.subr.bf16.mxu0 0
        %3908 = vmatpush1.bf16.msra.mxu0 0
        %3909 = vmatprep.subr.bf16.mxu0 0
        %3910 = vmatpush1.bf16.msra.mxu0 0
        %3911 = vmatprep.subr.bf16.mxu0 0
        %3912 = vmatpush1.bf16.msra.mxu0 0
        %3913 = vmatprep.subr.bf16.mxu0 0
        %3914 = vmatpush1.bf16.msra.mxu0 0
        %3915 = vmatprep.subr.bf16.mxu0 0
        %3916 = vmatpush1.bf16.msra.mxu0 0
        %3917 = vmatprep.subr.bf16.mxu0 0
        %3918 = vmatpush1.bf16.msra.mxu0 0
        %3919 = vmatprep.subr.bf16.mxu0 0
        %3920 = vmatpush1.bf16.msra.mxu0 0
        %3921 = vmatprep.subr.bf16.mxu0 0
        %3922 = vmatpush1.bf16.msra.mxu0 0
        %3923 = vmatprep.subr.bf16.mxu0 0
        %3924 = vmatpush1.bf16.msra.mxu0 0
        %3925 = vmatprep.subr.bf16.mxu0 0
        %3926 = vmatpush1.bf16.msra.mxu0 0
        %3927 = vmatprep.subr.bf16.mxu0 0
        %3928 = vmatpush1.bf16.msra.mxu0 0
        %3929 = vmatprep.subr.bf16.mxu0 0
        %3930 = vmatpush1.bf16.msra.mxu0 0
        %3931 = vmatprep.subr.bf16.mxu0 0
        %3932 = vmatpush1.bf16.msra.mxu0 0
        %3933 = vmatprep.mubr.bf16.mxu0 0
        %3934 = vmatmul.mubr.bf16.gmra.mrb[0].mxu0 %v3324
        %v3935 = vpop.f32.mrb[0].mxu0
        %v3936 = vadd.f32 0.0, %v3935
        %v3937 = vpop.f32.mrb[0].mxu0
        %v3938 = vpop.f32.mrb[0].mxu0
        %v3939 = vadd.f32 0.0, %v3938
        %v3940 = vpop.f32.mrb[0].mxu0
        %3941 = vdwg.mxu0
        %v3943 = vsel %vm1547, %v3247, 0
        %3945 = vmatprep.subr.bf16.mxu0 0
        %3946 = vmatpush1.bf16.msra.mxu0 %v3943
        %3947 = vmatprep.subr.bf16.mxu0 0
        %3948 = vmatpush1.bf16.msra.mxu0 0
        %3949 = vmatprep.subr.bf16.mxu0 0
        %3950 = vmatpush1.bf16.msra.mxu0 0
        %3951 = vmatprep.subr.bf16.mxu0 0
        %3952 = vmatpush1.bf16.msra.mxu0 0
        %3953 = vmatprep.subr.bf16.mxu0 0
        %3954 = vmatpush1.bf16.msra.mxu0 0
        %3955 = vmatprep.subr.bf16.mxu0 0
        %3956 = vmatpush1.bf16.msra.mxu0 0
        %3957 = vmatprep.subr.bf16.mxu0 0
        %3958 = vmatpush1.bf16.msra.mxu0 0
        %3959 = vmatprep.subr.bf16.mxu0 0
        %3960 = vmatpush1.bf16.msra.mxu0 0
        %3961 = vmatprep.subr.bf16.mxu0 0
        %3962 = vmatpush1.bf16.msra.mxu0 0
        %3963 = vmatprep.subr.bf16.mxu0 0
        %3964 = vmatpush1.bf16.msra.mxu0 0
        %3965 = vmatprep.subr.bf16.mxu0 0
        %3966 = vmatpush1.bf16.msra.mxu0 0
        %3967 = vmatprep.subr.bf16.mxu0 0
        %3968 = vmatpush1.bf16.msra.mxu0 0
        %3969 = vmatprep.subr.bf16.mxu0 0
        %3970 = vmatpush1.bf16.msra.mxu0 0
        %3971 = vmatprep.subr.bf16.mxu0 0
        %3972 = vmatpush1.bf16.msra.mxu0 0
        %3973 = vmatprep.subr.bf16.mxu0 0
        %3974 = vmatpush1.bf16.msra.mxu0 0
        %3975 = vmatprep.subr.bf16.mxu0 0
        %3976 = vmatpush1.bf16.msra.mxu0 0
        %3977 = vmatprep.mubr.bf16.mxu0 0
        %3978 = vmatmul.mubr.bf16.gmra.mrb[0].mxu0 %v3324
        %v3979 = vpop.f32.mrb[0].mxu0
        %v3980 = vadd.f32 0.0, %v3979
        %v3981 = vpop.f32.mrb[0].mxu0
        %v3982 = vpop.f32.mrb[0].mxu0
        %v3983 = vadd.f32 0.0, %v3982
        %v3984 = vpop.f32.mrb[0].mxu0
        %3985 = vdwg.mxu0
        %v3987 = vsel %vm1547, %v3315, 0
        %3989 = vmatprep.subr.bf16.mxu0 0
        %3990 = vmatpush1.bf16.msra.mxu0 %v3987
        %3991 = vmatprep.subr.bf16.mxu0 0
        %3992 = vmatpush1.bf16.msra.mxu0 0
        %3993 = vmatprep.subr.bf16.mxu0 0
        %3994 = vmatpush1.bf16.msra.mxu0 0
        %3995 = vmatprep.subr.bf16.mxu0 0
        %3996 = vmatpush1.bf16.msra.mxu0 0
        %3997 = vmatprep.subr.bf16.mxu0 0
        %3998 = vmatpush1.bf16.msra.mxu0 0
        %3999 = vmatprep.subr.bf16.mxu0 0
        %4000 = vmatpush1.bf16.msra.mxu0 0
        %4001 = vmatprep.subr.bf16.mxu0 0
        %4002 = vmatpush1.bf16.msra.mxu0 0
        %4003 = vmatprep.subr.bf16.mxu0 0
        %4004 = vmatpush1.bf16.msra.mxu0 0
        %4005 = vmatprep.subr.bf16.mxu0 0
        %4006 = vmatpush1.bf16.msra.mxu0 0
        %4007 = vmatprep.subr.bf16.mxu0 0
        %4008 = vmatpush1.bf16.msra.mxu0 0
        %4009 = vmatprep.subr.bf16.mxu0 0
        %4010 = vmatpush1.bf16.msra.mxu0 0
        %4011 = vmatprep.subr.bf16.mxu0 0
        %4012 = vmatpush1.bf16.msra.mxu0 0
        %4013 = vmatprep.subr.bf16.mxu0 0
        %4014 = vmatpush1.bf16.msra.mxu0 0
        %4015 = vmatprep.subr.bf16.mxu0 0
        %4016 = vmatpush1.bf16.msra.mxu0 0
        %4017 = vmatprep.subr.bf16.mxu0 0
        %4018 = vmatpush1.bf16.msra.mxu0 0
        %4019 = vmatprep.subr.bf16.mxu0 0
        %4020 = vmatpush1.bf16.msra.mxu0 0
        %4021 = vmatprep.mubr.bf16.mxu0 0
        %4022 = vmatmul.mubr.bf16.gmra.mrb[0].mxu0 %v3324
        %v4023 = vpop.f32.mrb[0].mxu0
        %v4024 = vadd.f32 0.0, %v4023
        %v4025 = vpop.f32.mrb[0].mxu0
        %v4026 = vpop.f32.mrb[0].mxu0
        %v4027 = vadd.f32 0.0, %v4026
        %v4028 = vpop.f32.mrb[0].mxu0
        %4029 = vdwg.mxu0
        %v4030 = vld [vmem:[%s847] sm:$0xf]
        %v4031 = vld [vmem:[%s847 + $0x4] sm:$0xf]
        %v4032 = vld [vmem:[%s847 + $0x8] sm:$0xf]
        %v4033 = vld [vmem:[%s847 + $0xc] sm:$0xf]
        %v4034 = vld [vmem:[%s847 + $0x10] sm:$0xf]
        %v4035 = vld [vmem:[%s847 + $0x14] sm:$0xf]
        %v4036 = vld [vmem:[%s847 + $0x18] sm:$0xf]
        %v4037 = vld [vmem:[%s847 + $0x1c] sm:$0xf]
        %v4038 = vld [vmem:[%s847 + $0x20] sm:$0xf]
        %v4039 = vld [vmem:[%s847 + $0x24] sm:$0xf]
        %v4040 = vld [vmem:[%s847 + $0x28] sm:$0xf]
        %v4041 = vld [vmem:[%s847 + $0x2c] sm:$0xf]
        %v4042 = vld [vmem:[%s847 + $0x30] sm:$0xf]
        %v4043 = vld [vmem:[%s847 + $0x34] sm:$0xf]
        %v4044 = vld [vmem:[%s847 + $0x38] sm:$0xf]
        %v4045 = vld [vmem:[%s847 + $0x3c] sm:$0xf]
        %v4046 = vld [vmem:[%s847 + $0x40] sm:$0xf]
        %v4047 = vld [vmem:[%s847 + $0x44] sm:$0xf]
        %v4048 = vld [vmem:[%s847 + $0x48] sm:$0xf]
        %v4049 = vld [vmem:[%s847 + $0x4c] sm:$0xf]
        %v4050 = vld [vmem:[%s847 + $0x50] sm:$0xf]
        %v4051 = vld [vmem:[%s847 + $0x54] sm:$0xf]
        %v4052 = vld [vmem:[%s847 + $0x58] sm:$0xf]
        %v4053 = vld [vmem:[%s847 + $0x5c] sm:$0xf]
        %v4054 = vld [vmem:[%s847 + $0x60] sm:$0xf]
        %v4055 = vld [vmem:[%s847 + $0x64] sm:$0xf]
        %v4056 = vld [vmem:[%s847 + $0x68] sm:$0xf]
        %v4057 = vld [vmem:[%s847 + $0x6c] sm:$0xf]
        %v4058 = vld [vmem:[%s847 + $0x70] sm:$0xf]
        %v4059 = vld [vmem:[%s847 + $0x74] sm:$0xf]
        %v4060 = vld [vmem:[%s847 + $0x78] sm:$0xf]
        %v4061 = vld [vmem:[%s847 + $0x7c] sm:$0xf]
        %v4062 = vld [vmem:[#allocation13] sm:$0xf]
        %v4063 = vld [vmem:[#allocation13 + $0x4] sm:$0xf]
        %v4064 = vld [vmem:[#allocation13 + $0x8] sm:$0xf]
        %v4065 = vld [vmem:[#allocation13 + $0xc] sm:$0xf]
        %v4066 = vld [vmem:[#allocation13 + $0x10] sm:$0xf]
        %v4067 = vld [vmem:[#allocation13 + $0x14] sm:$0xf]
        %v4068 = vld [vmem:[#allocation13 + $0x18] sm:$0xf]
        %v4069 = vld [vmem:[#allocation13 + $0x1c] sm:$0xf]
        %v4070 = vld [vmem:[#allocation14] sm:$0x1]
        %v4072 = vlaneseq
        %v4073 = vshrl.u32 %v4072, 7
        %v4074 = vsub.s32 0, %v4073
        %v4075 = vrot.slane %v4070, %v4074
        %v4109 = vunpack.c.l.b16 %v4030
        %v4110 = vunpack.c.l.b16 %v4031
        %v4111 = vunpack.c.l.b16 %v4032
        %v4112 = vunpack.c.l.b16 %v4033
        %v4113 = vunpack.c.l.b16 %v4034
        %v4114 = vunpack.c.l.b16 %v4035
        %v4115 = vunpack.c.l.b16 %v4036
        %v4116 = vunpack.c.l.b16 %v4037
        %v4117 = vunpack.c.l.b16 %v4038
        %v4118 = vunpack.c.l.b16 %v4039
        %v4119 = vunpack.c.l.b16 %v4040
        %v4120 = vunpack.c.l.b16 %v4041
        %v4121 = vunpack.c.l.b16 %v4042
        %v4122 = vunpack.c.l.b16 %v4043
        %v4123 = vunpack.c.l.b16 %v4044
        %v4124 = vunpack.c.l.b16 %v4045
        %v4125 = vunpack.c.l.b16 %v4046
        %v4126 = vunpack.c.l.b16 %v4047
        %v4127 = vunpack.c.l.b16 %v4048
        %v4128 = vunpack.c.l.b16 %v4049
        %v4129 = vunpack.c.l.b16 %v4050
        %v4130 = vunpack.c.l.b16 %v4051
        %v4131 = vunpack.c.l.b16 %v4052
        %v4132 = vunpack.c.l.b16 %v4053
        %v4133 = vunpack.c.l.b16 %v4054
        %v4134 = vunpack.c.l.b16 %v4055
        %v4135 = vunpack.c.l.b16 %v4056
        %v4136 = vunpack.c.l.b16 %v4057
        %v4137 = vunpack.c.l.b16 %v4058
        %v4138 = vunpack.c.l.b16 %v4059
        %v4139 = vunpack.c.l.b16 %v4060
        %v4140 = vunpack.c.l.b16 %v4061
        %v4141 = vpack.c.b16 %v4110, %v4109
        %v4142 = vpack.c.b16 %v4112, %v4111
        %v4143 = vpack.c.b16 %v4114, %v4113
        %v4144 = vpack.c.b16 %v4116, %v4115
        %v4145 = vpack.c.b16 %v4118, %v4117
        %v4146 = vpack.c.b16 %v4120, %v4119
        %v4147 = vpack.c.b16 %v4122, %v4121
        %v4148 = vpack.c.b16 %v4124, %v4123
        %v4149 = vpack.c.b16 %v4126, %v4125
        %v4150 = vpack.c.b16 %v4128, %v4127
        %v4151 = vpack.c.b16 %v4130, %v4129
        %v4152 = vpack.c.b16 %v4132, %v4131
        %v4153 = vpack.c.b16 %v4134, %v4133
        %v4154 = vpack.c.b16 %v4136, %v4135
        %v4155 = vpack.c.b16 %v4138, %v4137
        %v4156 = vpack.c.b16 %v4140, %v4139
        %v4165 = vunpack.c.l.b16 %v4062
        %v4166 = vunpack.c.l.b16 %v4063
        %v4167 = vunpack.c.l.b16 %v4064
        %v4168 = vunpack.c.l.b16 %v4065
        %v4169 = vunpack.c.l.b16 %v4066
        %v4170 = vunpack.c.l.b16 %v4067
        %v4171 = vunpack.c.l.b16 %v4068
        %v4172 = vunpack.c.l.b16 %v4069
        %v4173 = vpack.c.b16 %v4166, %v4165
        %v4174 = vpack.c.b16 %v4168, %v4167
        %v4175 = vpack.c.b16 %v4170, %v4169
        %v4176 = vpack.c.b16 %v4172, %v4171
        %vm4181 = vcmask 523264
        %v4183 = vsel %vm4181, %v4141, 0
        %v4186 = vsel %vm4181, %v4142, 0
        %v4189 = vsel %vm4181, %v4143, 0
        %v4192 = vsel %vm4181, %v4144, 0
        %v4195 = vsel %vm4181, %v4145, 0
        %v4198 = vsel %vm4181, %v4146, 0
        %v4201 = vsel %vm4181, %v4147, 0
        %v4204 = vsel %vm4181, %v4148, 0
        %v4207 = vsel %vm4181, %v4149, 0
        %v4210 = vsel %vm4181, %v4150, 0
        %v4213 = vsel %vm4181, %v4151, 0
        %v4216 = vsel %vm4181, %v4152, 0
        %v4219 = vsel %vm4181, %v4153, 0
        %v4222 = vsel %vm4181, %v4154, 0
        %v4225 = vsel %vm4181, %v4155, 0
        %v4228 = vsel %vm4181, %v4156, 0
        %4230 = vmatprep.subr.bf16.mxu0 0
        %4231 = vmatpush1.bf16.msra.mxu0 %v4173
        %4232 = vmatprep.subr.bf16.mxu0 0
        %4233 = vmatpush1.bf16.msra.mxu0 %v4174
        %4234 = vmatprep.subr.bf16.mxu0 0
        %4235 = vmatpush1.bf16.msra.mxu0 %v4175
        %4236 = vmatprep.subr.bf16.mxu0 0
        %4237 = vmatpush1.bf16.msra.mxu0 %v4176
        %4238 = vmatprep.subr.bf16.mxu0 0
        %4239 = vmatpush1.bf16.msra.mxu0 0
        %4240 = vmatprep.subr.bf16.mxu0 0
        %4241 = vmatpush1.bf16.msra.mxu0 0
        %4242 = vmatprep.subr.bf16.mxu0 0
        %4243 = vmatpush1.bf16.msra.mxu0 0
        %4244 = vmatprep.subr.bf16.mxu0 0
        %4245 = vmatpush1.bf16.msra.mxu0 0
        %4246 = vmatprep.subr.bf16.mxu0 0
        %4247 = vmatpush1.bf16.msra.mxu0 0
        %4248 = vmatprep.subr.bf16.mxu0 0
        %4249 = vmatpush1.bf16.msra.mxu0 0
        %4250 = vmatprep.subr.bf16.mxu0 0
        %4251 = vmatpush1.bf16.msra.mxu0 0
        %4252 = vmatprep.subr.bf16.mxu0 0
        %4253 = vmatpush1.bf16.msra.mxu0 0
        %4254 = vmatprep.subr.bf16.mxu0 0
        %4255 = vmatpush1.bf16.msra.mxu0 0
        %4256 = vmatprep.subr.bf16.mxu0 0
        %4257 = vmatpush1.bf16.msra.mxu0 0
        %4258 = vmatprep.subr.bf16.mxu0 0
        %4259 = vmatpush1.bf16.msra.mxu0 0
        %4260 = vmatprep.subr.bf16.mxu0 0
        %4261 = vmatpush1.bf16.msra.mxu0 0
        %4262 = vmatprep.mubr.bf16.mxu0 0
        %4263 = vmatmul.mubr.bf16.gmra.mrb[0].mxu0 %v4183
        %v4264 = vpop.f32.mrb[0].mxu0
        %v4265 = vadd.f32 %v4075, %v4264
        %v4266 = vpop.f32.mrb[0].mxu0
        %v4267 = vpop.f32.mrb[0].mxu0
        %v4268 = vadd.f32 %v4075, %v4267
        %v4269 = vpop.f32.mrb[0].mxu0
        %4270 = vmatprep.mubr.bf16.mxu0 0
        %4271 = vmatmul.mubr.bf16.gmra.mrb[0].mxu0 %v4186
        %v4272 = vpop.f32.mrb[0].mxu0
        %v4273 = vadd.f32 %v4075, %v4272
        %v4274 = vpop.f32.mrb[0].mxu0
        %v4275 = vpop.f32.mrb[0].mxu0
        %v4276 = vadd.f32 %v4075, %v4275
        %v4277 = vpop.f32.mrb[0].mxu0
        %4278 = vmatprep.mubr.bf16.mxu0 0
        %4279 = vmatmul.mubr.bf16.gmra.mrb[0].mxu0 %v4189
        %v4280 = vpop.f32.mrb[0].mxu0
        %v4281 = vadd.f32 %v4075, %v4280
        %v4282 = vpop.f32.mrb[0].mxu0
        %v4283 = vpop.f32.mrb[0].mxu0
        %v4284 = vadd.f32 %v4075, %v4283
        %v4285 = vpop.f32.mrb[0].mxu0
        %4286 = vmatprep.mubr.bf16.mxu0 0
        %4287 = vmatmul.mubr.bf16.gmra.mrb[0].mxu0 %v4192
        %v4288 = vpop.f32.mrb[0].mxu0
        %v4289 = vadd.f32 %v4075, %v4288
        %v4290 = vpop.f32.mrb[0].mxu0
        %v4291 = vpop.f32.mrb[0].mxu0
        %v4292 = vadd.f32 %v4075, %v4291
        %v4293 = vpop.f32.mrb[0].mxu0
        %4294 = vmatprep.mubr.bf16.mxu0 0
        %4295 = vmatmul.mubr.bf16.gmra.mrb[0].mxu0 %v4195
        %v4296 = vpop.f32.mrb[0].mxu0
        %v4297 = vadd.f32 %v4075, %v4296
        %v4298 = vpop.f32.mrb[0].mxu0
        %v4299 = vpop.f32.mrb[0].mxu0
        %v4300 = vadd.f32 %v4075, %v4299
        %v4301 = vpop.f32.mrb[0].mxu0
        %4302 = vmatprep.mubr.bf16.mxu0 0
        %4303 = vmatmul.mubr.bf16.gmra.mrb[0].mxu0 %v4198
        %v4304 = vpop.f32.mrb[0].mxu0
        %v4305 = vadd.f32 %v4075, %v4304
        %v4306 = vpop.f32.mrb[0].mxu0
        %v4307 = vpop.f32.mrb[0].mxu0
        %v4308 = vadd.f32 %v4075, %v4307
        %v4309 = vpop.f32.mrb[0].mxu0
        %4310 = vmatprep.mubr.bf16.mxu0 0
        %4311 = vmatmul.mubr.bf16.gmra.mrb[0].mxu0 %v4201
        %v4312 = vpop.f32.mrb[0].mxu0
        %v4313 = vadd.f32 %v4075, %v4312
        %v4314 = vpop.f32.mrb[0].mxu0
        %v4315 = vpop.f32.mrb[0].mxu0
        %v4316 = vadd.f32 %v4075, %v4315
        %v4317 = vpop.f32.mrb[0].mxu0
        %4318 = vmatprep.mubr.bf16.mxu0 0
        %4319 = vmatmul.mubr.bf16.gmra.mrb[0].mxu0 %v4204
        %v4320 = vpop.f32.mrb[0].mxu0
        %v4321 = vadd.f32 %v4075, %v4320
        %v4322 = vpop.f32.mrb[0].mxu0
        %v4323 = vpop.f32.mrb[0].mxu0
        %v4324 = vadd.f32 %v4075, %v4323
        %v4325 = vpop.f32.mrb[0].mxu0
        %4326 = vmatprep.mubr.bf16.mxu0 0
        %4327 = vmatmul.mubr.bf16.gmra.mrb[0].mxu0 %v4207
        %v4328 = vpop.f32.mrb[0].mxu0
        %v4329 = vadd.f32 %v4075, %v4328
        %v4330 = vpop.f32.mrb[0].mxu0
        %v4331 = vpop.f32.mrb[0].mxu0
        %v4332 = vadd.f32 %v4075, %v4331
        %v4333 = vpop.f32.mrb[0].mxu0
        %4334 = vmatprep.mubr.bf16.mxu0 0
        %4335 = vmatmul.mubr.bf16.gmra.mrb[0].mxu0 %v4210
        %v4336 = vpop.f32.mrb[0].mxu0
        %v4337 = vadd.f32 %v4075, %v4336
        %v4338 = vpop.f32.mrb[0].mxu0
        %v4339 = vpop.f32.mrb[0].mxu0
        %v4340 = vadd.f32 %v4075, %v4339
        %v4341 = vpop.f32.mrb[0].mxu0
        %4342 = vmatprep.mubr.bf16.mxu0 0
        %4343 = vmatmul.mubr.bf16.gmra.mrb[0].mxu0 %v4213
        %v4344 = vpop.f32.mrb[0].mxu0
        %v4345 = vadd.f32 %v4075, %v4344
        %v4346 = vpop.f32.mrb[0].mxu0
        %v4347 = vpop.f32.mrb[0].mxu0
        %v4348 = vadd.f32 %v4075, %v4347
        %v4349 = vpop.f32.mrb[0].mxu0
        %4350 = vmatprep.mubr.bf16.mxu0 0
        %4351 = vmatmul.mubr.bf16.gmra.mrb[0].mxu0 %v4216
        %v4352 = vpop.f32.mrb[0].mxu0
        %v4353 = vadd.f32 %v4075, %v4352
        %v4354 = vpop.f32.mrb[0].mxu0
        %v4355 = vpop.f32.mrb[0].mxu0
        %v4356 = vadd.f32 %v4075, %v4355
        %v4357 = vpop.f32.mrb[0].mxu0
        %4358 = vmatprep.mubr.bf16.mxu0 0
        %4359 = vmatmul.mubr.bf16.gmra.mrb[0].mxu0 %v4219
        %v4360 = vpop.f32.mrb[0].mxu0
        %v4361 = vadd.f32 %v4075, %v4360
        %v4362 = vpop.f32.mrb[0].mxu0
        %v4363 = vpop.f32.mrb[0].mxu0
        %v4364 = vadd.f32 %v4075, %v4363
        %v4365 = vpop.f32.mrb[0].mxu0
        %4366 = vmatprep.mubr.bf16.mxu0 0
        %4367 = vmatmul.mubr.bf16.gmra.mrb[0].mxu0 %v4222
        %v4368 = vpop.f32.mrb[0].mxu0
        %v4369 = vadd.f32 %v4075, %v4368
        %v4370 = vpop.f32.mrb[0].mxu0
        %v4371 = vpop.f32.mrb[0].mxu0
        %v4372 = vadd.f32 %v4075, %v4371
        %v4373 = vpop.f32.mrb[0].mxu0
        %4374 = vmatprep.mubr.bf16.mxu0 0
        %4375 = vmatmul.mubr.bf16.gmra.mrb[0].mxu0 %v4225
        %v4376 = vpop.f32.mrb[0].mxu0
        %v4377 = vadd.f32 %v4075, %v4376
        %v4378 = vpop.f32.mrb[0].mxu0
        %v4379 = vpop.f32.mrb[0].mxu0
        %v4380 = vadd.f32 %v4075, %v4379
        %v4381 = vpop.f32.mrb[0].mxu0
        %4382 = vmatprep.mubr.bf16.mxu0 0
        %4383 = vmatmul.mubr.bf16.gmra.mrb[0].mxu0 %v4228
        %v4384 = vpop.f32.mrb[0].mxu0
        %v4385 = vadd.f32 %v4075, %v4384
        %v4386 = vpop.f32.mrb[0].mxu0
        %v4387 = vpop.f32.mrb[0].mxu0
        %v4388 = vadd.f32 %v4075, %v4387
        %v4389 = vpop.f32.mrb[0].mxu0
        %4390 = vdwg.mxu0
        %v4391 = vadd.f32 %v3364, %v4265
        %v4392 = vadd.f32 %v3367, %v4268
        %v4393 = vadd.f32 %v3408, %v4273
        %v4394 = vadd.f32 %v3411, %v4276
        %v4395 = vadd.f32 %v3452, %v4281
        %v4396 = vadd.f32 %v3455, %v4284
        %v4397 = vadd.f32 %v3496, %v4289
        %v4398 = vadd.f32 %v3499, %v4292
        %v4399 = vadd.f32 %v3540, %v4297
        %v4400 = vadd.f32 %v3543, %v4300
        %v4401 = vadd.f32 %v3584, %v4305
        %v4402 = vadd.f32 %v3587, %v4308
        %v4403 = vadd.f32 %v3628, %v4313
        %v4404 = vadd.f32 %v3631, %v4316
        %v4405 = vadd.f32 %v3672, %v4321
        %v4406 = vadd.f32 %v3675, %v4324
        %v4407 = vadd.f32 %v3716, %v4329
        %v4408 = vadd.f32 %v3719, %v4332
        %v4409 = vadd.f32 %v3760, %v4337
        %v4410 = vadd.f32 %v3763, %v4340
        %v4411 = vadd.f32 %v3804, %v4345
        %v4412 = vadd.f32 %v3807, %v4348
        %v4413 = vadd.f32 %v3848, %v4353
        %v4414 = vadd.f32 %v3851, %v4356
        %v4415 = vadd.f32 %v3892, %v4361
        %v4416 = vadd.f32 %v3895, %v4364
        %v4417 = vadd.f32 %v3936, %v4369
        %v4418 = vadd.f32 %v3939, %v4372
        %v4419 = vadd.f32 %v3980, %v4377
        %v4420 = vadd.f32 %v3983, %v4380
        %v4421 = vadd.f32 %v4024, %v4385
        %v4422 = vadd.f32 %v4027, %v4388
        %v4423 = vpack.c.bf16 %v4392, %v4391
        %v4424 = vpack.c.bf16 %v4394, %v4393
        %v4425 = vpack.c.bf16 %v4396, %v4395
        %v4426 = vpack.c.bf16 %v4398, %v4397
        %v4427 = vpack.c.bf16 %v4400, %v4399
        %v4428 = vpack.c.bf16 %v4402, %v4401
        %v4429 = vpack.c.bf16 %v4404, %v4403
        %v4430 = vpack.c.bf16 %v4406, %v4405
        %v4431 = vpack.c.bf16 %v4408, %v4407
        %v4432 = vpack.c.bf16 %v4410, %v4409
        %v4433 = vpack.c.bf16 %v4412, %v4411
        %v4434 = vpack.c.bf16 %v4414, %v4413
        %v4435 = vpack.c.bf16 %v4416, %v4415
        %v4436 = vpack.c.bf16 %v4418, %v4417
        %v4437 = vpack.c.bf16 %v4420, %v4419
        %v4438 = vpack.c.bf16 %v4422, %v4421
        %v4455 = vunpack.c.l.b16 %v4423
        %v4456 = vunpack.c.h.b16 %v4423
        %v4457 = vunpack.c.l.b16 %v4424
        %v4458 = vunpack.c.h.b16 %v4424
        %v4459 = vunpack.c.l.b16 %v4425
        %v4460 = vunpack.c.h.b16 %v4425
        %v4461 = vunpack.c.l.b16 %v4426
        %v4462 = vunpack.c.h.b16 %v4426
        %v4463 = vunpack.c.l.b16 %v4427
        %v4464 = vunpack.c.h.b16 %v4427
        %v4465 = vunpack.c.l.b16 %v4428
        %v4466 = vunpack.c.h.b16 %v4428
        %v4467 = vunpack.c.l.b16 %v4429
        %v4468 = vunpack.c.h.b16 %v4429
        %v4469 = vunpack.c.l.b16 %v4430
        %v4470 = vunpack.c.h.b16 %v4430
        %v4471 = vunpack.c.l.b16 %v4431
        %v4472 = vunpack.c.h.b16 %v4431
        %v4473 = vunpack.c.l.b16 %v4432
        %v4474 = vunpack.c.h.b16 %v4432
        %v4475 = vunpack.c.l.b16 %v4433
        %v4476 = vunpack.c.h.b16 %v4433
        %v4477 = vunpack.c.l.b16 %v4434
        %v4478 = vunpack.c.h.b16 %v4434
        %v4479 = vunpack.c.l.b16 %v4435
        %v4480 = vunpack.c.h.b16 %v4435
        %v4481 = vunpack.c.l.b16 %v4436
        %v4482 = vunpack.c.h.b16 %v4436
        %v4483 = vunpack.c.l.b16 %v4437
        %v4484 = vunpack.c.h.b16 %v4437
        %v4485 = vunpack.c.l.b16 %v4438
        %v4486 = vunpack.c.h.b16 %v4438
        %v4487 = vpack.c.b16 %v4455, %v4455
        %v4488 = vpack.c.b16 %v4456, %v4456
        %v4489 = vpack.c.b16 %v4457, %v4457
        %v4490 = vpack.c.b16 %v4458, %v4458
        %v4491 = vpack.c.b16 %v4459, %v4459
        %v4492 = vpack.c.b16 %v4460, %v4460
        %v4493 = vpack.c.b16 %v4461, %v4461
        %v4494 = vpack.c.b16 %v4462, %v4462
        %v4495 = vpack.c.b16 %v4463, %v4463
        %v4496 = vpack.c.b16 %v4464, %v4464
        %v4497 = vpack.c.b16 %v4465, %v4465
        %v4498 = vpack.c.b16 %v4466, %v4466
        %v4499 = vpack.c.b16 %v4467, %v4467
        %v4500 = vpack.c.b16 %v4468, %v4468
        %v4501 = vpack.c.b16 %v4469, %v4469
        %v4502 = vpack.c.b16 %v4470, %v4470
        %v4503 = vpack.c.b16 %v4471, %v4471
        %v4504 = vpack.c.b16 %v4472, %v4472
        %v4505 = vpack.c.b16 %v4473, %v4473
        %v4506 = vpack.c.b16 %v4474, %v4474
        %v4507 = vpack.c.b16 %v4475, %v4475
        %v4508 = vpack.c.b16 %v4476, %v4476
        %v4509 = vpack.c.b16 %v4477, %v4477
        %v4510 = vpack.c.b16 %v4478, %v4478
        %v4511 = vpack.c.b16 %v4479, %v4479
        %v4512 = vpack.c.b16 %v4480, %v4480
        %v4513 = vpack.c.b16 %v4481, %v4481
        %v4514 = vpack.c.b16 %v4482, %v4482
        %v4515 = vpack.c.b16 %v4483, %v4483
        %v4516 = vpack.c.b16 %v4484, %v4484
        %v4517 = vpack.c.b16 %v4485, %v4485
        %v4518 = vpack.c.b16 %v4486, %v4486
        %4551 = vst [vmem:[%s835] sm:$0xf] %v4487
        %4552 = vst [vmem:[%s835 + $0x4] sm:$0xf] %v4488
        %4553 = vst [vmem:[%s835 + $0x8] sm:$0xf] %v4489
        %4554 = vst [vmem:[%s835 + $0xc] sm:$0xf] %v4490
        %4555 = vst [vmem:[%s835 + $0x10] sm:$0xf] %v4491
        %4556 = vst [vmem:[%s835 + $0x14] sm:$0xf] %v4492
        %4557 = vst [vmem:[%s835 + $0x18] sm:$0xf] %v4493
        %4558 = vst [vmem:[%s835 + $0x1c] sm:$0xf] %v4494
        %4559 = vst [vmem:[%s835 + $0x20] sm:$0xf] %v4495
        %4560 = vst [vmem:[%s835 + $0x24] sm:$0xf] %v4496
        %4561 = vst [vmem:[%s835 + $0x28] sm:$0xf] %v4497
        %4562 = vst [vmem:[%s835 + $0x2c] sm:$0xf] %v4498
        %4563 = vst [vmem:[%s835 + $0x30] sm:$0xf] %v4499
        %4564 = vst [vmem:[%s835 + $0x34] sm:$0xf] %v4500
        %4565 = vst [vmem:[%s835 + $0x38] sm:$0xf] %v4501
        %4566 = vst [vmem:[%s835 + $0x3c] sm:$0xf] %v4502
        %4567 = vst [vmem:[%s835 + $0x40] sm:$0xf] %v4503
        %4568 = vst [vmem:[%s835 + $0x44] sm:$0xf] %v4504
        %4569 = vst [vmem:[%s835 + $0x48] sm:$0xf] %v4505
        %4570 = vst [vmem:[%s835 + $0x4c] sm:$0xf] %v4506
        %4571 = vst [vmem:[%s835 + $0x50] sm:$0xf] %v4507
        %4572 = vst [vmem:[%s835 + $0x54] sm:$0xf] %v4508
        %4573 = vst [vmem:[%s835 + $0x58] sm:$0xf] %v4509
        %4574 = vst [vmem:[%s835 + $0x5c] sm:$0xf] %v4510
        %4575 = vst [vmem:[%s835 + $0x60] sm:$0xf] %v4511
        %4576 = vst [vmem:[%s835 + $0x64] sm:$0xf] %v4512
        %4577 = vst [vmem:[%s835 + $0x68] sm:$0xf] %v4513
        %4578 = vst [vmem:[%s835 + $0x6c] sm:$0xf] %v4514
        %4579 = vst [vmem:[%s835 + $0x70] sm:$0xf] %v4515
        %4580 = vst [vmem:[%s835 + $0x74] sm:$0xf] %v4516
        %4581 = vst [vmem:[%s835 + $0x78] sm:$0xf] %v4517
        %4582 = vst [vmem:[%s835 + $0x7c] sm:$0xf] %v4518
        %v4583 = vld [vmem:[%s12] sm:$0xf]
        %v4584 = vld [vmem:[%s13] sm:$0xff]
        %4586 = vset.pattern.permute.xlu0 0
        %4587 = vperm.xlu0 %4586, %v4584
        %v4588 = vpop.permute.xlu0 %4587
        %4590 = vmatprep.subr.bf16.mxu0 0
        %4591 = vmatpush1.bf16.xpose.msra.mxu0 %v4423
        %4592 = vmatprep.subr.bf16.mxu0 0
        %4593 = vmatpush1.bf16.xpose.msra.mxu0 %v4424
        %4594 = vmatprep.subr.bf16.mxu0 0
        %4595 = vmatpush1.bf16.xpose.msra.mxu0 %v4425
        %4596 = vmatprep.subr.bf16.mxu0 0
        %4597 = vmatpush1.bf16.xpose.msra.mxu0 %v4426
        %4598 = vmatprep.subr.bf16.mxu0 0
        %4599 = vmatpush1.bf16.xpose.msra.mxu0 %v4427
        %4600 = vmatprep.subr.bf16.mxu0 0
        %4601 = vmatpush1.bf16.xpose.msra.mxu0 %v4428
        %4602 = vmatprep.subr.bf16.mxu0 0
        %4603 = vmatpush1.bf16.xpose.msra.mxu0 %v4429
        %4604 = vmatprep.subr.bf16.mxu0 0
        %4605 = vmatpush1.bf16.xpose.msra.mxu0 %v4430
        %4606 = vmatprep.subr.bf16.mxu0 0
        %4607 = vmatpush1.bf16.xpose.msra.mxu0 %v4431
        %4608 = vmatprep.subr.bf16.mxu0 0
        %4609 = vmatpush1.bf16.xpose.msra.mxu0 %v4432
        %4610 = vmatprep.subr.bf16.mxu0 0
        %4611 = vmatpush1.bf16.xpose.msra.mxu0 %v4433
        %4612 = vmatprep.subr.bf16.mxu0 0
        %4613 = vmatpush1.bf16.xpose.msra.mxu0 %v4434
        %4614 = vmatprep.subr.bf16.mxu0 0
        %4615 = vmatpush1.bf16.xpose.msra.mxu0 %v4435
        %4616 = vmatprep.subr.bf16.mxu0 0
        %4617 = vmatpush1.bf16.xpose.msra.mxu0 %v4436
        %4618 = vmatprep.subr.bf16.mxu0 0
        %4619 = vmatpush1.bf16.xpose.msra.mxu0 %v4437
        %4620 = vmatprep.subr.bf16.mxu0 0
        %4621 = vmatpush1.bf16.xpose.msra.mxu0 %v4438
        %4622 = vmatprep.mubr.bf16.mxu0 0
        %4623 = vmatmul.mubr.bf16.gmra.mrb[0].mxu0 %v4583
        %v4624 = vpop.f32.mrb[0].mxu0
        %v4625 = vadd.f32 %v4588, %v4624
        %v4626 = vpop.f32.mrb[0].mxu0
        %v4627 = vadd.f32 %v4588, %v4626
        %v4628 = vpop.f32.mrb[0].mxu0
        %v4629 = vpop.f32.mrb[0].mxu0
        %4630 = vdwg.mxu0
        %4631 = vst [vmem:[%s842] sm:$0xff] %v4625
        %4632 = vst [vmem:[%s842 + $0x8] sm:$0xff] %v4627
        %s4633 = sand.u32 %s496, 1
        %s4634 = scalar_lea.sflag [#allocation4], %s4633
        %s4635 = sand.u32 %s496, 1
        %s4636 = smul.addr %s4635, 128
        %s4637 = scalar_lea.vmem [#allocation16], %s4636
        %s4638 = sand.u32 %s522, 1
        %s4639 = scalar_lea.sflag [#allocation18], %s4638
        %s4640 = sand.u32 %s522, 1
        %s4641 = smul.addr %s4640, 16
        %s4642 = scalar_lea.vmem [#allocation17], %s4641
        // Predicated region
        $region133: #{tpu_custom_call.1} parent=99 // pred_check
          %p4643 = pneg %p506
        $region134: #{tpu_custom_call.1} parent=99 // pred_check_branch
          %4645 = sbr.rel (%p4643) target = $region136
        $region135: #{tpu_custom_call.1} parent=99 // pred_region
          %s4647 = ssub.s32 2048, 2048
          %4648 = vsyncadd %s4634, %s4647
          %s4649 = smul.addr %s48, 32
          %s4650 = smul.addr %s4649, 64
          %s4651 = scalar_lea.hbm %s20, %s4650
          %s4652 = sshll.u32 %s4637, 4
          %s4653 = int_to_ptr.vmem [resolvable:$true] %s4652
          %4658 = dma.vmem_to_hbm [thread:$0]  %s4653, 2048, %s4651, %s4634, 64, 64, 4
        $region136: #{tpu_custom_call.1} parent=99 // pred_fallthru
          _
        // Predicated region
        $region137: #{tpu_custom_call.1} parent=99 // pred_check
          %p4659 = pneg %p532
        $region138: #{tpu_custom_call.1} parent=99 // pred_check_branch
          %4661 = sbr.rel (%p4659) target = $region140
        $region139: #{tpu_custom_call.1} parent=99 // pred_region
          %s4663 = ssub.s32 256, 256
          %4664 = vsyncadd %s4639, %s4663
          %s4665 = smul.addr %s48, 2
          %s4666 = smul.addr %s4665, 128
          %s4667 = scalar_lea.hbm %s21, %s4666
          %s4669 = sshll.u32 %s4642, 4
          %s4670 = int_to_ptr.vmem [resolvable:$true] %s4669
          %4672 = dma.vmem_to_hbm [thread:$0]  %s4670, 256, %s4667, %s4639
        $region140: #{tpu_custom_call.1} parent=99 // pred_fallthru
          _
      $region100: #{tpu_custom_call.1} parent=5 // pred_fallthru
        _
      %p4673 = scmp.le.s32.totalorder 2, %s43
      // Predicated region
      $region141: #{tpu_custom_call.1} parent=5 // pred_check
        %p4674 = pneg %p4673
      $region142: #{tpu_custom_call.1} parent=5 // pred_check_branch
        %4676 = sbr.rel (%p4674) target = $region144
      $region143: #{tpu_custom_call.1} parent=5 // pred_region
        %s4677 = ssub.s32 %s43, 2
        // Predicated region
        $region145: #{tpu_custom_call.1} parent=143 // pred_check
          %p4678 = pneg %p512
        $region146: #{tpu_custom_call.1} parent=143 // pred_check_branch
          %4680 = sbr.rel (%p4678) target = $region148
        $region147: #{tpu_custom_call.1} parent=143 // pred_region
          %s4681 = sand.u32 %s497, 1
          %s4682 = scalar_lea.sflag [#allocation4], %s4681
          %s4683 = sand.u32 %s497, 1
          %s4684 = smul.addr %s4683, 128
          %s4685 = scalar_lea.vmem [#allocation16], %s4684
          %4686 = dma.done %s4682, 2048
        $region148: #{tpu_custom_call.1} parent=143 // pred_fallthru
          _
        // Predicated region
        $region149: #{tpu_custom_call.1} parent=143 // pred_check
          %p4687 = pneg %p538
        $region150: #{tpu_custom_call.1} parent=143 // pred_check_branch
          %4689 = sbr.rel (%p4687) target = $region152
        $region151: #{tpu_custom_call.1} parent=143 // pred_region
          %s4690 = sand.u32 %s523, 1
          %s4691 = scalar_lea.sflag [#allocation18], %s4690
          %s4692 = sand.u32 %s523, 1
          %s4693 = smul.addr %s4692, 16
          %s4694 = scalar_lea.vmem [#allocation17], %s4693
          %4695 = dma.done %s4691, 256
        $region152: #{tpu_custom_call.1} parent=143 // pred_fallthru
          _
      $region144: #{tpu_custom_call.1} parent=5 // pred_fallthru
        _
    $region6: #{tpu_custom_call.1} parent=1 // loop_footer
      %s47 = sadd.s32 1, %s43
    $region7: #{tpu_custom_call.1} parent=1 // loop_footer_branch
      %42 = sbr.rel target = $region3
    $region8: #{tpu_custom_call.1} parent=1 // loop_exit
      _
    %4696 = vsyncpa [#allocation3], 1
    %s4697 = scalar_lea.sflag [#allocation3], 1
    %4698 = vsyncpa %s4697, 1
    %4699 = vsyncpa [#allocation6], 1
    %s4700 = scalar_lea.sflag [#allocation6], 1
    %4701 = vsyncpa %s4700, 1
    %4702 = vsyncpa [#allocation9], 1
    %4703 = vsyncpa [#allocation12], 1
    %4704 = vsyncpa [#allocation15], 1
    %4705 = vsyncpa [#allocation4], 1
    %s4706 = scalar_lea.sflag [#allocation4], 1
    %4707 = vsyncpa %s4706, 1
    %4708 = vsyncpa [#allocation18], 1
    %s4709 = scalar_lea.sflag [#allocation18], 1
    %4710 = vsyncpa %s4709, 1

</llo_original>
